<compile_context>
chip_gen: v7x
topology: tpu7x:2x2x1
jax: 0.10.0
libtpu: 0.0.40
codegen_flags: <defaults>
</compile_context>

<pallas_src>
import numpy as np
import jax
import jax.numpy as jnp
from jax.experimental import pallas as pl
from jax.experimental.pallas import tpu as pltpu

BN_EPS = 1e-5

# ---------------------------------------------------------------------------
# Small-shape configuration consistent with the module's __init__ arithmetic.
# ---------------------------------------------------------------------------
IMG_SIZE    = 16
LATENT      = 32
HIDDEN      = 32
UP_CHANNELS = 4
UPSAMPLINGS = 2
END_CH      = 3
BATCH       = 2

C       = UP_CHANNELS * 2 ** UPSAMPLINGS        # 16  (self.c)
BASE    = IMG_SIZE // 2 ** UPSAMPLINGS          # 4   (starting spatial size)
LIN_OUT = C * BASE * BASE                       # 256 (linear_model output dim)

C1  = C // 2                                    # 8   channels after block 1
SP1 = (2 * BASE) ** 2                           # 64  spatial positions after block 1 (8x8)
D1  = C1 * SP1                                  # 512 flattened size after block 1

C2  = C // 4                                    # 4   channels after block 2 (== UP_CHANNELS)
SP2 = (4 * BASE) ** 2                           # 256 spatial positions after block 2 (16x16)
D2  = C2 * SP2                                  # 1024 flattened size after block 2

DOUT = END_CH * SP2                             # 768 flattened output size (3x16x16)


# ---------------------------------------------------------------------------
# The single fused Pallas kernel
# ---------------------------------------------------------------------------
def decoder_kernel(z_ref, w1_ref, b1_ref, wb_ref, bb_ref,
                   g1_ref, be1_ref, sel1_ref, sel1t_ref,
                   m2_ref, bm2_ref, g2_ref, be2_ref, sel2_ref, sel2t_ref,
                   wc_ref, bc_ref, o_ref):
    n = z_ref.shape[0]

    # ---- MLP layer 1: Linear -> ReLU ------------------------------------------------
    h = jnp.dot(z_ref[...], w1_ref[...], preferred_element_type=jnp.float32) + b1_ref[...]
    h = jnp.maximum(h, 0.0)

    # ---- MLP layer 2 + Unflatten + ConvTranspose block 1 (precomposed operator) -----
    # wb = w2 @ M1  (32 x 512);  bb = b2 @ M1 + conv1-bias broadcast  (1 x 512)
    u = jnp.dot(h, wb_ref[...], preferred_element_type=jnp.float32) + bb_ref[...]   # (N, D1)

    # ---- BatchNorm2d (training-mode batch stats, one pass) + ReLU -------------------
    def bn_relu(x, sel, selt, gamma, beta, count):
        # x: (N, C*HW) channel-major; sel: (C*HW, C) selector; selt: (C, C*HW)
        ssum = jnp.sum(x, axis=0, keepdims=True)                        # (1, D)
        ssq  = jnp.sum(x * x, axis=0, keepdims=True)                    # (1, D)
        # One selector matmul for both statistics (rows: [sum, sum_of_squares]).
        stats = jnp.dot(jnp.concatenate([ssum, ssq], axis=0), sel,
                        preferred_element_type=jnp.float32)             # (2, C)
        inv_count = 1.0 / count
        mean = stats[0:1, :] * inv_count                                # (1, C)
        var  = stats[1:2, :] * inv_count - mean * mean                  # biased variance
        a = gamma * jax.lax.rsqrt(var + BN_EPS)                         # (1, C)
        b = beta - mean * a                                             # (1, C)
        # One selector matmul broadcasts both (scale, shift) back to columns.
        ab_cols = jnp.dot(jnp.concatenate([a, b], axis=0), selt,
                          preferred_element_type=jnp.float32)           # (2, D)
        return jnp.maximum(x * ab_cols[0:1, :] + ab_cols[1:2, :], 0.0)

    u = bn_relu(u, sel1_ref[...], sel1t_ref[...], g1_ref[...], be1_ref[...], float(n * SP1))

    # ---- ConvTranspose block 2 (dense operator, K = 512) ----------------------------
    v = jnp.dot(u, m2_ref[...], preferred_element_type=jnp.float32) + bm2_ref[...]   # (N, D2)
    v = bn_relu(v, sel2_ref[...], sel2t_ref[...], g2_ref[...], be2_ref[...], float(n * SP2))

    # ---- 1x1-conv head + tanh (SMEM-scalar weights, lane-aligned 256-wide slices) ---
    for co in range(END_CH):
        y = wc_ref[co, 0] * v[:, 0:SP2]
        for ci in range(1, C2):
            y = y + wc_ref[co, ci] * v[:, ci * SP2:(ci + 1) * SP2]
        o_ref[:, co * SP2:(co + 1) * SP2] = jnp.tanh(y + bc_ref[co])


# ---------------------------------------------------------------------------
# Wrapper: one pallas_call, everything resident in VMEM/SMEM, no grid.
# ---------------------------------------------------------------------------
def decoder_pallas(fp, z):
    n = z.shape[0]
    vmem = pl.BlockSpec(memory_space=pltpu.MemorySpace.VMEM)
    smem = pl.BlockSpec(memory_space=pltpu.MemorySpace.SMEM)
    args = (z, fp["w1"], fp["b1"], fp["wb"], fp["bb"],
            fp["g1"], fp["be1"], fp["sel1"], fp["sel1t"],
            fp["m2"], fp["bm2"], fp["g2"], fp["be2"], fp["sel2"], fp["sel2t"],
            fp["wc"], fp["bc"])
    in_specs = [vmem] * (len(args) - 2) + [smem, smem]   # wc, bc are SMEM scalars
    flat = pl.pallas_call(
        decoder_kernel,
        out_shape=jax.ShapeDtypeStruct((n, DOUT), jnp.float32),
        in_specs=in_specs,
        out_specs=vmem,
    )(*args)
    # Pure-metadata reshape: kernel already emits NCHW-flattened (co, oy, ox) column order.
    return flat.reshape(n, END_CH, IMG_SIZE, IMG_SIZE)


def build_forward(fused_params):
    @jax.jit
    def forward(z):
        return decoder_pallas(fused_params, z)
    return forward


# ---------------------------------------------------------------------------
# Parameter construction (raw torch-layout params) + one-time operator fusion
# ---------------------------------------------------------------------------
def make_raw_params(key):
    ks = jax.random.split(key, 16)
    p = {}
    p["w1"] = 0.1 * jax.random.normal(ks[0], (LATENT, HIDDEN), jnp.float32)
    p["b1"] = 0.1 * jax.random.normal(ks[1], (1, HIDDEN), jnp.float32)
    p["w2"] = 0.1 * jax.random.normal(ks[2], (HIDDEN, LIN_OUT), jnp.float32)
    p["b2"] = 0.1 * jax.random.normal(ks[3], (1, LIN_OUT), jnp.float32)

    blocks = []
    kidx = 4
    for i in range(UPSAMPLINGS):
        ci = C // 2 ** i
        co = ci // 2
        blocks.append({
            "w": 0.1 * jax.random.normal(ks[kidx + 0], (ci, co, 4, 4), jnp.float32),  # torch (in,out,kH,kW)
            "b": 0.1 * jax.random.normal(ks[kidx + 1], (co,), jnp.float32),
            "gamma": 1.0 + 0.1 * jax.random.normal(ks[kidx + 2], (co,), jnp.float32),
            "beta": 0.1 * jax.random.normal(ks[kidx + 3], (co,), jnp.float32),
        })
        kidx += 4
    p["blocks"] = blocks

    p["wc"] = 0.1 * jax.random.normal(ks[kidx + 0], (END_CH, UP_CHANNELS), jnp.float32)  # torch (out,in)
    p["bc"] = 0.1 * jax.random.normal(ks[kidx + 1], (END_CH,), jnp.float32)
    return p


def _convtranspose_matrix(w, H, W):
    """Dense operator of ConvTranspose2d(k=4, s=2, p=1) over NCHW-flattened activations.

    w: (Ci, Co, 4, 4) torch weight. Returns M: (Ci*H*W, Co*OH*OW), column order (co, oy, ox).
    """
    Ci, Co, KH, KW = w.shape
    OH, OW = 2 * H, 2 * W
    M = np.zeros((Ci * H * W, Co * OH * OW), np.float32)
    row_base = np.arange(Ci) * (H * W)
    col_base = np.arange(Co) * (OH * OW)
    for iy in range(H):
        for ix in range(W):
            rows = row_base + iy * W + ix
            for ky in range(KH):
                oy = 2 * iy - 1 + ky
                if not (0 <= oy < OH):
                    continue
                for kx in range(KW):
                    ox = 2 * ix - 1 + kx
                    if not (0 <= ox < OW):
                        continue
                    cols = col_base + oy * OW + ox
                    M[np.ix_(rows, cols)] += w[:, :, ky, kx]
    return M


def fuse_params(p):
    """Precompose conv-transpose operators and BN selector matrices (numpy, one-time)."""
    w2 = np.asarray(p["w2"], np.float32)
    b2 = np.asarray(p["b2"], np.float32).reshape(1, -1)
    blk0, blk1 = p["blocks"]

    w_ct0 = np.asarray(blk0["w"], np.float32)
    b_ct0 = np.asarray(blk0["b"], np.float32).reshape(-1)
    w_ct1 = np.asarray(blk1["w"], np.float32)
    b_ct1 = np.asarray(blk1["b"], np.float32).reshape(-1)

    M1 = _convtranspose_matrix(w_ct0, BASE, BASE)            # (256, 512)
    M2 = _convtranspose_matrix(w_ct1, 2 * BASE, 2 * BASE)    # (512, 1024)

    wb = w2 @ M1                                             # (32, 512): Linear2 ∘ Unflatten ∘ ConvT1
    bb = b2 @ M1 + np.repeat(b_ct0, SP1)[None, :]            # (1, 512)
    bm2 = np.repeat(b_ct1, SP2)[None, :]                     # (1, 1024)

    sel1 = np.kron(np.eye(C1, dtype=np.float32), np.ones((SP1, 1), np.float32))   # (512, 8)
    sel2 = np.kron(np.eye(C2, dtype=np.float32), np.ones((SP2, 1), np.float32))   # (1024, 4)

    asf32 = lambda a: jnp.asarray(a, jnp.float32)
    return {
        "w1": asf32(p["w1"]), "b1": asf32(p["b1"]),
        "wb": asf32(wb), "bb": asf32(bb),
        "g1": asf32(np.asarray(blk0["gamma"]).reshape(1, -1)),
        "be1": asf32(np.asarray(blk0["beta"]).reshape(1, -1)),
        "sel1": asf32(sel1), "sel1t": asf32(sel1.T),
        "m2": asf32(M2), "bm2": asf32(bm2),
        "g2": asf32(np.asarray(blk1["gamma"]).reshape(1, -1)),
        "be2": asf32(np.asarray(blk1["beta"]).reshape(1, -1)),
        "sel2": asf32(sel2), "sel2t": asf32(sel2.T),
        "wc": asf32(np.asarray(p["wc"], np.float32)),         # (3, 4) -> SMEM scalars
        "bc": asf32(np.asarray(p["bc"], np.float32).reshape(-1)),  # (3,) -> SMEM scalars
    }


# ---------------------------------------------------------------------------
# Independent numpy reference (direct ConvTranspose / BN / 1x1-conv definitions)
# ---------------------------------------------------------------------------
def _ref_conv_transpose(x, w, b):
    # x: (N, Ci, H, W), w: (Ci, Co, 4, 4), stride=2, padding=1, b: (Co,)
    N, Ci, H, W = x.shape
    Co = w.shape[1]
    OH, OW = 2 * H, 2 * W
    y = np.zeros((N, Co, OH, OW), np.float32)
    for iy in range(H):
        for ix in range(W):
            for ky in range(4):
                oy = 2 * iy - 1 + ky
                if not (0 <= oy < OH):
                    continue
                for kx in range(4):
                    ox = 2 * ix - 1 + kx
                    if not (0 <= ox < OW):
                        continue
                    y[:, :, oy, ox] += np.einsum("ni,io->no", x[:, :, iy, ix], w[:, :, ky, kx])
    return y + b.reshape(1, Co, 1, 1)


def ref_forward(p, z):
    pn = jax.tree_util.tree_map(np.asarray, p)
    h = np.maximum(z @ pn["w1"] + pn["b1"], 0.0)
    x = h @ pn["w2"] + pn["b2"]
    x = x.reshape(z.shape[0], C, BASE, BASE)
    for blk in pn["blocks"]:
        x = _ref_conv_transpose(x, blk["w"], blk["b"])
        mean = x.mean(axis=(0, 2, 3), keepdims=True)
        var = x.var(axis=(0, 2, 3), keepdims=True)               # biased, torch BN training mode
        x = (x - mean) / np.sqrt(var + BN_EPS)
        x = x * blk["gamma"].reshape(1, -1, 1, 1) + blk["beta"].reshape(1, -1, 1, 1)
        x = np.maximum(x, 0.0)
    y = np.einsum("nchw,oc->nohw", x, pn["wc"]) + pn["bc"].reshape(1, -1, 1, 1)
    return np.tanh(y)


# ---------------------------------------------------------------------------
if __name__ == "__main__":
    root = jax.random.PRNGKey(0)
    k_params, k_z = jax.random.split(root)

    raw_params = make_raw_params(k_params)
    fused_params = fuse_params(raw_params)
    z = jax.random.normal(k_z, (BATCH, LATENT), jnp.float32)

    forward = build_forward(fused_params)
    out = jax.block_until_ready(forward(z))

    assert out.shape == (BATCH, END_CH, IMG_SIZE, IMG_SIZE), out.shape
    ref = ref_forward(raw_params, np.asarray(z))
    np.testing.assert_allclose(np.asarray(out), ref, rtol=1e-3, atol=1e-3)
    print("KERNEL_OK")
</pallas_src>

<mosaic_0001>
module attributes {stable_mosaic.version = 11 : i64} {
  func.func @decoder_kernel(%arg0: memref<2x32xf32, #tpu.memory_space<vmem>>, %arg1: memref<32x32xf32, #tpu.memory_space<vmem>>, %arg2: memref<1x32xf32, #tpu.memory_space<vmem>>, %arg3: memref<32x512xf32, #tpu.memory_space<vmem>>, %arg4: memref<1x512xf32, #tpu.memory_space<vmem>>, %arg5: memref<1x8xf32, #tpu.memory_space<vmem>>, %arg6: memref<1x8xf32, #tpu.memory_space<vmem>>, %arg7: memref<512x8xf32, #tpu.memory_space<vmem>>, %arg8: memref<8x512xf32, #tpu.memory_space<vmem>>, %arg9: memref<512x1024xf32, #tpu.memory_space<vmem>>, %arg10: memref<1x1024xf32, #tpu.memory_space<vmem>>, %arg11: memref<1x4xf32, #tpu.memory_space<vmem>>, %arg12: memref<1x4xf32, #tpu.memory_space<vmem>>, %arg13: memref<1024x4xf32, #tpu.memory_space<vmem>>, %arg14: memref<4x1024xf32, #tpu.memory_space<vmem>>, %arg15: memref<3x4xf32, #tpu.memory_space<smem>>, %arg16: memref<3xf32, #tpu.memory_space<smem>>, %arg17: memref<2x768xf32, #tpu.memory_space<vmem>>) attributes {dimension_semantics = [], scalar_prefetch = 0 : i64, scratch_operands = 0 : i64, tpu.core_type = #tpu.core_type<tc>} {
    %c0 = arith.constant 0 : index
    %c0_0 = arith.constant 0 : index
    %0 = vector.load %arg0[%c0, %c0_0] : memref<2x32xf32, #tpu.memory_space<vmem>>, vector<2x32xf32>
    %c0_1 = arith.constant 0 : index
    %c0_2 = arith.constant 0 : index
    %1 = vector.load %arg1[%c0_1, %c0_2] : memref<32x32xf32, #tpu.memory_space<vmem>>, vector<32x32xf32>
    %cst = arith.constant dense<0.000000e+00> : vector<2x32xf32>
    %2 = tpu.matmul %0, %1, %cst {dimension_numbers = #tpu.dot_dimension_numbers<[1], [0], [0], [1], [0, 0, 1, 1], [], []>} : vector<2x32xf32>, vector<32x32xf32>, vector<2x32xf32> -> vector<2x32xf32>
    %c0_3 = arith.constant 0 : index
    %c0_4 = arith.constant 0 : index
    %3 = vector.load %arg2[%c0_3, %c0_4] : memref<1x32xf32, #tpu.memory_space<vmem>>, vector<1x32xf32>
    %4 = vector.broadcast %3 : vector<1x32xf32> to vector<2x32xf32>
    %5 = arith.addf %2, %4 : vector<2x32xf32>
    %cst_5 = arith.constant 0.000000e+00 : f32
    %6 = vector.broadcast %cst_5 : f32 to vector<2x32xf32>
    %7 = arith.maximumf %5, %6 : vector<2x32xf32>
    %c0_6 = arith.constant 0 : index
    %c0_7 = arith.constant 0 : index
    %8 = vector.load %arg3[%c0_6, %c0_7] : memref<32x512xf32, #tpu.memory_space<vmem>>, vector<32x512xf32>
    %cst_8 = arith.constant dense<0.000000e+00> : vector<2x512xf32>
    %9 = tpu.matmul %7, %8, %cst_8 {dimension_numbers = #tpu.dot_dimension_numbers<[1], [0], [0], [1], [0, 0, 1, 1], [], []>} : vector<2x32xf32>, vector<32x512xf32>, vector<2x512xf32> -> vector<2x512xf32>
    %c0_9 = arith.constant 0 : index
    %c0_10 = arith.constant 0 : index
    %10 = vector.load %arg4[%c0_9, %c0_10] : memref<1x512xf32, #tpu.memory_space<vmem>>, vector<1x512xf32>
    %11 = vector.broadcast %10 : vector<1x512xf32> to vector<2x512xf32>
    %12 = arith.addf %9, %11 : vector<2x512xf32>
    %c0_11 = arith.constant 0 : index
    %c0_12 = arith.constant 0 : index
    %13 = vector.load %arg7[%c0_11, %c0_12] : memref<512x8xf32, #tpu.memory_space<vmem>>, vector<512x8xf32>
    %c0_13 = arith.constant 0 : index
    %c0_14 = arith.constant 0 : index
    %14 = vector.load %arg8[%c0_13, %c0_14] : memref<8x512xf32, #tpu.memory_space<vmem>>, vector<8x512xf32>
    %c0_15 = arith.constant 0 : index
    %c0_16 = arith.constant 0 : index
    %15 = vector.load %arg5[%c0_15, %c0_16] : memref<1x8xf32, #tpu.memory_space<vmem>>, vector<1x8xf32>
    %c0_17 = arith.constant 0 : index
    %c0_18 = arith.constant 0 : index
    %16 = vector.load %arg6[%c0_17, %c0_18] : memref<1x8xf32, #tpu.memory_space<vmem>>, vector<1x8xf32>
    %cst_19 = arith.constant dense<0.000000e+00> : vector<512xf32>
    %17 = vector.multi_reduction <add>, %12, %cst_19 [0] : vector<2x512xf32> to vector<512xf32>
    %18 = vector.shape_cast %17 : vector<512xf32> to vector<1x512xf32>
    %19 = arith.mulf %12, %12 : vector<2x512xf32>
    %cst_20 = arith.constant dense<0.000000e+00> : vector<512xf32>
    %20 = vector.multi_reduction <add>, %19, %cst_20 [0] : vector<2x512xf32> to vector<512xf32>
    %21 = vector.shape_cast %20 : vector<512xf32> to vector<1x512xf32>
    %22 = tpu.concatenate %18, %21 in 0 : vector<1x512xf32>, vector<1x512xf32> -> vector<2x512xf32>
    %cst_21 = arith.constant dense<0.000000e+00> : vector<2x8xf32>
    %23 = tpu.matmul %22, %13, %cst_21 {dimension_numbers = #tpu.dot_dimension_numbers<[1], [0], [0], [1], [0, 0, 1, 1], [], []>} : vector<2x512xf32>, vector<512x8xf32>, vector<2x8xf32> -> vector<2x8xf32>
    %24 = vector.extract_strided_slice %23 {offsets = [0, 0], sizes = [1, 8], strides = [1, 1]} : vector<2x8xf32> to vector<1x8xf32>
    %cst_22 = arith.constant 7.812500e-03 : f32
    %25 = vector.broadcast %cst_22 : f32 to vector<1x8xf32>
    %26 = arith.mulf %24, %25 : vector<1x8xf32>
    %27 = vector.extract_strided_slice %23 {offsets = [1, 0], sizes = [1, 8], strides = [1, 1]} : vector<2x8xf32> to vector<1x8xf32>
    %cst_23 = arith.constant 7.812500e-03 : f32
    %28 = vector.broadcast %cst_23 : f32 to vector<1x8xf32>
    %29 = arith.mulf %27, %28 : vector<1x8xf32>
    %30 = arith.mulf %26, %26 : vector<1x8xf32>
    %31 = arith.subf %29, %30 : vector<1x8xf32>
    %cst_24 = arith.constant 9.99999974E-6 : f32
    %32 = vector.broadcast %cst_24 : f32 to vector<1x8xf32>
    %33 = arith.addf %31, %32 : vector<1x8xf32>
    %34 = math.rsqrt %33 : vector<1x8xf32>
    %35 = arith.mulf %15, %34 : vector<1x8xf32>
    %36 = arith.mulf %26, %35 : vector<1x8xf32>
    %37 = arith.subf %16, %36 : vector<1x8xf32>
    %38 = tpu.concatenate %35, %37 in 0 : vector<1x8xf32>, vector<1x8xf32> -> vector<2x8xf32>
    %cst_25 = arith.constant dense<0.000000e+00> : vector<2x512xf32>
    %39 = tpu.matmul %38, %14, %cst_25 {dimension_numbers = #tpu.dot_dimension_numbers<[1], [0], [0], [1], [0, 0, 1, 1], [], []>} : vector<2x8xf32>, vector<8x512xf32>, vector<2x512xf32> -> vector<2x512xf32>
    %40 = vector.extract_strided_slice %39 {offsets = [0, 0], sizes = [1, 512], strides = [1, 1]} : vector<2x512xf32> to vector<1x512xf32>
    %41 = vector.broadcast %40 : vector<1x512xf32> to vector<2x512xf32>
    %42 = arith.mulf %12, %41 : vector<2x512xf32>
    %43 = vector.extract_strided_slice %39 {offsets = [1, 0], sizes = [1, 512], strides = [1, 1]} : vector<2x512xf32> to vector<1x512xf32>
    %44 = vector.broadcast %43 : vector<1x512xf32> to vector<2x512xf32>
    %45 = arith.addf %42, %44 : vector<2x512xf32>
    %cst_26 = arith.constant 0.000000e+00 : f32
    %46 = vector.broadcast %cst_26 : f32 to vector<2x512xf32>
    %47 = arith.maximumf %45, %46 : vector<2x512xf32>
    %c0_27 = arith.constant 0 : index
    %c0_28 = arith.constant 0 : index
    %48 = vector.load %arg9[%c0_27, %c0_28] : memref<512x1024xf32, #tpu.memory_space<vmem>>, vector<512x1024xf32>
    %cst_29 = arith.constant dense<0.000000e+00> : vector<2x1024xf32>
    %49 = tpu.matmul %47, %48, %cst_29 {dimension_numbers = #tpu.dot_dimension_numbers<[1], [0], [0], [1], [0, 0, 1, 1], [], []>} : vector<2x512xf32>, vector<512x1024xf32>, vector<2x1024xf32> -> vector<2x1024xf32>
    %c0_30 = arith.constant 0 : index
    %c0_31 = arith.constant 0 : index
    %50 = vector.load %arg10[%c0_30, %c0_31] : memref<1x1024xf32, #tpu.memory_space<vmem>>, vector<1x1024xf32>
    %51 = vector.broadcast %50 : vector<1x1024xf32> to vector<2x1024xf32>
    %52 = arith.addf %49, %51 : vector<2x1024xf32>
    %c0_32 = arith.constant 0 : index
    %c0_33 = arith.constant 0 : index
    %53 = vector.load %arg13[%c0_32, %c0_33] : memref<1024x4xf32, #tpu.memory_space<vmem>>, vector<1024x4xf32>
    %c0_34 = arith.constant 0 : index
    %c0_35 = arith.constant 0 : index
    %54 = vector.load %arg14[%c0_34, %c0_35] : memref<4x1024xf32, #tpu.memory_space<vmem>>, vector<4x1024xf32>
    %c0_36 = arith.constant 0 : index
    %c0_37 = arith.constant 0 : index
    %55 = vector.load %arg11[%c0_36, %c0_37] : memref<1x4xf32, #tpu.memory_space<vmem>>, vector<1x4xf32>
    %c0_38 = arith.constant 0 : index
    %c0_39 = arith.constant 0 : index
    %56 = vector.load %arg12[%c0_38, %c0_39] : memref<1x4xf32, #tpu.memory_space<vmem>>, vector<1x4xf32>
    %cst_40 = arith.constant dense<0.000000e+00> : vector<1024xf32>
    %57 = vector.multi_reduction <add>, %52, %cst_40 [0] : vector<2x1024xf32> to vector<1024xf32>
    %58 = vector.shape_cast %57 : vector<1024xf32> to vector<1x1024xf32>
    %59 = arith.mulf %52, %52 : vector<2x1024xf32>
    %cst_41 = arith.constant dense<0.000000e+00> : vector<1024xf32>
    %60 = vector.multi_reduction <add>, %59, %cst_41 [0] : vector<2x1024xf32> to vector<1024xf32>
    %61 = vector.shape_cast %60 : vector<1024xf32> to vector<1x1024xf32>
    %62 = tpu.concatenate %58, %61 in 0 : vector<1x1024xf32>, vector<1x1024xf32> -> vector<2x1024xf32>
    %cst_42 = arith.constant dense<0.000000e+00> : vector<2x4xf32>
    %63 = tpu.matmul %62, %53, %cst_42 {dimension_numbers = #tpu.dot_dimension_numbers<[1], [0], [0], [1], [0, 0, 1, 1], [], []>} : vector<2x1024xf32>, vector<1024x4xf32>, vector<2x4xf32> -> vector<2x4xf32>
    %64 = vector.extract_strided_slice %63 {offsets = [0, 0], sizes = [1, 4], strides = [1, 1]} : vector<2x4xf32> to vector<1x4xf32>
    %cst_43 = arith.constant 0.001953125 : f32
    %65 = vector.broadcast %cst_43 : f32 to vector<1x4xf32>
    %66 = arith.mulf %64, %65 : vector<1x4xf32>
    %67 = vector.extract_strided_slice %63 {offsets = [1, 0], sizes = [1, 4], strides = [1, 1]} : vector<2x4xf32> to vector<1x4xf32>
    %cst_44 = arith.constant 0.001953125 : f32
    %68 = vector.broadcast %cst_44 : f32 to vector<1x4xf32>
    %69 = arith.mulf %67, %68 : vector<1x4xf32>
    %70 = arith.mulf %66, %66 : vector<1x4xf32>
    %71 = arith.subf %69, %70 : vector<1x4xf32>
    %cst_45 = arith.constant 9.99999974E-6 : f32
    %72 = vector.broadcast %cst_45 : f32 to vector<1x4xf32>
    %73 = arith.addf %71, %72 : vector<1x4xf32>
    %74 = math.rsqrt %73 : vector<1x4xf32>
    %75 = arith.mulf %55, %74 : vector<1x4xf32>
    %76 = arith.mulf %66, %75 : vector<1x4xf32>
    %77 = arith.subf %56, %76 : vector<1x4xf32>
    %78 = tpu.concatenate %75, %77 in 0 : vector<1x4xf32>, vector<1x4xf32> -> vector<2x4xf32>
    %cst_46 = arith.constant dense<0.000000e+00> : vector<2x1024xf32>
    %79 = tpu.matmul %78, %54, %cst_46 {dimension_numbers = #tpu.dot_dimension_numbers<[1], [0], [0], [1], [0, 0, 1, 1], [], []>} : vector<2x4xf32>, vector<4x1024xf32>, vector<2x1024xf32> -> vector<2x1024xf32>
    %80 = vector.extract_strided_slice %79 {offsets = [0, 0], sizes = [1, 1024], strides = [1, 1]} : vector<2x1024xf32> to vector<1x1024xf32>
    %81 = vector.broadcast %80 : vector<1x1024xf32> to vector<2x1024xf32>
    %82 = arith.mulf %52, %81 : vector<2x1024xf32>
    %83 = vector.extract_strided_slice %79 {offsets = [1, 0], sizes = [1, 1024], strides = [1, 1]} : vector<2x1024xf32> to vector<1x1024xf32>
    %84 = vector.broadcast %83 : vector<1x1024xf32> to vector<2x1024xf32>
    %85 = arith.addf %82, %84 : vector<2x1024xf32>
    %cst_47 = arith.constant 0.000000e+00 : f32
    %86 = vector.broadcast %cst_47 : f32 to vector<2x1024xf32>
    %87 = arith.maximumf %85, %86 : vector<2x1024xf32>
    %c0_48 = arith.constant 0 : index
    %c0_49 = arith.constant 0 : index
    %88 = memref.load %arg15[%c0_48, %c0_49] : memref<3x4xf32, #tpu.memory_space<smem>>
    %89 = vector.extract_strided_slice %87 {offsets = [0, 0], sizes = [2, 256], strides = [1, 1]} : vector<2x1024xf32> to vector<2x256xf32>
    %90 = vector.broadcast %88 : f32 to vector<2x256xf32>
    %91 = arith.mulf %90, %89 : vector<2x256xf32>
    %c0_50 = arith.constant 0 : index
    %c1 = arith.constant 1 : index
    %92 = memref.load %arg15[%c0_50, %c1] : memref<3x4xf32, #tpu.memory_space<smem>>
    %93 = vector.extract_strided_slice %87 {offsets = [0, 256], sizes = [2, 256], strides = [1, 1]} : vector<2x1024xf32> to vector<2x256xf32>
    %94 = vector.broadcast %92 : f32 to vector<2x256xf32>
    %95 = arith.mulf %94, %93 : vector<2x256xf32>
    %96 = arith.addf %91, %95 : vector<2x256xf32>
    %c0_51 = arith.constant 0 : index
    %c2 = arith.constant 2 : index
    %97 = memref.load %arg15[%c0_51, %c2] : memref<3x4xf32, #tpu.memory_space<smem>>
    %98 = vector.extract_strided_slice %87 {offsets = [0, 512], sizes = [2, 256], strides = [1, 1]} : vector<2x1024xf32> to vector<2x256xf32>
    %99 = vector.broadcast %97 : f32 to vector<2x256xf32>
    %100 = arith.mulf %99, %98 : vector<2x256xf32>
    %101 = arith.addf %96, %100 : vector<2x256xf32>
    %c0_52 = arith.constant 0 : index
    %c3 = arith.constant 3 : index
    %102 = memref.load %arg15[%c0_52, %c3] : memref<3x4xf32, #tpu.memory_space<smem>>
    %103 = vector.extract_strided_slice %87 {offsets = [0, 768], sizes = [2, 256], strides = [1, 1]} : vector<2x1024xf32> to vector<2x256xf32>
    %104 = vector.broadcast %102 : f32 to vector<2x256xf32>
    %105 = arith.mulf %104, %103 : vector<2x256xf32>
    %106 = arith.addf %101, %105 : vector<2x256xf32>
    %c0_53 = arith.constant 0 : index
    %107 = memref.load %arg16[%c0_53] : memref<3xf32, #tpu.memory_space<smem>>
    %108 = vector.broadcast %107 : f32 to vector<2x256xf32>
    %109 = arith.addf %106, %108 : vector<2x256xf32>
    %110 = math.tanh %109 : vector<2x256xf32>
    %c0_54 = arith.constant 0 : index
    %c0_55 = arith.constant 0 : index
    %111 = vector.load %arg17[%c0_54, %c0_55] : memref<2x768xf32, #tpu.memory_space<vmem>>, vector<2x256xf32>
    tpu.vector_store %arg17[%c0_54, %c0_55], %110 {strides = array<i32>} : memref<2x768xf32, #tpu.memory_space<vmem>>, vector<2x256xf32>,
    %c1_56 = arith.constant 1 : index
    %c0_57 = arith.constant 0 : index
    %112 = memref.load %arg15[%c1_56, %c0_57] : memref<3x4xf32, #tpu.memory_space<smem>>
    %113 = vector.extract_strided_slice %87 {offsets = [0, 0], sizes = [2, 256], strides = [1, 1]} : vector<2x1024xf32> to vector<2x256xf32>
    %114 = vector.broadcast %112 : f32 to vector<2x256xf32>
    %115 = arith.mulf %114, %113 : vector<2x256xf32>
    %c1_58 = arith.constant 1 : index
    %c1_59 = arith.constant 1 : index
    %116 = memref.load %arg15[%c1_58, %c1_59] : memref<3x4xf32, #tpu.memory_space<smem>>
    %117 = vector.extract_strided_slice %87 {offsets = [0, 256], sizes = [2, 256], strides = [1, 1]} : vector<2x1024xf32> to vector<2x256xf32>
    %118 = vector.broadcast %116 : f32 to vector<2x256xf32>
    %119 = arith.mulf %118, %117 : vector<2x256xf32>
    %120 = arith.addf %115, %119 : vector<2x256xf32>
    %c1_60 = arith.constant 1 : index
    %c2_61 = arith.constant 2 : index
    %121 = memref.load %arg15[%c1_60, %c2_61] : memref<3x4xf32, #tpu.memory_space<smem>>
    %122 = vector.extract_strided_slice %87 {offsets = [0, 512], sizes = [2, 256], strides = [1, 1]} : vector<2x1024xf32> to vector<2x256xf32>
    %123 = vector.broadcast %121 : f32 to vector<2x256xf32>
    %124 = arith.mulf %123, %122 : vector<2x256xf32>
    %125 = arith.addf %120, %124 : vector<2x256xf32>
    %c1_62 = arith.constant 1 : index
    %c3_63 = arith.constant 3 : index
    %126 = memref.load %arg15[%c1_62, %c3_63] : memref<3x4xf32, #tpu.memory_space<smem>>
    %127 = vector.extract_strided_slice %87 {offsets = [0, 768], sizes = [2, 256], strides = [1, 1]} : vector<2x1024xf32> to vector<2x256xf32>
    %128 = vector.broadcast %126 : f32 to vector<2x256xf32>
    %129 = arith.mulf %128, %127 : vector<2x256xf32>
    %130 = arith.addf %125, %129 : vector<2x256xf32>
    %c1_64 = arith.constant 1 : index
    %131 = memref.load %arg16[%c1_64] : memref<3xf32, #tpu.memory_space<smem>>
    %132 = vector.broadcast %131 : f32 to vector<2x256xf32>
    %133 = arith.addf %130, %132 : vector<2x256xf32>
    %134 = math.tanh %133 : vector<2x256xf32>
    %c0_65 = arith.constant 0 : index
    %c256 = arith.constant 256 : index
    %135 = vector.load %arg17[%c0_65, %c256] : memref<2x768xf32, #tpu.memory_space<vmem>>, vector<2x256xf32>
    tpu.vector_store %arg17[%c0_65, %c256], %134 {strides = array<i32>} : memref<2x768xf32, #tpu.memory_space<vmem>>, vector<2x256xf32>,
    %c2_66 = arith.constant 2 : index
    %c0_67 = arith.constant 0 : index
    %136 = memref.load %arg15[%c2_66, %c0_67] : memref<3x4xf32, #tpu.memory_space<smem>>
    %137 = vector.extract_strided_slice %87 {offsets = [0, 0], sizes = [2, 256], strides = [1, 1]} : vector<2x1024xf32> to vector<2x256xf32>
    %138 = vector.broadcast %136 : f32 to vector<2x256xf32>
    %139 = arith.mulf %138, %137 : vector<2x256xf32>
    %c2_68 = arith.constant 2 : index
    %c1_69 = arith.constant 1 : index
    %140 = memref.load %arg15[%c2_68, %c1_69] : memref<3x4xf32, #tpu.memory_space<smem>>
    %141 = vector.extract_strided_slice %87 {offsets = [0, 256], sizes = [2, 256], strides = [1, 1]} : vector<2x1024xf32> to vector<2x256xf32>
    %142 = vector.broadcast %140 : f32 to vector<2x256xf32>
    %143 = arith.mulf %142, %141 : vector<2x256xf32>
    %144 = arith.addf %139, %143 : vector<2x256xf32>
    %c2_70 = arith.constant 2 : index
    %c2_71 = arith.constant 2 : index
    %145 = memref.load %arg15[%c2_70, %c2_71] : memref<3x4xf32, #tpu.memory_space<smem>>
    %146 = vector.extract_strided_slice %87 {offsets = [0, 512], sizes = [2, 256], strides = [1, 1]} : vector<2x1024xf32> to vector<2x256xf32>
    %147 = vector.broadcast %145 : f32 to vector<2x256xf32>
    %148 = arith.mulf %147, %146 : vector<2x256xf32>
    %149 = arith.addf %144, %148 : vector<2x256xf32>
    %c2_72 = arith.constant 2 : index
    %c3_73 = arith.constant 3 : index
    %150 = memref.load %arg15[%c2_72, %c3_73] : memref<3x4xf32, #tpu.memory_space<smem>>
    %151 = vector.extract_strided_slice %87 {offsets = [0, 768], sizes = [2, 256], strides = [1, 1]} : vector<2x1024xf32> to vector<2x256xf32>
    %152 = vector.broadcast %150 : f32 to vector<2x256xf32>
    %153 = arith.mulf %152, %151 : vector<2x256xf32>
    %154 = arith.addf %149, %153 : vector<2x256xf32>
    %c2_74 = arith.constant 2 : index
    %155 = memref.load %arg16[%c2_74] : memref<3xf32, #tpu.memory_space<smem>>
    %156 = vector.broadcast %155 : f32 to vector<2x256xf32>
    %157 = arith.addf %154, %156 : vector<2x256xf32>
    %158 = math.tanh %157 : vector<2x256xf32>
    %c0_75 = arith.constant 0 : index
    %c512 = arith.constant 512 : index
    %159 = vector.load %arg17[%c0_75, %c512] : memref<2x768xf32, #tpu.memory_space<vmem>>, vector<2x256xf32>
    tpu.vector_store %arg17[%c0_75, %c512], %158 {strides = array<i32>} : memref<2x768xf32, #tpu.memory_space<vmem>>, vector<2x256xf32>,
    return
  }
}

</mosaic_0001>

<llo_original>
// kernel: forward.1
$region0: #{forward.1}
  #allocation0 [shape = 'u32[]', space=smem, size = 0x4, offset = 0x4, fixed_abs, tag = 'smem constant byte address 0x4 - core index']
  #allocation1 [shape = 'u32[144,128]{1,0:T(1,128)}', space=vmem, size = 0x12000, scoped, tag = 'internal scratch']
  %s0 = inlined_call_operand.hbm [shape: f32[2,32], index: 0, kind: input, shape index: {}]
  %s1 = inlined_call_operand.hbm [shape: f32[32,32], index: 1, kind: input, shape index: {}]
  %s2 = inlined_call_operand.hbm [shape: f32[1,32], index: 2, kind: input, shape index: {}]
  %s3 = inlined_call_operand.hbm [shape: f32[32,512], index: 3, kind: input, shape index: {}]
  %s4 = inlined_call_operand.hbm [shape: f32[1,512], index: 4, kind: input, shape index: {}]
  %s5 = inlined_call_operand.hbm [shape: f32[1,8], index: 5, kind: input, shape index: {}]
  %s6 = inlined_call_operand.hbm [shape: f32[1,8], index: 6, kind: input, shape index: {}]
  %s7 = inlined_call_operand.hbm [shape: f32[512,8], index: 7, kind: input, shape index: {}]
  %s8 = inlined_call_operand.hbm [shape: f32[8,512], index: 8, kind: input, shape index: {}]
  %s9 = inlined_call_operand.hbm [shape: f32[512,1024], index: 9, kind: input, shape index: {}]
  %s10 = inlined_call_operand.hbm [shape: f32[1,1024], index: 10, kind: input, shape index: {}]
  %s11 = inlined_call_operand.hbm [shape: f32[1,4], index: 11, kind: input, shape index: {}]
  %s12 = inlined_call_operand.hbm [shape: f32[1,4], index: 12, kind: input, shape index: {}]
  %s13 = inlined_call_operand.hbm [shape: f32[1024,4], index: 13, kind: input, shape index: {}]
  %s14 = inlined_call_operand.hbm [shape: f32[4,1024], index: 14, kind: input, shape index: {}]
  %s15 = inlined_call_operand.hbm [shape: f32[3,4], index: 15, kind: input, shape index: {}]
  %s16 = inlined_call_operand.hbm [shape: f32[3], index: 16, kind: input, shape index: {}]
  %s17 = inlined_call_operand.vmem [shape: f32[2,768], index: 17, kind: output, shape index: {}]
  %s18 = sld [smem:[#allocation0]]
  $region146: #{forward.1} parent=0
    _
  %s20 = ssub.s32 1, %s18
  %s21 = scalar_select 0, %s20, %s18
  $region1: #{forward.1} parent=0
    #allocation2 [shape = 'u8[1024]{0}', space=vmem, size = 0x400, scoped, tag = 'input window, operand 0, single buffered']
    #allocation3 [shape = 's32[1]{0}', space=sflag, size = 0x4, scoped, tag = 'scoped memory for forward.1']
    #allocation4 [shape = 's32[1]{0}', space=sflag, size = 0x4, scoped, tag = 'scoped memory for forward.1']
    #allocation5 [shape = 'u8[16384]{0}', space=vmem, size = 0x4000, scoped, tag = 'input window, operand 1, single buffered']
    #allocation6 [shape = 's32[1]{0}', space=sflag, size = 0x4, scoped, tag = 'scoped memory for forward.1']
    #allocation7 [shape = 'u8[512]{0}', space=vmem, size = 0x400, scoped, tag = 'input window, operand 2, single buffered']
    #allocation8 [shape = 'u8[65536]{0}', space=vmem, size = 0x10000, scoped, tag = 'input window, operand 3, single buffered']
    #allocation9 [shape = 's32[1]{0}', space=sflag, size = 0x4, scoped, tag = 'scoped memory for forward.1']
    #allocation10 [shape = 'u8[2048]{0}', space=vmem, size = 0x800, scoped, tag = 'input window, operand 4, single buffered']
    #allocation11 [shape = 'u8[512]{0}', space=vmem, size = 0x400, scoped, tag = 'input window, operand 5, single buffered']
    #allocation12 [shape = 's32[1]{0}', space=sflag, size = 0x4, scoped, tag = 'scoped memory for forward.1']
    #allocation13 [shape = 'u8[512]{0}', space=vmem, size = 0x400, scoped, tag = 'input window, operand 6, single buffered']
    #allocation14 [shape = 'u8[262144]{0}', space=vmem, size = 0x40000, scoped, tag = 'input window, operand 7, single buffered']
    #allocation15 [shape = 's32[1]{0}', space=sflag, size = 0x4, scoped, tag = 'scoped memory for forward.1']
    #allocation16 [shape = 'u8[16384]{0}', space=vmem, size = 0x4000, scoped, tag = 'input window, operand 8, single buffered']
    #allocation17 [shape = 'u8[2097152]{0}', space=vmem, size = 0x200000, scoped, tag = 'input window, operand 9, single buffered']
    #allocation18 [shape = 's32[1]{0}', space=sflag, size = 0x4, scoped, tag = 'scoped memory for forward.1']
    #allocation19 [shape = 'u8[4096]{0}', space=vmem, size = 0x1000, scoped, tag = 'input window, operand 10, single buffered']
    #allocation20 [shape = 'u8[512]{0}', space=vmem, size = 0x400, scoped, tag = 'input window, operand 11, single buffered']
    #allocation21 [shape = 's32[1]{0}', space=sflag, size = 0x4, scoped, tag = 'scoped memory for forward.1']
    #allocation22 [shape = 'u8[512]{0}', space=vmem, size = 0x400, scoped, tag = 'input window, operand 12, single buffered']
    #allocation23 [shape = 'u8[524288]{0}', space=vmem, size = 0x80000, scoped, tag = 'input window, operand 13, single buffered']
    #allocation24 [shape = 's32[1]{0}', space=sflag, size = 0x4, scoped, tag = 'scoped memory for forward.1']
    #allocation25 [shape = 'u8[16384]{0}', space=vmem, size = 0x4000, scoped, tag = 'input window, operand 14, single buffered']
    #allocation26 [shape = 'u8[2048]{0}', space=smem, size = 0x800, scoped, tag = 'input window, operand 15, single buffered']
    #allocation27 [shape = 'u8[512]{0}', space=smem, size = 0x200, scoped, tag = 'input window, operand 16, single buffered']
    #allocation28 [shape = 's32[1]{0}', space=sflag, size = 0x4, scoped, tag = 'scoped memory for forward.1']
    %22 = vsyncpa [#allocation3], 0
    %23 = vsyncpa [#allocation6], 0
    %24 = vsyncpa [#allocation9], 0
    %25 = vsyncpa [#allocation12], 0
    %26 = vsyncpa [#allocation15], 0
    %27 = vsyncpa [#allocation18], 0
    %28 = vsyncpa [#allocation21], 0
    %29 = vsyncpa [#allocation24], 0
    %30 = vsyncpa [#allocation4], 0
    %31 = vsyncpa [#allocation28], 0
    // Predicated region
    $region2: #{forward.1} parent=1 // pred_check
      _
    $region3: #{forward.1} parent=1 // pred_check_branch
      %33 = sbr.rel (0) target = $region5
    $region4: #{forward.1} parent=1 // pred_region
      %s35 = ssub.s32 32, 32
      %36 = vsyncadd [#allocation3], %s35
      %s38 = sshll.u32 [#allocation2], 4
      %s39 = int_to_ptr.vmem [resolvable:$true] %s38
      %41 = dma.hbm_to_vmem [thread:$0]  %s0, 32, %s39, [#allocation3]
    $region5: #{forward.1} parent=1 // pred_fallthru
      _
    // Predicated region
    $region6: #{forward.1} parent=1 // pred_check
      _
    $region7: #{forward.1} parent=1 // pred_check_branch
      %43 = sbr.rel (0) target = $region9
    $region8: #{forward.1} parent=1 // pred_region
      %s45 = ssub.s32 512, 512
      %46 = vsyncadd [#allocation6], %s45
      %s47 = sshll.u32 [#allocation5], 4
      %s48 = int_to_ptr.vmem [resolvable:$true] %s47
      %53 = dma.hbm_to_vmem [thread:$0]  %s1, 512, %s48, [#allocation6], 128, 128, 8
    $region9: #{forward.1} parent=1 // pred_fallthru
      _
    // Predicated region
    $region10: #{forward.1} parent=1 // pred_check
      _
    $region11: #{forward.1} parent=1 // pred_check_branch
      %55 = sbr.rel (0) target = $region13
    $region12: #{forward.1} parent=1 // pred_region
      %s57 = ssub.s32 16, 16
      %58 = vsyncadd [#allocation6], %s57
      %s60 = sshll.u32 [#allocation7], 4
      %s61 = int_to_ptr.vmem [resolvable:$true] %s60
      %63 = dma.hbm_to_vmem [thread:$0]  %s2, 16, %s61, [#allocation6]
    $region13: #{forward.1} parent=1 // pred_fallthru
      _
    // Predicated region
    $region14: #{forward.1} parent=1 // pred_check
      _
    $region15: #{forward.1} parent=1 // pred_check_branch
      %65 = sbr.rel (0) target = $region17
    $region16: #{forward.1} parent=1 // pred_region
      %s67 = ssub.s32 2048, 2048
      %68 = vsyncadd [#allocation9], %s67
      %s69 = sshll.u32 [#allocation8], 4
      %s70 = int_to_ptr.vmem [resolvable:$true] %s69
      %75 = dma.hbm_to_vmem [thread:$0]  %s3, 2048, %s70, [#allocation9], 512, 512, 32
    $region17: #{forward.1} parent=1 // pred_fallthru
      _
    // Predicated region
    $region18: #{forward.1} parent=1 // pred_check
      _
    $region19: #{forward.1} parent=1 // pred_check_branch
      %77 = sbr.rel (0) target = $region21
    $region20: #{forward.1} parent=1 // pred_region
      %s79 = ssub.s32 64, 64
      %80 = vsyncadd [#allocation9], %s79
      %s82 = sshll.u32 [#allocation10], 4
      %s83 = int_to_ptr.vmem [resolvable:$true] %s82
      %85 = dma.hbm_to_vmem [thread:$0]  %s4, 64, %s83, [#allocation9]
    $region21: #{forward.1} parent=1 // pred_fallthru
      _
    // Predicated region
    $region22: #{forward.1} parent=1 // pred_check
      _
    $region23: #{forward.1} parent=1 // pred_check_branch
      %87 = sbr.rel (0) target = $region25
    $region24: #{forward.1} parent=1 // pred_region
      %s89 = ssub.s32 16, 16
      %90 = vsyncadd [#allocation12], %s89
      %s92 = sshll.u32 [#allocation11], 4
      %s93 = int_to_ptr.vmem [resolvable:$true] %s92
      %95 = dma.hbm_to_vmem [thread:$0]  %s5, 16, %s93, [#allocation12]
    $region25: #{forward.1} parent=1 // pred_fallthru
      _
    // Predicated region
    $region26: #{forward.1} parent=1 // pred_check
      _
    $region27: #{forward.1} parent=1 // pred_check_branch
      %97 = sbr.rel (0) target = $region29
    $region28: #{forward.1} parent=1 // pred_region
      %s99 = ssub.s32 16, 16
      %100 = vsyncadd [#allocation12], %s99
      %s102 = sshll.u32 [#allocation13], 4
      %s103 = int_to_ptr.vmem [resolvable:$true] %s102
      %105 = dma.hbm_to_vmem [thread:$0]  %s6, 16, %s103, [#allocation12]
    $region29: #{forward.1} parent=1 // pred_fallthru
      _
    // Predicated region
    $region30: #{forward.1} parent=1 // pred_check
      _
    $region31: #{forward.1} parent=1 // pred_check_branch
      %107 = sbr.rel (0) target = $region33
    $region32: #{forward.1} parent=1 // pred_region
      %s109 = ssub.s32 8192, 8192
      %110 = vsyncadd [#allocation15], %s109
      %s111 = sshll.u32 [#allocation14], 4
      %s112 = int_to_ptr.vmem [resolvable:$true] %s111
      %117 = dma.hbm_to_vmem [thread:$0]  %s7, 8192, %s112, [#allocation15], 128, 128, 8
    $region33: #{forward.1} parent=1 // pred_fallthru
      _
    // Predicated region
    $region34: #{forward.1} parent=1 // pred_check
      _
    $region35: #{forward.1} parent=1 // pred_check_branch
      %119 = sbr.rel (0) target = $region37
    $region36: #{forward.1} parent=1 // pred_region
      %s121 = ssub.s32 512, 512
      %122 = vsyncadd [#allocation15], %s121
      %s124 = sshll.u32 [#allocation16], 4
      %s125 = int_to_ptr.vmem [resolvable:$true] %s124
      %127 = dma.hbm_to_vmem [thread:$0]  %s8, 512, %s125, [#allocation15]
    $region37: #{forward.1} parent=1 // pred_fallthru
      _
    // Predicated region
    $region38: #{forward.1} parent=1 // pred_check
      _
    $region39: #{forward.1} parent=1 // pred_check_branch
      %129 = sbr.rel (0) target = $region41
    $region40: #{forward.1} parent=1 // pred_region
      %s131 = ssub.s32 65536, 65536
      %132 = vsyncadd [#allocation18], %s131
      %s133 = sshll.u32 [#allocation17], 4
      %s134 = int_to_ptr.vmem [resolvable:$true] %s133
      %139 = dma.hbm_to_vmem [thread:$0]  %s9, 65536, %s134, [#allocation18], 1024, 1024, 64
    $region41: #{forward.1} parent=1 // pred_fallthru
      _
    // Predicated region
    $region42: #{forward.1} parent=1 // pred_check
      _
    $region43: #{forward.1} parent=1 // pred_check_branch
      %141 = sbr.rel (0) target = $region45
    $region44: #{forward.1} parent=1 // pred_region
      %s143 = ssub.s32 128, 128
      %144 = vsyncadd [#allocation18], %s143
      %s146 = sshll.u32 [#allocation19], 4
      %s147 = int_to_ptr.vmem [resolvable:$true] %s146
      %149 = dma.hbm_to_vmem [thread:$0]  %s10, 128, %s147, [#allocation18]
    $region45: #{forward.1} parent=1 // pred_fallthru
      _
    // Predicated region
    $region46: #{forward.1} parent=1 // pred_check
      _
    $region47: #{forward.1} parent=1 // pred_check_branch
      %151 = sbr.rel (0) target = $region49
    $region48: #{forward.1} parent=1 // pred_region
      %s153 = ssub.s32 16, 16
      %154 = vsyncadd [#allocation21], %s153
      %s156 = sshll.u32 [#allocation20], 4
      %s157 = int_to_ptr.vmem [resolvable:$true] %s156
      %159 = dma.hbm_to_vmem [thread:$0]  %s11, 16, %s157, [#allocation21]
    $region49: #{forward.1} parent=1 // pred_fallthru
      _
    // Predicated region
    $region50: #{forward.1} parent=1 // pred_check
      _
    $region51: #{forward.1} parent=1 // pred_check_branch
      %161 = sbr.rel (0) target = $region53
    $region52: #{forward.1} parent=1 // pred_region
      %s163 = ssub.s32 16, 16
      %164 = vsyncadd [#allocation21], %s163
      %s166 = sshll.u32 [#allocation22], 4
      %s167 = int_to_ptr.vmem [resolvable:$true] %s166
      %169 = dma.hbm_to_vmem [thread:$0]  %s12, 16, %s167, [#allocation21]
    $region53: #{forward.1} parent=1 // pred_fallthru
      _
    // Predicated region
    $region54: #{forward.1} parent=1 // pred_check
      _
    $region55: #{forward.1} parent=1 // pred_check_branch
      %171 = sbr.rel (0) target = $region57
    $region56: #{forward.1} parent=1 // pred_region
      %s173 = ssub.s32 16384, 16384
      %174 = vsyncadd [#allocation24], %s173
      %s175 = sshll.u32 [#allocation23], 4
      %s176 = int_to_ptr.vmem [resolvable:$true] %s175
      %181 = dma.hbm_to_vmem [thread:$0]  %s13, 16384, %s176, [#allocation24], 128, 128, 8
    $region57: #{forward.1} parent=1 // pred_fallthru
      _
    // Predicated region
    $region58: #{forward.1} parent=1 // pred_check
      _
    $region59: #{forward.1} parent=1 // pred_check_branch
      %183 = sbr.rel (0) target = $region61
    $region60: #{forward.1} parent=1 // pred_region
      %s185 = ssub.s32 512, 512
      %186 = vsyncadd [#allocation24], %s185
      %s188 = sshll.u32 [#allocation25], 4
      %s189 = int_to_ptr.vmem [resolvable:$true] %s188
      %191 = dma.hbm_to_vmem [thread:$0]  %s14, 512, %s189, [#allocation24]
    $region61: #{forward.1} parent=1 // pred_fallthru
      _
    // Predicated region
    $region62: #{forward.1} parent=1 // pred_check
      _
    $region63: #{forward.1} parent=1 // pred_check_branch
      %193 = sbr.rel (0) target = $region65
    $region64: #{forward.1} parent=1 // pred_region
      %s195 = ssub.s32 64, 64
      %196 = vsyncadd [#allocation4], %s195
      %199 = dma.hbm_to_smem %s15, 64, [#allocation26], [#allocation4]
    $region65: #{forward.1} parent=1 // pred_fallthru
      _
    // Predicated region
    $region66: #{forward.1} parent=1 // pred_check
      _
    $region67: #{forward.1} parent=1 // pred_check_branch
      %201 = sbr.rel (0) target = $region69
    $region68: #{forward.1} parent=1 // pred_region
      %s203 = ssub.s32 16, 16
      %204 = vsyncadd [#allocation28], %s203
      %207 = dma.hbm_to_smem %s16, 16, [#allocation27], [#allocation28]
    $region69: #{forward.1} parent=1 // pred_fallthru
      _
    // Predicated region
    $region70: #{forward.1} parent=1 // pred_check
      _
    $region71: #{forward.1} parent=1 // pred_check_branch
      %209 = sbr.rel (0) target = $region73
    $region72: #{forward.1} parent=1 // pred_region
      %210 = dma.done [#allocation3], 32
    $region73: #{forward.1} parent=1 // pred_fallthru
      _
    // Predicated region
    $region74: #{forward.1} parent=1 // pred_check
      _
    $region75: #{forward.1} parent=1 // pred_check_branch
      %212 = sbr.rel (0) target = $region77
    $region76: #{forward.1} parent=1 // pred_region
      %213 = dma.done [#allocation6], 512
    $region77: #{forward.1} parent=1 // pred_fallthru
      _
    // Predicated region
    $region78: #{forward.1} parent=1 // pred_check
      _
    $region79: #{forward.1} parent=1 // pred_check_branch
      %215 = sbr.rel (0) target = $region81
    $region80: #{forward.1} parent=1 // pred_region
      %216 = dma.done [#allocation6], 16
    $region81: #{forward.1} parent=1 // pred_fallthru
      _
    // Predicated region
    $region82: #{forward.1} parent=1 // pred_check
      _
    $region83: #{forward.1} parent=1 // pred_check_branch
      %218 = sbr.rel (0) target = $region85
    $region84: #{forward.1} parent=1 // pred_region
      %219 = dma.done [#allocation9], 2048
    $region85: #{forward.1} parent=1 // pred_fallthru
      _
    // Predicated region
    $region86: #{forward.1} parent=1 // pred_check
      _
    $region87: #{forward.1} parent=1 // pred_check_branch
      %221 = sbr.rel (0) target = $region89
    $region88: #{forward.1} parent=1 // pred_region
      %222 = dma.done [#allocation9], 64
    $region89: #{forward.1} parent=1 // pred_fallthru
      _
    // Predicated region
    $region90: #{forward.1} parent=1 // pred_check
      _
    $region91: #{forward.1} parent=1 // pred_check_branch
      %224 = sbr.rel (0) target = $region93
    $region92: #{forward.1} parent=1 // pred_region
      %225 = dma.done [#allocation12], 16
    $region93: #{forward.1} parent=1 // pred_fallthru
      _
    // Predicated region
    $region94: #{forward.1} parent=1 // pred_check
      _
    $region95: #{forward.1} parent=1 // pred_check_branch
      %227 = sbr.rel (0) target = $region97
    $region96: #{forward.1} parent=1 // pred_region
      %228 = dma.done [#allocation12], 16
    $region97: #{forward.1} parent=1 // pred_fallthru
      _
    // Predicated region
    $region98: #{forward.1} parent=1 // pred_check
      _
    $region99: #{forward.1} parent=1 // pred_check_branch
      %230 = sbr.rel (0) target = $region101
    $region100: #{forward.1} parent=1 // pred_region
      %231 = dma.done [#allocation15], 8192
    $region101: #{forward.1} parent=1 // pred_fallthru
      _
    // Predicated region
    $region102: #{forward.1} parent=1 // pred_check
      _
    $region103: #{forward.1} parent=1 // pred_check_branch
      %233 = sbr.rel (0) target = $region105
    $region104: #{forward.1} parent=1 // pred_region
      %234 = dma.done [#allocation15], 512
    $region105: #{forward.1} parent=1 // pred_fallthru
      _
    // Predicated region
    $region106: #{forward.1} parent=1 // pred_check
      _
    $region107: #{forward.1} parent=1 // pred_check_branch
      %236 = sbr.rel (0) target = $region109
    $region108: #{forward.1} parent=1 // pred_region
      %237 = dma.done [#allocation18], 65536
    $region109: #{forward.1} parent=1 // pred_fallthru
      _
    // Predicated region
    $region110: #{forward.1} parent=1 // pred_check
      _
    $region111: #{forward.1} parent=1 // pred_check_branch
      %239 = sbr.rel (0) target = $region113
    $region112: #{forward.1} parent=1 // pred_region
      %240 = dma.done [#allocation18], 128
    $region113: #{forward.1} parent=1 // pred_fallthru
      _
    // Predicated region
    $region114: #{forward.1} parent=1 // pred_check
      _
    $region115: #{forward.1} parent=1 // pred_check_branch
      %242 = sbr.rel (0) target = $region117
    $region116: #{forward.1} parent=1 // pred_region
      %243 = dma.done [#allocation21], 16
    $region117: #{forward.1} parent=1 // pred_fallthru
      _
    // Predicated region
    $region118: #{forward.1} parent=1 // pred_check
      _
    $region119: #{forward.1} parent=1 // pred_check_branch
      %245 = sbr.rel (0) target = $region121
    $region120: #{forward.1} parent=1 // pred_region
      %246 = dma.done [#allocation21], 16
    $region121: #{forward.1} parent=1 // pred_fallthru
      _
    // Predicated region
    $region122: #{forward.1} parent=1 // pred_check
      _
    $region123: #{forward.1} parent=1 // pred_check_branch
      %248 = sbr.rel (0) target = $region125
    $region124: #{forward.1} parent=1 // pred_region
      %249 = dma.done [#allocation24], 16384
    $region125: #{forward.1} parent=1 // pred_fallthru
      _
    // Predicated region
    $region126: #{forward.1} parent=1 // pred_check
      _
    $region127: #{forward.1} parent=1 // pred_check_branch
      %251 = sbr.rel (0) target = $region129
    $region128: #{forward.1} parent=1 // pred_region
      %252 = dma.done [#allocation24], 512
    $region129: #{forward.1} parent=1 // pred_fallthru
      _
    // Predicated region
    $region130: #{forward.1} parent=1 // pred_check
      _
    $region131: #{forward.1} parent=1 // pred_check_branch
      %254 = sbr.rel (0) target = $region133
    $region132: #{forward.1} parent=1 // pred_region
      %255 = dma.done [#allocation4], 64
    $region133: #{forward.1} parent=1 // pred_fallthru
      _
    // Predicated region
    $region134: #{forward.1} parent=1 // pred_check
      _
    $region135: #{forward.1} parent=1 // pred_check_branch
      %257 = sbr.rel (0) target = $region137
    $region136: #{forward.1} parent=1 // pred_region
      %258 = dma.done [#allocation28], 16
    $region137: #{forward.1} parent=1 // pred_fallthru
      _
    %259 = sfence
    %v260 = vld [vmem:[#allocation2] sm:$0x3]
    %v261 = vld [vmem:[#allocation5] sm:$0xff]
    %v262 = vld [vmem:[#allocation5 + $0x8] sm:$0xff]
    %v263 = vld [vmem:[#allocation5 + $0x10] sm:$0xff]
    %v264 = vld [vmem:[#allocation5 + $0x18] sm:$0xff]
    %v265 = vld [vmem:[#allocation7] sm:$0x1]
    %v267 = vlaneseq
    %v268 = vshrl.u32 %v267, 7
    %v269 = vsub.s32 0, %v268
    %v270 = vrot.slane %v265, %v269
    %vm272 = vcmask 261120
    %v274 = vsel %vm272, %v260, 0
    %276 = vmatprep.subr.mxu0 0.0
    %277 = vmatpush1.msra.mxu0 %v261
    %278 = vmatprep.subr.mxu0 0.0
    %279 = vmatpush1.msra.mxu0 %v262
    %280 = vmatprep.subr.mxu0 0.0
    %281 = vmatpush1.msra.mxu0 %v263
    %282 = vmatprep.subr.mxu0 0.0
    %283 = vmatpush1.msra.mxu0 %v264
    %284 = vmatprep.subr.mxu0 0.0
    %285 = vmatpush1.msra.mxu0 0.0
    %286 = vmatprep.subr.mxu0 0.0
    %287 = vmatpush1.msra.mxu0 0.0
    %288 = vmatprep.subr.mxu0 0.0
    %289 = vmatpush1.msra.mxu0 0.0
    %290 = vmatprep.subr.mxu0 0.0
    %291 = vmatpush1.msra.mxu0 0.0
    %292 = vmatprep.subr.mxu0 0.0
    %293 = vmatpush1.msra.mxu0 0.0
    %294 = vmatprep.subr.mxu0 0.0
    %295 = vmatpush1.msra.mxu0 0.0
    %296 = vmatprep.subr.mxu0 0.0
    %297 = vmatpush1.msra.mxu0 0.0
    %298 = vmatprep.subr.mxu0 0.0
    %299 = vmatpush1.msra.mxu0 0.0
    %300 = vmatprep.subr.mxu0 0.0
    %301 = vmatpush1.msra.mxu0 0.0
    %302 = vmatprep.subr.mxu0 0.0
    %303 = vmatpush1.msra.mxu0 0.0
    %304 = vmatprep.subr.mxu0 0.0
    %305 = vmatpush1.msra.mxu0 0.0
    %306 = vmatprep.subr.mxu0 0.0
    %307 = vmatpush1.msra.mxu0 0.0
    %308 = vmatprep.subr.mxu0 0.0
    %309 = vmatpush1.msra.mxu0 0.0
    %310 = vmatprep.subr.mxu0 0.0
    %311 = vmatpush1.msra.mxu0 0.0
    %312 = vmatprep.subr.mxu0 0.0
    %313 = vmatpush1.msra.mxu0 0.0
    %314 = vmatprep.subr.mxu0 0.0
    %315 = vmatpush1.msra.mxu0 0.0
    %316 = vmatprep.subr.mxu0 0.0
    %317 = vmatpush1.msra.mxu0 0.0
    %318 = vmatprep.subr.mxu0 0.0
    %319 = vmatpush1.msra.mxu0 0.0
    %320 = vmatprep.subr.mxu0 0.0
    %321 = vmatpush1.msra.mxu0 0.0
    %322 = vmatprep.subr.mxu0 0.0
    %323 = vmatpush1.msra.mxu0 0.0
    %324 = vmatprep.subr.mxu0 0.0
    %325 = vmatpush1.msra.mxu0 0.0
    %326 = vmatprep.subr.mxu0 0.0
    %327 = vmatpush1.msra.mxu0 0.0
    %328 = vmatprep.subr.mxu0 0.0
    %329 = vmatpush1.msra.mxu0 0.0
    %330 = vmatprep.subr.mxu0 0.0
    %331 = vmatpush1.msra.mxu0 0.0
    %332 = vmatprep.subr.mxu0 0.0
    %333 = vmatpush1.msra.mxu0 0.0
    %334 = vmatprep.subr.mxu0 0.0
    %335 = vmatpush1.msra.mxu0 0.0
    %336 = vmatprep.subr.mxu0 0.0
    %337 = vmatpush1.msra.mxu0 0.0
    %338 = vmatprep.subr.mxu0 0.0
    %339 = vmatpush1.msra.mxu0 0.0
    %340 = vmatprep.mubr.f32.mxu0 0.0
    %341 = vmatmul.mubr.f32.gmra.mrb[0].mxu0 %v274
    %v342 = vpop.f32.mrb[0].mxu0
    %v343 = vadd.f32 %v270, %v342
    %v344 = vpop.f32.mrb[0].mxu0
    %345 = vdwg.mxu0
    %v346 = vmax.f32 %v343, 0.0
    %v347 = vld [vmem:[#allocation8] sm:$0xff]
    %v348 = vld [vmem:[#allocation8 + $0x8] sm:$0xff]
    %v349 = vld [vmem:[#allocation8 + $0x10] sm:$0xff]
    %v350 = vld [vmem:[#allocation8 + $0x18] sm:$0xff]
    %v351 = vld [vmem:[#allocation8 + $0x20] sm:$0xff]
    %v352 = vld [vmem:[#allocation8 + $0x28] sm:$0xff]
    %v353 = vld [vmem:[#allocation8 + $0x30] sm:$0xff]
    %v354 = vld [vmem:[#allocation8 + $0x38] sm:$0xff]
    %v355 = vld [vmem:[#allocation8 + $0x40] sm:$0xff]
    %v356 = vld [vmem:[#allocation8 + $0x48] sm:$0xff]
    %v357 = vld [vmem:[#allocation8 + $0x50] sm:$0xff]
    %v358 = vld [vmem:[#allocation8 + $0x58] sm:$0xff]
    %v359 = vld [vmem:[#allocation8 + $0x60] sm:$0xff]
    %v360 = vld [vmem:[#allocation8 + $0x68] sm:$0xff]
    %v361 = vld [vmem:[#allocation8 + $0x70] sm:$0xff]
    %v362 = vld [vmem:[#allocation8 + $0x78] sm:$0xff]
    %v363 = vld [vmem:[#allocation10] sm:$0xf]
    %v365 = vlaneseq
    %v366 = vshrl.u32 %v365, 7
    %v367 = vsub.s32 0, %v366
    %v368 = vrot.slane %v363, %v367
    %v369 = vlaneseq
    %v370 = vshrl.u32 %v369, 7
    %v371 = vsub.s32 1, %v370
    %v372 = vrot.slane %v363, %v371
    %v373 = vlaneseq
    %v374 = vshrl.u32 %v373, 7
    %v375 = vsub.s32 2, %v374
    %v376 = vrot.slane %v363, %v375
    %v377 = vlaneseq
    %v378 = vshrl.u32 %v377, 7
    %v379 = vsub.s32 3, %v378
    %v380 = vrot.slane %v363, %v379
    %v386 = vsel %vm272, %v346, 0
    %388 = vmatprep.subr.mxu0 %v348
    %389 = vmatpush1.msra.mxu0 %v347
    %390 = vmatprep.subr.mxu0 %v352
    %391 = vmatpush1.msra.mxu0 %v351
    %392 = vmatprep.subr.mxu0 %v356
    %393 = vmatpush1.msra.mxu0 %v355
    %394 = vmatprep.subr.mxu0 %v360
    %395 = vmatpush1.msra.mxu0 %v359
    %396 = vmatprep.subr.mxu0 0.0
    %397 = vmatpush1.msra.mxu0 0.0
    %398 = vmatprep.subr.mxu0 0.0
    %399 = vmatpush1.msra.mxu0 0.0
    %400 = vmatprep.subr.mxu0 0.0
    %401 = vmatpush1.msra.mxu0 0.0
    %402 = vmatprep.subr.mxu0 0.0
    %403 = vmatpush1.msra.mxu0 0.0
    %404 = vmatprep.subr.mxu0 0.0
    %405 = vmatpush1.msra.mxu0 0.0
    %406 = vmatprep.subr.mxu0 0.0
    %407 = vmatpush1.msra.mxu0 0.0
    %408 = vmatprep.subr.mxu0 0.0
    %409 = vmatpush1.msra.mxu0 0.0
    %410 = vmatprep.subr.mxu0 0.0
    %411 = vmatpush1.msra.mxu0 0.0
    %412 = vmatprep.subr.mxu0 0.0
    %413 = vmatpush1.msra.mxu0 0.0
    %414 = vmatprep.subr.mxu0 0.0
    %415 = vmatpush1.msra.mxu0 0.0
    %416 = vmatprep.subr.mxu0 0.0
    %417 = vmatpush1.msra.mxu0 0.0
    %418 = vmatprep.subr.mxu0 0.0
    %419 = vmatpush1.msra.mxu0 0.0
    %420 = vmatprep.subr.mxu0 0.0
    %421 = vmatpush1.msra.mxu0 0.0
    %422 = vmatprep.subr.mxu0 0.0
    %423 = vmatpush1.msra.mxu0 0.0
    %424 = vmatprep.subr.mxu0 0.0
    %425 = vmatpush1.msra.mxu0 0.0
    %426 = vmatprep.subr.mxu0 0.0
    %427 = vmatpush1.msra.mxu0 0.0
    %428 = vmatprep.subr.mxu0 0.0
    %429 = vmatpush1.msra.mxu0 0.0
    %430 = vmatprep.subr.mxu0 0.0
    %431 = vmatpush1.msra.mxu0 0.0
    %432 = vmatprep.subr.mxu0 0.0
    %433 = vmatpush1.msra.mxu0 0.0
    %434 = vmatprep.subr.mxu0 0.0
    %435 = vmatpush1.msra.mxu0 0.0
    %436 = vmatprep.subr.mxu0 0.0
    %437 = vmatpush1.msra.mxu0 0.0
    %438 = vmatprep.subr.mxu0 0.0
    %439 = vmatpush1.msra.mxu0 0.0
    %440 = vmatprep.subr.mxu0 0.0
    %441 = vmatpush1.msra.mxu0 0.0
    %442 = vmatprep.subr.mxu0 0.0
    %443 = vmatpush1.msra.mxu0 0.0
    %444 = vmatprep.subr.mxu0 0.0
    %445 = vmatpush1.msra.mxu0 0.0
    %446 = vmatprep.subr.mxu0 0.0
    %447 = vmatpush1.msra.mxu0 0.0
    %448 = vmatprep.subr.mxu0 0.0
    %449 = vmatpush1.msra.mxu0 0.0
    %450 = vmatprep.subr.mxu0 0.0
    %451 = vmatpush1.msra.mxu0 0.0
    %452 = vmatprep.mubr.f32.mxu0 0.0
    %453 = vmatmul.mubr.f32.gmra.mrb[0].mxu0 %v386
    %v454 = vpop.f32.mrb[0].mxu0
    %v455 = vadd.f32 %v368, %v454
    %v456 = vpop.f32.mrb[0].mxu0
    %v457 = vadd.f32 %v372, %v456
    %458 = vdwg.mxu0
    %459 = vmatprep.subr.mxu0 %v350
    %460 = vmatpush1.msra.mxu0 %v349
    %461 = vmatprep.subr.mxu0 %v354
    %462 = vmatpush1.msra.mxu0 %v353
    %463 = vmatprep.subr.mxu0 %v358
    %464 = vmatpush1.msra.mxu0 %v357
    %465 = vmatprep.subr.mxu0 %v362
    %466 = vmatpush1.msra.mxu0 %v361
    %467 = vmatprep.subr.mxu0 0.0
    %468 = vmatpush1.msra.mxu0 0.0
    %469 = vmatprep.subr.mxu0 0.0
    %470 = vmatpush1.msra.mxu0 0.0
    %471 = vmatprep.subr.mxu0 0.0
    %472 = vmatpush1.msra.mxu0 0.0
    %473 = vmatprep.subr.mxu0 0.0
    %474 = vmatpush1.msra.mxu0 0.0
    %475 = vmatprep.subr.mxu0 0.0
    %476 = vmatpush1.msra.mxu0 0.0
    %477 = vmatprep.subr.mxu0 0.0
    %478 = vmatpush1.msra.mxu0 0.0
    %479 = vmatprep.subr.mxu0 0.0
    %480 = vmatpush1.msra.mxu0 0.0
    %481 = vmatprep.subr.mxu0 0.0
    %482 = vmatpush1.msra.mxu0 0.0
    %483 = vmatprep.subr.mxu0 0.0
    %484 = vmatpush1.msra.mxu0 0.0
    %485 = vmatprep.subr.mxu0 0.0
    %486 = vmatpush1.msra.mxu0 0.0
    %487 = vmatprep.subr.mxu0 0.0
    %488 = vmatpush1.msra.mxu0 0.0
    %489 = vmatprep.subr.mxu0 0.0
    %490 = vmatpush1.msra.mxu0 0.0
    %491 = vmatprep.subr.mxu0 0.0
    %492 = vmatpush1.msra.mxu0 0.0
    %493 = vmatprep.subr.mxu0 0.0
    %494 = vmatpush1.msra.mxu0 0.0
    %495 = vmatprep.subr.mxu0 0.0
    %496 = vmatpush1.msra.mxu0 0.0
    %497 = vmatprep.subr.mxu0 0.0
    %498 = vmatpush1.msra.mxu0 0.0
    %499 = vmatprep.subr.mxu0 0.0
    %500 = vmatpush1.msra.mxu0 0.0
    %501 = vmatprep.subr.mxu0 0.0
    %502 = vmatpush1.msra.mxu0 0.0
    %503 = vmatprep.subr.mxu0 0.0
    %504 = vmatpush1.msra.mxu0 0.0
    %505 = vmatprep.subr.mxu0 0.0
    %506 = vmatpush1.msra.mxu0 0.0
    %507 = vmatprep.subr.mxu0 0.0
    %508 = vmatpush1.msra.mxu0 0.0
    %509 = vmatprep.subr.mxu0 0.0
    %510 = vmatpush1.msra.mxu0 0.0
    %511 = vmatprep.subr.mxu0 0.0
    %512 = vmatpush1.msra.mxu0 0.0
    %513 = vmatprep.subr.mxu0 0.0
    %514 = vmatpush1.msra.mxu0 0.0
    %515 = vmatprep.subr.mxu0 0.0
    %516 = vmatpush1.msra.mxu0 0.0
    %517 = vmatprep.subr.mxu0 0.0
    %518 = vmatpush1.msra.mxu0 0.0
    %519 = vmatprep.subr.mxu0 0.0
    %520 = vmatpush1.msra.mxu0 0.0
    %521 = vmatprep.subr.mxu0 0.0
    %522 = vmatpush1.msra.mxu0 0.0
    %523 = vmatprep.mubr.f32.mxu0 0.0
    %524 = vmatmul.mubr.f32.gmra.mrb[0].mxu0 %v386
    %v525 = vpop.f32.mrb[0].mxu0
    %v526 = vadd.f32 %v376, %v525
    %v527 = vpop.f32.mrb[0].mxu0
    %v528 = vadd.f32 %v380, %v527
    %529 = vdwg.mxu0
    %v530 = vld [vmem:[#allocation14] sm:$0xff]
    %v531 = vld [vmem:[#allocation14 + $0x8] sm:$0xff]
    %v532 = vld [vmem:[#allocation14 + $0x10] sm:$0xff]
    %v533 = vld [vmem:[#allocation14 + $0x18] sm:$0xff]
    %v534 = vld [vmem:[#allocation14 + $0x20] sm:$0xff]
    %v535 = vld [vmem:[#allocation14 + $0x28] sm:$0xff]
    %v536 = vld [vmem:[#allocation14 + $0x30] sm:$0xff]
    %v537 = vld [vmem:[#allocation14 + $0x38] sm:$0xff]
    %v538 = vld [vmem:[#allocation14 + $0x40] sm:$0xff]
    %v539 = vld [vmem:[#allocation14 + $0x48] sm:$0xff]
    %v540 = vld [vmem:[#allocation14 + $0x50] sm:$0xff]
    %v541 = vld [vmem:[#allocation14 + $0x58] sm:$0xff]
    %v542 = vld [vmem:[#allocation14 + $0x60] sm:$0xff]
    %v543 = vld [vmem:[#allocation14 + $0x68] sm:$0xff]
    %v544 = vld [vmem:[#allocation14 + $0x70] sm:$0xff]
    %v545 = vld [vmem:[#allocation14 + $0x78] sm:$0xff]
    %v546 = vld [vmem:[#allocation14 + $0x80] sm:$0xff]
    %v547 = vld [vmem:[#allocation14 + $0x88] sm:$0xff]
    %v548 = vld [vmem:[#allocation14 + $0x90] sm:$0xff]
    %v549 = vld [vmem:[#allocation14 + $0x98] sm:$0xff]
    %v550 = vld [vmem:[#allocation14 + $0xa0] sm:$0xff]
    %v551 = vld [vmem:[#allocation14 + $0xa8] sm:$0xff]
    %v552 = vld [vmem:[#allocation14 + $0xb0] sm:$0xff]
    %v553 = vld [vmem:[#allocation14 + $0xb8] sm:$0xff]
    %v554 = vld [vmem:[#allocation14 + $0xc0] sm:$0xff]
    %v555 = vld [vmem:[#allocation14 + $0xc8] sm:$0xff]
    %v556 = vld [vmem:[#allocation14 + $0xd0] sm:$0xff]
    %v557 = vld [vmem:[#allocation14 + $0xd8] sm:$0xff]
    %v558 = vld [vmem:[#allocation14 + $0xe0] sm:$0xff]
    %v559 = vld [vmem:[#allocation14 + $0xe8] sm:$0xff]
    %v560 = vld [vmem:[#allocation14 + $0xf0] sm:$0xff]
    %v561 = vld [vmem:[#allocation14 + $0xf8] sm:$0xff]
    %v562 = vld [vmem:[#allocation14 + $0x100] sm:$0xff]
    %v563 = vld [vmem:[#allocation14 + $0x108] sm:$0xff]
    %v564 = vld [vmem:[#allocation14 + $0x110] sm:$0xff]
    %v565 = vld [vmem:[#allocation14 + $0x118] sm:$0xff]
    %v566 = vld [vmem:[#allocation14 + $0x120] sm:$0xff]
    %v567 = vld [vmem:[#allocation14 + $0x128] sm:$0xff]
    %v568 = vld [vmem:[#allocation14 + $0x130] sm:$0xff]
    %v569 = vld [vmem:[#allocation14 + $0x138] sm:$0xff]
    %v570 = vld [vmem:[#allocation14 + $0x140] sm:$0xff]
    %v571 = vld [vmem:[#allocation14 + $0x148] sm:$0xff]
    %v572 = vld [vmem:[#allocation14 + $0x150] sm:$0xff]
    %v573 = vld [vmem:[#allocation14 + $0x158] sm:$0xff]
    %v574 = vld [vmem:[#allocation14 + $0x160] sm:$0xff]
    %v575 = vld [vmem:[#allocation14 + $0x168] sm:$0xff]
    %v576 = vld [vmem:[#allocation14 + $0x170] sm:$0xff]
    %v577 = vld [vmem:[#allocation14 + $0x178] sm:$0xff]
    %v578 = vld [vmem:[#allocation14 + $0x180] sm:$0xff]
    %v579 = vld [vmem:[#allocation14 + $0x188] sm:$0xff]
    %v580 = vld [vmem:[#allocation14 + $0x190] sm:$0xff]
    %v581 = vld [vmem:[#allocation14 + $0x198] sm:$0xff]
    %v582 = vld [vmem:[#allocation14 + $0x1a0] sm:$0xff]
    %v583 = vld [vmem:[#allocation14 + $0x1a8] sm:$0xff]
    %v584 = vld [vmem:[#allocation14 + $0x1b0] sm:$0xff]
    %v585 = vld [vmem:[#allocation14 + $0x1b8] sm:$0xff]
    %v586 = vld [vmem:[#allocation14 + $0x1c0] sm:$0xff]
    %v587 = vld [vmem:[#allocation14 + $0x1c8] sm:$0xff]
    %v588 = vld [vmem:[#allocation14 + $0x1d0] sm:$0xff]
    %v589 = vld [vmem:[#allocation14 + $0x1d8] sm:$0xff]
    %v590 = vld [vmem:[#allocation14 + $0x1e0] sm:$0xff]
    %v591 = vld [vmem:[#allocation14 + $0x1e8] sm:$0xff]
    %v592 = vld [vmem:[#allocation14 + $0x1f0] sm:$0xff]
    %v593 = vld [vmem:[#allocation14 + $0x1f8] sm:$0xff]
    %v594 = vld [vmem:[#allocation16] sm:$0xff]
    %v595 = vld [vmem:[#allocation16 + $0x8] sm:$0xff]
    %v596 = vld [vmem:[#allocation16 + $0x10] sm:$0xff]
    %v597 = vld [vmem:[#allocation16 + $0x18] sm:$0xff]
    %v598 = vld [vmem:[#allocation11] sm:$0x1]
    %v599 = vld [vmem:[#allocation13] sm:$0x1]
    %vm600 = vcmask 1041408
    %v601 = vsel %vm600, %v455, 0.0
    %v602 = vrot.slane %v601, 4
    %v603 = vadd.f32 %v601, %v602
    %v604 = vrot.slane %v603, 2
    %v605 = vadd.f32 %v603, %v604
    %v606 = vrot.slane %v605, 1
    %v607 = vadd.f32 %v605, %v606
    %v608 = vsel %vm600, %v457, 0.0
    %v609 = vrot.slane %v608, 4
    %v610 = vadd.f32 %v608, %v609
    %v611 = vrot.slane %v610, 2
    %v612 = vadd.f32 %v610, %v611
    %v613 = vrot.slane %v612, 1
    %v614 = vadd.f32 %v612, %v613
    %v615 = vsel %vm600, %v526, 0.0
    %v616 = vrot.slane %v615, 4
    %v617 = vadd.f32 %v615, %v616
    %v618 = vrot.slane %v617, 2
    %v619 = vadd.f32 %v617, %v618
    %v620 = vrot.slane %v619, 1
    %v621 = vadd.f32 %v619, %v620
    %v622 = vsel %vm600, %v528, 0.0
    %v623 = vrot.slane %v622, 4
    %v624 = vadd.f32 %v622, %v623
    %v625 = vrot.slane %v624, 2
    %v626 = vadd.f32 %v624, %v625
    %v627 = vrot.slane %v626, 1
    %v628 = vadd.f32 %v626, %v627
    %v629 = vmul.f32 %v455, %v455
    %v630 = vmul.f32 %v457, %v457
    %v631 = vmul.f32 %v526, %v526
    %v632 = vmul.f32 %v528, %v528
    %v633 = vsel %vm600, %v629, 0.0
    %v634 = vrot.slane %v633, 4
    %v635 = vadd.f32 %v633, %v634
    %v636 = vrot.slane %v635, 2
    %v637 = vadd.f32 %v635, %v636
    %v638 = vrot.slane %v637, 1
    %v639 = vadd.f32 %v637, %v638
    %v640 = vsel %vm600, %v630, 0.0
    %v641 = vrot.slane %v640, 4
    %v642 = vadd.f32 %v640, %v641
    %v643 = vrot.slane %v642, 2
    %v644 = vadd.f32 %v642, %v643
    %v645 = vrot.slane %v644, 1
    %v646 = vadd.f32 %v644, %v645
    %v647 = vsel %vm600, %v631, 0.0
    %v648 = vrot.slane %v647, 4
    %v649 = vadd.f32 %v647, %v648
    %v650 = vrot.slane %v649, 2
    %v651 = vadd.f32 %v649, %v650
    %v652 = vrot.slane %v651, 1
    %v653 = vadd.f32 %v651, %v652
    %v654 = vsel %vm600, %v632, 0.0
    %v655 = vrot.slane %v654, 4
    %v656 = vadd.f32 %v654, %v655
    %v657 = vrot.slane %v656, 2
    %v658 = vadd.f32 %v656, %v657
    %v659 = vrot.slane %v658, 1
    %v660 = vadd.f32 %v658, %v659
    %vm661 = vcmask 1040384
    %v662 = vsel %vm661, %v607, %v639
    %v663 = vsel %vm661, %v614, %v646
    %v664 = vsel %vm661, %v621, %v653
    %v665 = vsel %vm661, %v628, %v660
    %666 = vmatprep.subr.mxu0 0.0
    %667 = vmatpush1.msra.mxu0 %v530
    %668 = vmatprep.subr.mxu0 0.0
    %669 = vmatpush1.msra.mxu0 %v531
    %670 = vmatprep.subr.mxu0 0.0
    %671 = vmatpush1.msra.mxu0 %v532
    %672 = vmatprep.subr.mxu0 0.0
    %673 = vmatpush1.msra.mxu0 %v533
    %674 = vmatprep.subr.mxu0 0.0
    %675 = vmatpush1.msra.mxu0 %v534
    %676 = vmatprep.subr.mxu0 0.0
    %677 = vmatpush1.msra.mxu0 %v535
    %678 = vmatprep.subr.mxu0 0.0
    %679 = vmatpush1.msra.mxu0 %v536
    %680 = vmatprep.subr.mxu0 0.0
    %681 = vmatpush1.msra.mxu0 %v537
    %682 = vmatprep.subr.mxu0 0.0
    %683 = vmatpush1.msra.mxu0 %v538
    %684 = vmatprep.subr.mxu0 0.0
    %685 = vmatpush1.msra.mxu0 %v539
    %686 = vmatprep.subr.mxu0 0.0
    %687 = vmatpush1.msra.mxu0 %v540
    %688 = vmatprep.subr.mxu0 0.0
    %689 = vmatpush1.msra.mxu0 %v541
    %690 = vmatprep.subr.mxu0 0.0
    %691 = vmatpush1.msra.mxu0 %v542
    %692 = vmatprep.subr.mxu0 0.0
    %693 = vmatpush1.msra.mxu0 %v543
    %694 = vmatprep.subr.mxu0 0.0
    %695 = vmatpush1.msra.mxu0 %v544
    %696 = vmatprep.subr.mxu0 0.0
    %697 = vmatpush1.msra.mxu0 %v545
    %698 = vmatprep.subr.mxu0 0.0
    %699 = vmatpush1.msra.mxu0 %v546
    %700 = vmatprep.subr.mxu0 0.0
    %701 = vmatpush1.msra.mxu0 %v547
    %702 = vmatprep.subr.mxu0 0.0
    %703 = vmatpush1.msra.mxu0 %v548
    %704 = vmatprep.subr.mxu0 0.0
    %705 = vmatpush1.msra.mxu0 %v549
    %706 = vmatprep.subr.mxu0 0.0
    %707 = vmatpush1.msra.mxu0 %v550
    %708 = vmatprep.subr.mxu0 0.0
    %709 = vmatpush1.msra.mxu0 %v551
    %710 = vmatprep.subr.mxu0 0.0
    %711 = vmatpush1.msra.mxu0 %v552
    %712 = vmatprep.subr.mxu0 0.0
    %713 = vmatpush1.msra.mxu0 %v553
    %714 = vmatprep.subr.mxu0 0.0
    %715 = vmatpush1.msra.mxu0 %v554
    %716 = vmatprep.subr.mxu0 0.0
    %717 = vmatpush1.msra.mxu0 %v555
    %718 = vmatprep.subr.mxu0 0.0
    %719 = vmatpush1.msra.mxu0 %v556
    %720 = vmatprep.subr.mxu0 0.0
    %721 = vmatpush1.msra.mxu0 %v557
    %722 = vmatprep.subr.mxu0 0.0
    %723 = vmatpush1.msra.mxu0 %v558
    %724 = vmatprep.subr.mxu0 0.0
    %725 = vmatpush1.msra.mxu0 %v559
    %726 = vmatprep.subr.mxu0 0.0
    %727 = vmatpush1.msra.mxu0 %v560
    %728 = vmatprep.subr.mxu0 0.0
    %729 = vmatpush1.msra.mxu0 %v561
    %730 = vmatprep.mubr.f32.mxu0 %v663
    %731 = vmatmul.mubr.f32.gmra.mrb[0].mxu0 %v662
    %v732 = vpop.f32.mrb[0].mxu0
    %v733 = vadd.f32 0.0, %v732
    %v734 = vpop.f32.mrb[0].mxu0
    %735 = vdwg.mxu0
    %736 = vmatprep.subr.mxu0 0.0
    %737 = vmatpush1.msra.mxu0 %v562
    %738 = vmatprep.subr.mxu0 0.0
    %739 = vmatpush1.msra.mxu0 %v563
    %740 = vmatprep.subr.mxu0 0.0
    %741 = vmatpush1.msra.mxu0 %v564
    %742 = vmatprep.subr.mxu0 0.0
    %743 = vmatpush1.msra.mxu0 %v565
    %744 = vmatprep.subr.mxu0 0.0
    %745 = vmatpush1.msra.mxu0 %v566
    %746 = vmatprep.subr.mxu0 0.0
    %747 = vmatpush1.msra.mxu0 %v567
    %748 = vmatprep.subr.mxu0 0.0
    %749 = vmatpush1.msra.mxu0 %v568
    %750 = vmatprep.subr.mxu0 0.0
    %751 = vmatpush1.msra.mxu0 %v569
    %752 = vmatprep.subr.mxu0 0.0
    %753 = vmatpush1.msra.mxu0 %v570
    %754 = vmatprep.subr.mxu0 0.0
    %755 = vmatpush1.msra.mxu0 %v571
    %756 = vmatprep.subr.mxu0 0.0
    %757 = vmatpush1.msra.mxu0 %v572
    %758 = vmatprep.subr.mxu0 0.0
    %759 = vmatpush1.msra.mxu0 %v573
    %760 = vmatprep.subr.mxu0 0.0
    %761 = vmatpush1.msra.mxu0 %v574
    %762 = vmatprep.subr.mxu0 0.0
    %763 = vmatpush1.msra.mxu0 %v575
    %764 = vmatprep.subr.mxu0 0.0
    %765 = vmatpush1.msra.mxu0 %v576
    %766 = vmatprep.subr.mxu0 0.0
    %767 = vmatpush1.msra.mxu0 %v577
    %768 = vmatprep.subr.mxu0 0.0
    %769 = vmatpush1.msra.mxu0 %v578
    %770 = vmatprep.subr.mxu0 0.0
    %771 = vmatpush1.msra.mxu0 %v579
    %772 = vmatprep.subr.mxu0 0.0
    %773 = vmatpush1.msra.mxu0 %v580
    %774 = vmatprep.subr.mxu0 0.0
    %775 = vmatpush1.msra.mxu0 %v581
    %776 = vmatprep.subr.mxu0 0.0
    %777 = vmatpush1.msra.mxu0 %v582
    %778 = vmatprep.subr.mxu0 0.0
    %779 = vmatpush1.msra.mxu0 %v583
    %780 = vmatprep.subr.mxu0 0.0
    %781 = vmatpush1.msra.mxu0 %v584
    %782 = vmatprep.subr.mxu0 0.0
    %783 = vmatpush1.msra.mxu0 %v585
    %784 = vmatprep.subr.mxu0 0.0
    %785 = vmatpush1.msra.mxu0 %v586
    %786 = vmatprep.subr.mxu0 0.0
    %787 = vmatpush1.msra.mxu0 %v587
    %788 = vmatprep.subr.mxu0 0.0
    %789 = vmatpush1.msra.mxu0 %v588
    %790 = vmatprep.subr.mxu0 0.0
    %791 = vmatpush1.msra.mxu0 %v589
    %792 = vmatprep.subr.mxu0 0.0
    %793 = vmatpush1.msra.mxu0 %v590
    %794 = vmatprep.subr.mxu0 0.0
    %795 = vmatpush1.msra.mxu0 %v591
    %796 = vmatprep.subr.mxu0 0.0
    %797 = vmatpush1.msra.mxu0 %v592
    %798 = vmatprep.subr.mxu0 0.0
    %799 = vmatpush1.msra.mxu0 %v593
    %800 = vmatprep.mubr.f32.mxu0 %v665
    %801 = vmatmul.mubr.f32.gmra.mrb[0].mxu0 %v664
    %v802 = vpop.f32.mrb[0].mxu0
    %v803 = vadd.f32 %v733, %v802
    %v804 = vpop.f32.mrb[0].mxu0
    %805 = vdwg.mxu0
    %v806 = vmul.f32 %v803, 0.0078125
    %v807 = vmul.f32 %v806, %v806
    %v809 = vrot.slane %v807, 7
    %v811 = vsub.f32 %v806, %v809
    %v812 = vadd.f32 %v811, 1e-05
    %v813 = vrsqrt.pop %v812
    %v816 = vunpack.c.l.s4 1966171168
    %v817 = vunpack.c.0.s8 %v816
    %v818 = vlaneseq
    %v819 = vshrl.u32 %v818, 7
    %v820 = vsub.s32 %v817, %v819
    %v821 = vrot.slane %v813, %v820
    %v822 = vcombine.high %v821, %v821
    %v824 = vunpack.c.l.s4 1966171168
    %v825 = vunpack.c.0.s8 %v824
    %v826 = vlaneseq
    %v827 = vshrl.u32 %v826, 7
    %v828 = vsub.s32 %v825, %v827
    %v829 = vrot.slane %v822, %v828
    %v831 = vmul.f32 %v598, %v829
    %v832 = vmul.f32 %v806, %v831
    %v833 = vsub.f32 %v599, %v832
    %v835 = vlaneseq
    %v836 = vshrl.u32 %v835, 7
    %v837 = vsub.s32 0, %v836
    %v838 = vrot.slane %v833, %v837
    %v840 = vsel %vm661, %v831, %v838
    %vm841 = vcmask 64512
    %v843 = vsel %vm841, %v840, 0
    %845 = vmatprep.subr.mxu0 %v595
    %846 = vmatpush1.msra.mxu0 %v594
    %847 = vmatprep.subr.mxu0 0.0
    %848 = vmatpush1.msra.mxu0 0.0
    %849 = vmatprep.subr.mxu0 0.0
    %850 = vmatpush1.msra.mxu0 0.0
    %851 = vmatprep.subr.mxu0 0.0
    %852 = vmatpush1.msra.mxu0 0.0
    %853 = vmatprep.subr.mxu0 0.0
    %854 = vmatpush1.msra.mxu0 0.0
    %855 = vmatprep.subr.mxu0 0.0
    %856 = vmatpush1.msra.mxu0 0.0
    %857 = vmatprep.subr.mxu0 0.0
    %858 = vmatpush1.msra.mxu0 0.0
    %859 = vmatprep.subr.mxu0 0.0
    %860 = vmatpush1.msra.mxu0 0.0
    %861 = vmatprep.subr.mxu0 0.0
    %862 = vmatpush1.msra.mxu0 0.0
    %863 = vmatprep.subr.mxu0 0.0
    %864 = vmatpush1.msra.mxu0 0.0
    %865 = vmatprep.subr.mxu0 0.0
    %866 = vmatpush1.msra.mxu0 0.0
    %867 = vmatprep.subr.mxu0 0.0
    %868 = vmatpush1.msra.mxu0 0.0
    %869 = vmatprep.subr.mxu0 0.0
    %870 = vmatpush1.msra.mxu0 0.0
    %871 = vmatprep.subr.mxu0 0.0
    %872 = vmatpush1.msra.mxu0 0.0
    %873 = vmatprep.subr.mxu0 0.0
    %874 = vmatpush1.msra.mxu0 0.0
    %875 = vmatprep.subr.mxu0 0.0
    %876 = vmatpush1.msra.mxu0 0.0
    %877 = vmatprep.subr.mxu0 0.0
    %878 = vmatpush1.msra.mxu0 0.0
    %879 = vmatprep.subr.mxu0 0.0
    %880 = vmatpush1.msra.mxu0 0.0
    %881 = vmatprep.subr.mxu0 0.0
    %882 = vmatpush1.msra.mxu0 0.0
    %883 = vmatprep.subr.mxu0 0.0
    %884 = vmatpush1.msra.mxu0 0.0
    %885 = vmatprep.subr.mxu0 0.0
    %886 = vmatpush1.msra.mxu0 0.0
    %887 = vmatprep.subr.mxu0 0.0
    %888 = vmatpush1.msra.mxu0 0.0
    %889 = vmatprep.subr.mxu0 0.0
    %890 = vmatpush1.msra.mxu0 0.0
    %891 = vmatprep.subr.mxu0 0.0
    %892 = vmatpush1.msra.mxu0 0.0
    %893 = vmatprep.subr.mxu0 0.0
    %894 = vmatpush1.msra.mxu0 0.0
    %895 = vmatprep.subr.mxu0 0.0
    %896 = vmatpush1.msra.mxu0 0.0
    %897 = vmatprep.subr.mxu0 0.0
    %898 = vmatpush1.msra.mxu0 0.0
    %899 = vmatprep.subr.mxu0 0.0
    %900 = vmatpush1.msra.mxu0 0.0
    %901 = vmatprep.subr.mxu0 0.0
    %902 = vmatpush1.msra.mxu0 0.0
    %903 = vmatprep.subr.mxu0 0.0
    %904 = vmatpush1.msra.mxu0 0.0
    %905 = vmatprep.subr.mxu0 0.0
    %906 = vmatpush1.msra.mxu0 0.0
    %907 = vmatprep.subr.mxu0 0.0
    %908 = vmatpush1.msra.mxu0 0.0
    %909 = vmatprep.mubr.f32.mxu0 0.0
    %910 = vmatmul.mubr.f32.gmra.mrb[0].mxu0 %v843
    %v911 = vpop.f32.mrb[0].mxu0
    %v912 = vadd.f32 0.0, %v911
    %v913 = vpop.f32.mrb[0].mxu0
    %v914 = vadd.f32 0.0, %v913
    %915 = vdwg.mxu0
    %916 = vmatprep.subr.mxu0 %v597
    %917 = vmatpush1.msra.mxu0 %v596
    %918 = vmatprep.subr.mxu0 0.0
    %919 = vmatpush1.msra.mxu0 0.0
    %920 = vmatprep.subr.mxu0 0.0
    %921 = vmatpush1.msra.mxu0 0.0
    %922 = vmatprep.subr.mxu0 0.0
    %923 = vmatpush1.msra.mxu0 0.0
    %924 = vmatprep.subr.mxu0 0.0
    %925 = vmatpush1.msra.mxu0 0.0
    %926 = vmatprep.subr.mxu0 0.0
    %927 = vmatpush1.msra.mxu0 0.0
    %928 = vmatprep.subr.mxu0 0.0
    %929 = vmatpush1.msra.mxu0 0.0
    %930 = vmatprep.subr.mxu0 0.0
    %931 = vmatpush1.msra.mxu0 0.0
    %932 = vmatprep.subr.mxu0 0.0
    %933 = vmatpush1.msra.mxu0 0.0
    %934 = vmatprep.subr.mxu0 0.0
    %935 = vmatpush1.msra.mxu0 0.0
    %936 = vmatprep.subr.mxu0 0.0
    %937 = vmatpush1.msra.mxu0 0.0
    %938 = vmatprep.subr.mxu0 0.0
    %939 = vmatpush1.msra.mxu0 0.0
    %940 = vmatprep.subr.mxu0 0.0
    %941 = vmatpush1.msra.mxu0 0.0
    %942 = vmatprep.subr.mxu0 0.0
    %943 = vmatpush1.msra.mxu0 0.0
    %944 = vmatprep.subr.mxu0 0.0
    %945 = vmatpush1.msra.mxu0 0.0
    %946 = vmatprep.subr.mxu0 0.0
    %947 = vmatpush1.msra.mxu0 0.0
    %948 = vmatprep.subr.mxu0 0.0
    %949 = vmatpush1.msra.mxu0 0.0
    %950 = vmatprep.subr.mxu0 0.0
    %951 = vmatpush1.msra.mxu0 0.0
    %952 = vmatprep.subr.mxu0 0.0
    %953 = vmatpush1.msra.mxu0 0.0
    %954 = vmatprep.subr.mxu0 0.0
    %955 = vmatpush1.msra.mxu0 0.0
    %956 = vmatprep.subr.mxu0 0.0
    %957 = vmatpush1.msra.mxu0 0.0
    %958 = vmatprep.subr.mxu0 0.0
    %959 = vmatpush1.msra.mxu0 0.0
    %960 = vmatprep.subr.mxu0 0.0
    %961 = vmatpush1.msra.mxu0 0.0
    %962 = vmatprep.subr.mxu0 0.0
    %963 = vmatpush1.msra.mxu0 0.0
    %964 = vmatprep.subr.mxu0 0.0
    %965 = vmatpush1.msra.mxu0 0.0
    %966 = vmatprep.subr.mxu0 0.0
    %967 = vmatpush1.msra.mxu0 0.0
    %968 = vmatprep.subr.mxu0 0.0
    %969 = vmatpush1.msra.mxu0 0.0
    %970 = vmatprep.subr.mxu0 0.0
    %971 = vmatpush1.msra.mxu0 0.0
    %972 = vmatprep.subr.mxu0 0.0
    %973 = vmatpush1.msra.mxu0 0.0
    %974 = vmatprep.subr.mxu0 0.0
    %975 = vmatpush1.msra.mxu0 0.0
    %976 = vmatprep.subr.mxu0 0.0
    %977 = vmatpush1.msra.mxu0 0.0
    %978 = vmatprep.subr.mxu0 0.0
    %979 = vmatpush1.msra.mxu0 0.0
    %980 = vmatprep.mubr.f32.mxu0 0.0
    %981 = vmatmul.mubr.f32.gmra.mrb[0].mxu0 %v843
    %v982 = vpop.f32.mrb[0].mxu0
    %v983 = vadd.f32 0.0, %v982
    %v984 = vpop.f32.mrb[0].mxu0
    %v985 = vadd.f32 0.0, %v984
    %986 = vdwg.mxu0
    %v987 = vlaneseq
    %v988 = vshrl.u32 %v987, 7
    %v989 = vsub.s32 0, %v988
    %v990 = vrot.slane %v912, %v989
    %v991 = vlaneseq
    %v992 = vshrl.u32 %v991, 7
    %v993 = vsub.s32 0, %v992
    %v994 = vrot.slane %v914, %v993
    %v995 = vlaneseq
    %v996 = vshrl.u32 %v995, 7
    %v997 = vsub.s32 0, %v996
    %v998 = vrot.slane %v983, %v997
    %v999 = vlaneseq
    %v1000 = vshrl.u32 %v999, 7
    %v1001 = vsub.s32 0, %v1000
    %v1002 = vrot.slane %v985, %v1001
    %v1003 = vmul.f32 %v455, %v990
    %v1004 = vmul.f32 %v457, %v994
    %v1005 = vmul.f32 %v526, %v998
    %v1006 = vmul.f32 %v528, %v1002
    %v1007 = vlaneseq
    %v1008 = vshrl.u32 %v1007, 7
    %v1009 = vsub.s32 1, %v1008
    %v1010 = vrot.slane %v912, %v1009
    %v1011 = vlaneseq
    %v1012 = vshrl.u32 %v1011, 7
    %v1013 = vsub.s32 1, %v1012
    %v1014 = vrot.slane %v914, %v1013
    %v1015 = vlaneseq
    %v1016 = vshrl.u32 %v1015, 7
    %v1017 = vsub.s32 1, %v1016
    %v1018 = vrot.slane %v983, %v1017
    %v1019 = vlaneseq
    %v1020 = vshrl.u32 %v1019, 7
    %v1021 = vsub.s32 1, %v1020
    %v1022 = vrot.slane %v985, %v1021
    %v1023 = vadd.f32 %v1003, %v1010
    %v1024 = vadd.f32 %v1004, %v1014
    %v1025 = vadd.f32 %v1005, %v1018
    %v1026 = vadd.f32 %v1006, %v1022
    %v1027 = vmax.f32 %v1023, 0.0
    %v1028 = vmax.f32 %v1024, 0.0
    %v1029 = vmax.f32 %v1025, 0.0
    %v1030 = vmax.f32 %v1026, 0.0
    %v1031 = vld [vmem:[#allocation17] sm:$0xff]
    %v1032 = vld [vmem:[#allocation17 + $0x8] sm:$0xff]
    %v1033 = vld [vmem:[#allocation17 + $0x10] sm:$0xff]
    %v1034 = vld [vmem:[#allocation17 + $0x18] sm:$0xff]
    %v1035 = vld [vmem:[#allocation17 + $0x20] sm:$0xff]
    %v1036 = vld [vmem:[#allocation17 + $0x28] sm:$0xff]
    %v1037 = vld [vmem:[#allocation17 + $0x30] sm:$0xff]
    %v1038 = vld [vmem:[#allocation17 + $0x38] sm:$0xff]
    %v1039 = vld [vmem:[#allocation17 + $0x40] sm:$0xff]
    %v1040 = vld [vmem:[#allocation17 + $0x48] sm:$0xff]
    %v1041 = vld [vmem:[#allocation17 + $0x50] sm:$0xff]
    %v1042 = vld [vmem:[#allocation17 + $0x58] sm:$0xff]
    %v1043 = vld [vmem:[#allocation17 + $0x60] sm:$0xff]
    %v1044 = vld [vmem:[#allocation17 + $0x68] sm:$0xff]
    %v1045 = vld [vmem:[#allocation17 + $0x70] sm:$0xff]
    %v1046 = vld [vmem:[#allocation17 + $0x78] sm:$0xff]
    %v1047 = vld [vmem:[#allocation17 + $0x80] sm:$0xff]
    %v1048 = vld [vmem:[#allocation17 + $0x88] sm:$0xff]
    %v1049 = vld [vmem:[#allocation17 + $0x90] sm:$0xff]
    %v1050 = vld [vmem:[#allocation17 + $0x98] sm:$0xff]
    %v1051 = vld [vmem:[#allocation17 + $0xa0] sm:$0xff]
    %v1052 = vld [vmem:[#allocation17 + $0xa8] sm:$0xff]
    %v1053 = vld [vmem:[#allocation17 + $0xb0] sm:$0xff]
    %v1054 = vld [vmem:[#allocation17 + $0xb8] sm:$0xff]
    %v1055 = vld [vmem:[#allocation17 + $0xc0] sm:$0xff]
    %v1056 = vld [vmem:[#allocation17 + $0xc8] sm:$0xff]
    %v1057 = vld [vmem:[#allocation17 + $0xd0] sm:$0xff]
    %v1058 = vld [vmem:[#allocation17 + $0xd8] sm:$0xff]
    %v1059 = vld [vmem:[#allocation17 + $0xe0] sm:$0xff]
    %v1060 = vld [vmem:[#allocation17 + $0xe8] sm:$0xff]
    %v1061 = vld [vmem:[#allocation17 + $0xf0] sm:$0xff]
    %v1062 = vld [vmem:[#allocation17 + $0xf8] sm:$0xff]
    %v1063 = vld [vmem:[#allocation17 + $0x100] sm:$0xff]
    %v1064 = vld [vmem:[#allocation17 + $0x108] sm:$0xff]
    %v1065 = vld [vmem:[#allocation17 + $0x110] sm:$0xff]
    %v1066 = vld [vmem:[#allocation17 + $0x118] sm:$0xff]
    %v1067 = vld [vmem:[#allocation17 + $0x120] sm:$0xff]
    %v1068 = vld [vmem:[#allocation17 + $0x128] sm:$0xff]
    %v1069 = vld [vmem:[#allocation17 + $0x130] sm:$0xff]
    %v1070 = vld [vmem:[#allocation17 + $0x138] sm:$0xff]
    %v1071 = vld [vmem:[#allocation17 + $0x140] sm:$0xff]
    %v1072 = vld [vmem:[#allocation17 + $0x148] sm:$0xff]
    %v1073 = vld [vmem:[#allocation17 + $0x150] sm:$0xff]
    %v1074 = vld [vmem:[#allocation17 + $0x158] sm:$0xff]
    %v1075 = vld [vmem:[#allocation17 + $0x160] sm:$0xff]
    %v1076 = vld [vmem:[#allocation17 + $0x168] sm:$0xff]
    %v1077 = vld [vmem:[#allocation17 + $0x170] sm:$0xff]
    %v1078 = vld [vmem:[#allocation17 + $0x178] sm:$0xff]
    %v1079 = vld [vmem:[#allocation17 + $0x180] sm:$0xff]
    %v1080 = vld [vmem:[#allocation17 + $0x188] sm:$0xff]
    %v1081 = vld [vmem:[#allocation17 + $0x190] sm:$0xff]
    %v1082 = vld [vmem:[#allocation17 + $0x198] sm:$0xff]
    %v1083 = vld [vmem:[#allocation17 + $0x1a0] sm:$0xff]
    %v1084 = vld [vmem:[#allocation17 + $0x1a8] sm:$0xff]
    %v1085 = vld [vmem:[#allocation17 + $0x1b0] sm:$0xff]
    %v1086 = vld [vmem:[#allocation17 + $0x1b8] sm:$0xff]
    %v1087 = vld [vmem:[#allocation17 + $0x1c0] sm:$0xff]
    %v1088 = vld [vmem:[#allocation17 + $0x1c8] sm:$0xff]
    %v1089 = vld [vmem:[#allocation17 + $0x1d0] sm:$0xff]
    %v1090 = vld [vmem:[#allocation17 + $0x1d8] sm:$0xff]
    %v1091 = vld [vmem:[#allocation17 + $0x1e0] sm:$0xff]
    %v1092 = vld [vmem:[#allocation17 + $0x1e8] sm:$0xff]
    %v1093 = vld [vmem:[#allocation17 + $0x1f0] sm:$0xff]
    %v1094 = vld [vmem:[#allocation17 + $0x1f8] sm:$0xff]
    %v1095 = vld [vmem:[#allocation17 + $0x200] sm:$0xff]
    %v1096 = vld [vmem:[#allocation17 + $0x208] sm:$0xff]
    %v1097 = vld [vmem:[#allocation17 + $0x210] sm:$0xff]
    %v1098 = vld [vmem:[#allocation17 + $0x218] sm:$0xff]
    %v1099 = vld [vmem:[#allocation17 + $0x220] sm:$0xff]
    %v1100 = vld [vmem:[#allocation17 + $0x228] sm:$0xff]
    %v1101 = vld [vmem:[#allocation17 + $0x230] sm:$0xff]
    %v1102 = vld [vmem:[#allocation17 + $0x238] sm:$0xff]
    %v1103 = vld [vmem:[#allocation17 + $0x240] sm:$0xff]
    %v1104 = vld [vmem:[#allocation17 + $0x248] sm:$0xff]
    %v1105 = vld [vmem:[#allocation17 + $0x250] sm:$0xff]
    %v1106 = vld [vmem:[#allocation17 + $0x258] sm:$0xff]
    %v1107 = vld [vmem:[#allocation17 + $0x260] sm:$0xff]
    %v1108 = vld [vmem:[#allocation17 + $0x268] sm:$0xff]
    %v1109 = vld [vmem:[#allocation17 + $0x270] sm:$0xff]
    %v1110 = vld [vmem:[#allocation17 + $0x278] sm:$0xff]
    %v1111 = vld [vmem:[#allocation17 + $0x280] sm:$0xff]
    %v1112 = vld [vmem:[#allocation17 + $0x288] sm:$0xff]
    %v1113 = vld [vmem:[#allocation17 + $0x290] sm:$0xff]
    %v1114 = vld [vmem:[#allocation17 + $0x298] sm:$0xff]
    %v1115 = vld [vmem:[#allocation17 + $0x2a0] sm:$0xff]
    %v1116 = vld [vmem:[#allocation17 + $0x2a8] sm:$0xff]
    %v1117 = vld [vmem:[#allocation17 + $0x2b0] sm:$0xff]
    %v1118 = vld [vmem:[#allocation17 + $0x2b8] sm:$0xff]
    %v1119 = vld [vmem:[#allocation17 + $0x2c0] sm:$0xff]
    %v1120 = vld [vmem:[#allocation17 + $0x2c8] sm:$0xff]
    %v1121 = vld [vmem:[#allocation17 + $0x2d0] sm:$0xff]
    %v1122 = vld [vmem:[#allocation17 + $0x2d8] sm:$0xff]
    %v1123 = vld [vmem:[#allocation17 + $0x2e0] sm:$0xff]
    %v1124 = vld [vmem:[#allocation17 + $0x2e8] sm:$0xff]
    %v1125 = vld [vmem:[#allocation17 + $0x2f0] sm:$0xff]
    %v1126 = vld [vmem:[#allocation17 + $0x2f8] sm:$0xff]
    %v1127 = vld [vmem:[#allocation17 + $0x300] sm:$0xff]
    %v1128 = vld [vmem:[#allocation17 + $0x308] sm:$0xff]
    %v1129 = vld [vmem:[#allocation17 + $0x310] sm:$0xff]
    %v1130 = vld [vmem:[#allocation17 + $0x318] sm:$0xff]
    %v1131 = vld [vmem:[#allocation17 + $0x320] sm:$0xff]
    %v1132 = vld [vmem:[#allocation17 + $0x328] sm:$0xff]
    %v1133 = vld [vmem:[#allocation17 + $0x330] sm:$0xff]
    %v1134 = vld [vmem:[#allocation17 + $0x338] sm:$0xff]
    %v1135 = vld [vmem:[#allocation17 + $0x340] sm:$0xff]
    %v1136 = vld [vmem:[#allocation17 + $0x348] sm:$0xff]
    %v1137 = vld [vmem:[#allocation17 + $0x350] sm:$0xff]
    %v1138 = vld [vmem:[#allocation17 + $0x358] sm:$0xff]
    %v1139 = vld [vmem:[#allocation17 + $0x360] sm:$0xff]
    %v1140 = vld [vmem:[#allocation17 + $0x368] sm:$0xff]
    %v1141 = vld [vmem:[#allocation17 + $0x370] sm:$0xff]
    %v1142 = vld [vmem:[#allocation17 + $0x378] sm:$0xff]
    %v1143 = vld [vmem:[#allocation17 + $0x380] sm:$0xff]
    %v1144 = vld [vmem:[#allocation17 + $0x388] sm:$0xff]
    %v1145 = vld [vmem:[#allocation17 + $0x390] sm:$0xff]
    %v1146 = vld [vmem:[#allocation17 + $0x398] sm:$0xff]
    %v1147 = vld [vmem:[#allocation17 + $0x3a0] sm:$0xff]
    %v1148 = vld [vmem:[#allocation17 + $0x3a8] sm:$0xff]
    %v1149 = vld [vmem:[#allocation17 + $0x3b0] sm:$0xff]
    %v1150 = vld [vmem:[#allocation17 + $0x3b8] sm:$0xff]
    %v1151 = vld [vmem:[#allocation17 + $0x3c0] sm:$0xff]
    %v1152 = vld [vmem:[#allocation17 + $0x3c8] sm:$0xff]
    %v1153 = vld [vmem:[#allocation17 + $0x3d0] sm:$0xff]
    %v1154 = vld [vmem:[#allocation17 + $0x3d8] sm:$0xff]
    %v1155 = vld [vmem:[#allocation17 + $0x3e0] sm:$0xff]
    %v1156 = vld [vmem:[#allocation17 + $0x3e8] sm:$0xff]
    %v1157 = vld [vmem:[#allocation17 + $0x3f0] sm:$0xff]
    %v1158 = vld [vmem:[#allocation17 + $0x3f8] sm:$0xff]
    %v1159 = vld [vmem:[#allocation17 + $0x400] sm:$0xff]
    %v1160 = vld [vmem:[#allocation17 + $0x408] sm:$0xff]
    %v1161 = vld [vmem:[#allocation17 + $0x410] sm:$0xff]
    %v1162 = vld [vmem:[#allocation17 + $0x418] sm:$0xff]
    %v1163 = vld [vmem:[#allocation17 + $0x420] sm:$0xff]
    %v1164 = vld [vmem:[#allocation17 + $0x428] sm:$0xff]
    %v1165 = vld [vmem:[#allocation17 + $0x430] sm:$0xff]
    %v1166 = vld [vmem:[#allocation17 + $0x438] sm:$0xff]
    %v1167 = vld [vmem:[#allocation17 + $0x440] sm:$0xff]
    %v1168 = vld [vmem:[#allocation17 + $0x448] sm:$0xff]
    %v1169 = vld [vmem:[#allocation17 + $0x450] sm:$0xff]
    %v1170 = vld [vmem:[#allocation17 + $0x458] sm:$0xff]
    %v1171 = vld [vmem:[#allocation17 + $0x460] sm:$0xff]
    %v1172 = vld [vmem:[#allocation17 + $0x468] sm:$0xff]
    %v1173 = vld [vmem:[#allocation17 + $0x470] sm:$0xff]
    %v1174 = vld [vmem:[#allocation17 + $0x478] sm:$0xff]
    %v1175 = vld [vmem:[#allocation17 + $0x480] sm:$0xff]
    %v1176 = vld [vmem:[#allocation17 + $0x488] sm:$0xff]
    %v1177 = vld [vmem:[#allocation17 + $0x490] sm:$0xff]
    %v1178 = vld [vmem:[#allocation17 + $0x498] sm:$0xff]
    %v1179 = vld [vmem:[#allocation17 + $0x4a0] sm:$0xff]
    %v1180 = vld [vmem:[#allocation17 + $0x4a8] sm:$0xff]
    %v1181 = vld [vmem:[#allocation17 + $0x4b0] sm:$0xff]
    %v1182 = vld [vmem:[#allocation17 + $0x4b8] sm:$0xff]
    %v1183 = vld [vmem:[#allocation17 + $0x4c0] sm:$0xff]
    %v1184 = vld [vmem:[#allocation17 + $0x4c8] sm:$0xff]
    %v1185 = vld [vmem:[#allocation17 + $0x4d0] sm:$0xff]
    %v1186 = vld [vmem:[#allocation17 + $0x4d8] sm:$0xff]
    %v1187 = vld [vmem:[#allocation17 + $0x4e0] sm:$0xff]
    %v1188 = vld [vmem:[#allocation17 + $0x4e8] sm:$0xff]
    %v1189 = vld [vmem:[#allocation17 + $0x4f0] sm:$0xff]
    %v1190 = vld [vmem:[#allocation17 + $0x4f8] sm:$0xff]
    %v1191 = vld [vmem:[#allocation17 + $0x500] sm:$0xff]
    %v1192 = vld [vmem:[#allocation17 + $0x508] sm:$0xff]
    %v1193 = vld [vmem:[#allocation17 + $0x510] sm:$0xff]
    %v1194 = vld [vmem:[#allocation17 + $0x518] sm:$0xff]
    %v1195 = vld [vmem:[#allocation17 + $0x520] sm:$0xff]
    %v1196 = vld [vmem:[#allocation17 + $0x528] sm:$0xff]
    %v1197 = vld [vmem:[#allocation17 + $0x530] sm:$0xff]
    %v1198 = vld [vmem:[#allocation17 + $0x538] sm:$0xff]
    %v1199 = vld [vmem:[#allocation17 + $0x540] sm:$0xff]
    %v1200 = vld [vmem:[#allocation17 + $0x548] sm:$0xff]
    %v1201 = vld [vmem:[#allocation17 + $0x550] sm:$0xff]
    %v1202 = vld [vmem:[#allocation17 + $0x558] sm:$0xff]
    %v1203 = vld [vmem:[#allocation17 + $0x560] sm:$0xff]
    %v1204 = vld [vmem:[#allocation17 + $0x568] sm:$0xff]
    %v1205 = vld [vmem:[#allocation17 + $0x570] sm:$0xff]
    %v1206 = vld [vmem:[#allocation17 + $0x578] sm:$0xff]
    %v1207 = vld [vmem:[#allocation17 + $0x580] sm:$0xff]
    %v1208 = vld [vmem:[#allocation17 + $0x588] sm:$0xff]
    %v1209 = vld [vmem:[#allocation17 + $0x590] sm:$0xff]
    %v1210 = vld [vmem:[#allocation17 + $0x598] sm:$0xff]
    %v1211 = vld [vmem:[#allocation17 + $0x5a0] sm:$0xff]
    %v1212 = vld [vmem:[#allocation17 + $0x5a8] sm:$0xff]
    %v1213 = vld [vmem:[#allocation17 + $0x5b0] sm:$0xff]
    %v1214 = vld [vmem:[#allocation17 + $0x5b8] sm:$0xff]
    %v1215 = vld [vmem:[#allocation17 + $0x5c0] sm:$0xff]
    %v1216 = vld [vmem:[#allocation17 + $0x5c8] sm:$0xff]
    %v1217 = vld [vmem:[#allocation17 + $0x5d0] sm:$0xff]
    %v1218 = vld [vmem:[#allocation17 + $0x5d8] sm:$0xff]
    %v1219 = vld [vmem:[#allocation17 + $0x5e0] sm:$0xff]
    %v1220 = vld [vmem:[#allocation17 + $0x5e8] sm:$0xff]
    %v1221 = vld [vmem:[#allocation17 + $0x5f0] sm:$0xff]
    %v1222 = vld [vmem:[#allocation17 + $0x5f8] sm:$0xff]
    %v1223 = vld [vmem:[#allocation17 + $0x600] sm:$0xff]
    %v1224 = vld [vmem:[#allocation17 + $0x608] sm:$0xff]
    %v1225 = vld [vmem:[#allocation17 + $0x610] sm:$0xff]
    %v1226 = vld [vmem:[#allocation17 + $0x618] sm:$0xff]
    %v1227 = vld [vmem:[#allocation17 + $0x620] sm:$0xff]
    %v1228 = vld [vmem:[#allocation17 + $0x628] sm:$0xff]
    %v1229 = vld [vmem:[#allocation17 + $0x630] sm:$0xff]
    %v1230 = vld [vmem:[#allocation17 + $0x638] sm:$0xff]
    %v1231 = vld [vmem:[#allocation17 + $0x640] sm:$0xff]
    %v1232 = vld [vmem:[#allocation17 + $0x648] sm:$0xff]
    %v1233 = vld [vmem:[#allocation17 + $0x650] sm:$0xff]
    %v1234 = vld [vmem:[#allocation17 + $0x658] sm:$0xff]
    %v1235 = vld [vmem:[#allocation17 + $0x660] sm:$0xff]
    %v1236 = vld [vmem:[#allocation17 + $0x668] sm:$0xff]
    %v1237 = vld [vmem:[#allocation17 + $0x670] sm:$0xff]
    %v1238 = vld [vmem:[#allocation17 + $0x678] sm:$0xff]
    %v1239 = vld [vmem:[#allocation17 + $0x680] sm:$0xff]
    %v1240 = vld [vmem:[#allocation17 + $0x688] sm:$0xff]
    %v1241 = vld [vmem:[#allocation17 + $0x690] sm:$0xff]
    %v1242 = vld [vmem:[#allocation17 + $0x698] sm:$0xff]
    %v1243 = vld [vmem:[#allocation17 + $0x6a0] sm:$0xff]
    %v1244 = vld [vmem:[#allocation17 + $0x6a8] sm:$0xff]
    %v1245 = vld [vmem:[#allocation17 + $0x6b0] sm:$0xff]
    %v1246 = vld [vmem:[#allocation17 + $0x6b8] sm:$0xff]
    %v1247 = vld [vmem:[#allocation17 + $0x6c0] sm:$0xff]
    %v1248 = vld [vmem:[#allocation17 + $0x6c8] sm:$0xff]
    %v1249 = vld [vmem:[#allocation17 + $0x6d0] sm:$0xff]
    %v1250 = vld [vmem:[#allocation17 + $0x6d8] sm:$0xff]
    %v1251 = vld [vmem:[#allocation17 + $0x6e0] sm:$0xff]
    %v1252 = vld [vmem:[#allocation17 + $0x6e8] sm:$0xff]
    %v1253 = vld [vmem:[#allocation17 + $0x6f0] sm:$0xff]
    %v1254 = vld [vmem:[#allocation17 + $0x6f8] sm:$0xff]
    %v1255 = vld [vmem:[#allocation17 + $0x700] sm:$0xff]
    %v1256 = vld [vmem:[#allocation17 + $0x708] sm:$0xff]
    %v1257 = vld [vmem:[#allocation17 + $0x710] sm:$0xff]
    %v1258 = vld [vmem:[#allocation17 + $0x718] sm:$0xff]
    %v1259 = vld [vmem:[#allocation17 + $0x720] sm:$0xff]
    %v1260 = vld [vmem:[#allocation17 + $0x728] sm:$0xff]
    %v1261 = vld [vmem:[#allocation17 + $0x730] sm:$0xff]
    %v1262 = vld [vmem:[#allocation17 + $0x738] sm:$0xff]
    %v1263 = vld [vmem:[#allocation17 + $0x740] sm:$0xff]
    %v1264 = vld [vmem:[#allocation17 + $0x748] sm:$0xff]
    %v1265 = vld [vmem:[#allocation17 + $0x750] sm:$0xff]
    %v1266 = vld [vmem:[#allocation17 + $0x758] sm:$0xff]
    %v1267 = vld [vmem:[#allocation17 + $0x760] sm:$0xff]
    %v1268 = vld [vmem:[#allocation17 + $0x768] sm:$0xff]
    %v1269 = vld [vmem:[#allocation17 + $0x770] sm:$0xff]
    %v1270 = vld [vmem:[#allocation17 + $0x778] sm:$0xff]
    %v1271 = vld [vmem:[#allocation17 + $0x780] sm:$0xff]
    %v1272 = vld [vmem:[#allocation17 + $0x788] sm:$0xff]
    %v1273 = vld [vmem:[#allocation17 + $0x790] sm:$0xff]
    %v1274 = vld [vmem:[#allocation17 + $0x798] sm:$0xff]
    %v1275 = vld [vmem:[#allocation17 + $0x7a0] sm:$0xff]
    %v1276 = vld [vmem:[#allocation17 + $0x7a8] sm:$0xff]
    %v1277 = vld [vmem:[#allocation17 + $0x7b0] sm:$0xff]
    %v1278 = vld [vmem:[#allocation17 + $0x7b8] sm:$0xff]
    %v1279 = vld [vmem:[#allocation17 + $0x7c0] sm:$0xff]
    %v1280 = vld [vmem:[#allocation17 + $0x7c8] sm:$0xff]
    %v1281 = vld [vmem:[#allocation17 + $0x7d0] sm:$0xff]
    %v1282 = vld [vmem:[#allocation17 + $0x7d8] sm:$0xff]
    %v1283 = vld [vmem:[#allocation17 + $0x7e0] sm:$0xff]
    %v1284 = vld [vmem:[#allocation17 + $0x7e8] sm:$0xff]
    %v1285 = vld [vmem:[#allocation17 + $0x7f0] sm:$0xff]
    %v1286 = vld [vmem:[#allocation17 + $0x7f8] sm:$0xff]
    %v1287 = vld [vmem:[#allocation17 + $0x800] sm:$0xff]
    %v1288 = vld [vmem:[#allocation17 + $0x808] sm:$0xff]
    %v1289 = vld [vmem:[#allocation17 + $0x810] sm:$0xff]
    %v1290 = vld [vmem:[#allocation17 + $0x818] sm:$0xff]
    %v1291 = vld [vmem:[#allocation17 + $0x820] sm:$0xff]
    %v1292 = vld [vmem:[#allocation17 + $0x828] sm:$0xff]
    %v1293 = vld [vmem:[#allocation17 + $0x830] sm:$0xff]
    %v1294 = vld [vmem:[#allocation17 + $0x838] sm:$0xff]
    %v1295 = vld [vmem:[#allocation17 + $0x840] sm:$0xff]
    %v1296 = vld [vmem:[#allocation17 + $0x848] sm:$0xff]
    %v1297 = vld [vmem:[#allocation17 + $0x850] sm:$0xff]
    %v1298 = vld [vmem:[#allocation17 + $0x858] sm:$0xff]
    %v1299 = vld [vmem:[#allocation17 + $0x860] sm:$0xff]
    %v1300 = vld [vmem:[#allocation17 + $0x868] sm:$0xff]
    %v1301 = vld [vmem:[#allocation17 + $0x870] sm:$0xff]
    %v1302 = vld [vmem:[#allocation17 + $0x878] sm:$0xff]
    %v1303 = vld [vmem:[#allocation17 + $0x880] sm:$0xff]
    %v1304 = vld [vmem:[#allocation17 + $0x888] sm:$0xff]
    %v1305 = vld [vmem:[#allocation17 + $0x890] sm:$0xff]
    %v1306 = vld [vmem:[#allocation17 + $0x898] sm:$0xff]
    %v1307 = vld [vmem:[#allocation17 + $0x8a0] sm:$0xff]
    %v1308 = vld [vmem:[#allocation17 + $0x8a8] sm:$0xff]
    %v1309 = vld [vmem:[#allocation17 + $0x8b0] sm:$0xff]
    %v1310 = vld [vmem:[#allocation17 + $0x8b8] sm:$0xff]
    %v1311 = vld [vmem:[#allocation17 + $0x8c0] sm:$0xff]
    %v1312 = vld [vmem:[#allocation17 + $0x8c8] sm:$0xff]
    %v1313 = vld [vmem:[#allocation17 + $0x8d0] sm:$0xff]
    %v1314 = vld [vmem:[#allocation17 + $0x8d8] sm:$0xff]
    %v1315 = vld [vmem:[#allocation17 + $0x8e0] sm:$0xff]
    %v1316 = vld [vmem:[#allocation17 + $0x8e8] sm:$0xff]
    %v1317 = vld [vmem:[#allocation17 + $0x8f0] sm:$0xff]
    %v1318 = vld [vmem:[#allocation17 + $0x8f8] sm:$0xff]
    %v1319 = vld [vmem:[#allocation17 + $0x900] sm:$0xff]
    %v1320 = vld [vmem:[#allocation17 + $0x908] sm:$0xff]
    %v1321 = vld [vmem:[#allocation17 + $0x910] sm:$0xff]
    %v1322 = vld [vmem:[#allocation17 + $0x918] sm:$0xff]
    %v1323 = vld [vmem:[#allocation17 + $0x920] sm:$0xff]
    %v1324 = vld [vmem:[#allocation17 + $0x928] sm:$0xff]
    %v1325 = vld [vmem:[#allocation17 + $0x930] sm:$0xff]
    %v1326 = vld [vmem:[#allocation17 + $0x938] sm:$0xff]
    %v1327 = vld [vmem:[#allocation17 + $0x940] sm:$0xff]
    %v1328 = vld [vmem:[#allocation17 + $0x948] sm:$0xff]
    %v1329 = vld [vmem:[#allocation17 + $0x950] sm:$0xff]
    %v1330 = vld [vmem:[#allocation17 + $0x958] sm:$0xff]
    %v1331 = vld [vmem:[#allocation17 + $0x960] sm:$0xff]
    %v1332 = vld [vmem:[#allocation17 + $0x968] sm:$0xff]
    %v1333 = vld [vmem:[#allocation17 + $0x970] sm:$0xff]
    %v1334 = vld [vmem:[#allocation17 + $0x978] sm:$0xff]
    %v1335 = vld [vmem:[#allocation17 + $0x980] sm:$0xff]
    %v1336 = vld [vmem:[#allocation17 + $0x988] sm:$0xff]
    %v1337 = vld [vmem:[#allocation17 + $0x990] sm:$0xff]
    %v1338 = vld [vmem:[#allocation17 + $0x998] sm:$0xff]
    %v1339 = vld [vmem:[#allocation17 + $0x9a0] sm:$0xff]
    %v1340 = vld [vmem:[#allocation17 + $0x9a8] sm:$0xff]
    %v1341 = vld [vmem:[#allocation17 + $0x9b0] sm:$0xff]
    %v1342 = vld [vmem:[#allocation17 + $0x9b8] sm:$0xff]
    %v1343 = vld [vmem:[#allocation17 + $0x9c0] sm:$0xff]
    %v1344 = vld [vmem:[#allocation17 + $0x9c8] sm:$0xff]
    %v1345 = vld [vmem:[#allocation17 + $0x9d0] sm:$0xff]
    %v1346 = vld [vmem:[#allocation17 + $0x9d8] sm:$0xff]
    %v1347 = vld [vmem:[#allocation17 + $0x9e0] sm:$0xff]
    %v1348 = vld [vmem:[#allocation17 + $0x9e8] sm:$0xff]
    %v1349 = vld [vmem:[#allocation17 + $0x9f0] sm:$0xff]
    %v1350 = vld [vmem:[#allocation17 + $0x9f8] sm:$0xff]
    %v1351 = vld [vmem:[#allocation17 + $0xa00] sm:$0xff]
    %v1352 = vld [vmem:[#allocation17 + $0xa08] sm:$0xff]
    %v1353 = vld [vmem:[#allocation17 + $0xa10] sm:$0xff]
    %v1354 = vld [vmem:[#allocation17 + $0xa18] sm:$0xff]
    %v1355 = vld [vmem:[#allocation17 + $0xa20] sm:$0xff]
    %v1356 = vld [vmem:[#allocation17 + $0xa28] sm:$0xff]
    %v1357 = vld [vmem:[#allocation17 + $0xa30] sm:$0xff]
    %v1358 = vld [vmem:[#allocation17 + $0xa38] sm:$0xff]
    %v1359 = vld [vmem:[#allocation17 + $0xa40] sm:$0xff]
    %v1360 = vld [vmem:[#allocation17 + $0xa48] sm:$0xff]
    %v1361 = vld [vmem:[#allocation17 + $0xa50] sm:$0xff]
    %v1362 = vld [vmem:[#allocation17 + $0xa58] sm:$0xff]
    %v1363 = vld [vmem:[#allocation17 + $0xa60] sm:$0xff]
    %v1364 = vld [vmem:[#allocation17 + $0xa68] sm:$0xff]
    %v1365 = vld [vmem:[#allocation17 + $0xa70] sm:$0xff]
    %v1366 = vld [vmem:[#allocation17 + $0xa78] sm:$0xff]
    %v1367 = vld [vmem:[#allocation17 + $0xa80] sm:$0xff]
    %v1368 = vld [vmem:[#allocation17 + $0xa88] sm:$0xff]
    %v1369 = vld [vmem:[#allocation17 + $0xa90] sm:$0xff]
    %v1370 = vld [vmem:[#allocation17 + $0xa98] sm:$0xff]
    %v1371 = vld [vmem:[#allocation17 + $0xaa0] sm:$0xff]
    %v1372 = vld [vmem:[#allocation17 + $0xaa8] sm:$0xff]
    %v1373 = vld [vmem:[#allocation17 + $0xab0] sm:$0xff]
    %v1374 = vld [vmem:[#allocation17 + $0xab8] sm:$0xff]
    %v1375 = vld [vmem:[#allocation17 + $0xac0] sm:$0xff]
    %v1376 = vld [vmem:[#allocation17 + $0xac8] sm:$0xff]
    %v1377 = vld [vmem:[#allocation17 + $0xad0] sm:$0xff]
    %v1378 = vld [vmem:[#allocation17 + $0xad8] sm:$0xff]
    %v1379 = vld [vmem:[#allocation17 + $0xae0] sm:$0xff]
    %v1380 = vld [vmem:[#allocation17 + $0xae8] sm:$0xff]
    %v1381 = vld [vmem:[#allocation17 + $0xaf0] sm:$0xff]
    %v1382 = vld [vmem:[#allocation17 + $0xaf8] sm:$0xff]
    %v1383 = vld [vmem:[#allocation17 + $0xb00] sm:$0xff]
    %v1384 = vld [vmem:[#allocation17 + $0xb08] sm:$0xff]
    %v1385 = vld [vmem:[#allocation17 + $0xb10] sm:$0xff]
    %v1386 = vld [vmem:[#allocation17 + $0xb18] sm:$0xff]
    %v1387 = vld [vmem:[#allocation17 + $0xb20] sm:$0xff]
    %v1388 = vld [vmem:[#allocation17 + $0xb28] sm:$0xff]
    %v1389 = vld [vmem:[#allocation17 + $0xb30] sm:$0xff]
    %v1390 = vld [vmem:[#allocation17 + $0xb38] sm:$0xff]
    %v1391 = vld [vmem:[#allocation17 + $0xb40] sm:$0xff]
    %v1392 = vld [vmem:[#allocation17 + $0xb48] sm:$0xff]
    %v1393 = vld [vmem:[#allocation17 + $0xb50] sm:$0xff]
    %v1394 = vld [vmem:[#allocation17 + $0xb58] sm:$0xff]
    %v1395 = vld [vmem:[#allocation17 + $0xb60] sm:$0xff]
    %v1396 = vld [vmem:[#allocation17 + $0xb68] sm:$0xff]
    %v1397 = vld [vmem:[#allocation17 + $0xb70] sm:$0xff]
    %v1398 = vld [vmem:[#allocation17 + $0xb78] sm:$0xff]
    %v1399 = vld [vmem:[#allocation17 + $0xb80] sm:$0xff]
    %v1400 = vld [vmem:[#allocation17 + $0xb88] sm:$0xff]
    %v1401 = vld [vmem:[#allocation17 + $0xb90] sm:$0xff]
    %v1402 = vld [vmem:[#allocation17 + $0xb98] sm:$0xff]
    %v1403 = vld [vmem:[#allocation17 + $0xba0] sm:$0xff]
    %v1404 = vld [vmem:[#allocation17 + $0xba8] sm:$0xff]
    %v1405 = vld [vmem:[#allocation17 + $0xbb0] sm:$0xff]
    %v1406 = vld [vmem:[#allocation17 + $0xbb8] sm:$0xff]
    %v1407 = vld [vmem:[#allocation17 + $0xbc0] sm:$0xff]
    %v1408 = vld [vmem:[#allocation17 + $0xbc8] sm:$0xff]
    %v1409 = vld [vmem:[#allocation17 + $0xbd0] sm:$0xff]
    %v1410 = vld [vmem:[#allocation17 + $0xbd8] sm:$0xff]
    %v1411 = vld [vmem:[#allocation17 + $0xbe0] sm:$0xff]
    %v1412 = vld [vmem:[#allocation17 + $0xbe8] sm:$0xff]
    %v1413 = vld [vmem:[#allocation17 + $0xbf0] sm:$0xff]
    %v1414 = vld [vmem:[#allocation17 + $0xbf8] sm:$0xff]
    %v1415 = vld [vmem:[#allocation17 + $0xc00] sm:$0xff]
    %v1416 = vld [vmem:[#allocation17 + $0xc08] sm:$0xff]
    %v1417 = vld [vmem:[#allocation17 + $0xc10] sm:$0xff]
    %v1418 = vld [vmem:[#allocation17 + $0xc18] sm:$0xff]
    %v1419 = vld [vmem:[#allocation17 + $0xc20] sm:$0xff]
    %v1420 = vld [vmem:[#allocation17 + $0xc28] sm:$0xff]
    %v1421 = vld [vmem:[#allocation17 + $0xc30] sm:$0xff]
    %v1422 = vld [vmem:[#allocation17 + $0xc38] sm:$0xff]
    %v1423 = vld [vmem:[#allocation17 + $0xc40] sm:$0xff]
    %v1424 = vld [vmem:[#allocation17 + $0xc48] sm:$0xff]
    %v1425 = vld [vmem:[#allocation17 + $0xc50] sm:$0xff]
    %v1426 = vld [vmem:[#allocation17 + $0xc58] sm:$0xff]
    %v1427 = vld [vmem:[#allocation17 + $0xc60] sm:$0xff]
    %v1428 = vld [vmem:[#allocation17 + $0xc68] sm:$0xff]
    %v1429 = vld [vmem:[#allocation17 + $0xc70] sm:$0xff]
    %v1430 = vld [vmem:[#allocation17 + $0xc78] sm:$0xff]
    %v1431 = vld [vmem:[#allocation17 + $0xc80] sm:$0xff]
    %v1432 = vld [vmem:[#allocation17 + $0xc88] sm:$0xff]
    %v1433 = vld [vmem:[#allocation17 + $0xc90] sm:$0xff]
    %v1434 = vld [vmem:[#allocation17 + $0xc98] sm:$0xff]
    %v1435 = vld [vmem:[#allocation17 + $0xca0] sm:$0xff]
    %v1436 = vld [vmem:[#allocation17 + $0xca8] sm:$0xff]
    %v1437 = vld [vmem:[#allocation17 + $0xcb0] sm:$0xff]
    %v1438 = vld [vmem:[#allocation17 + $0xcb8] sm:$0xff]
    %v1439 = vld [vmem:[#allocation17 + $0xcc0] sm:$0xff]
    %v1440 = vld [vmem:[#allocation17 + $0xcc8] sm:$0xff]
    %v1441 = vld [vmem:[#allocation17 + $0xcd0] sm:$0xff]
    %v1442 = vld [vmem:[#allocation17 + $0xcd8] sm:$0xff]
    %v1443 = vld [vmem:[#allocation17 + $0xce0] sm:$0xff]
    %v1444 = vld [vmem:[#allocation17 + $0xce8] sm:$0xff]
    %v1445 = vld [vmem:[#allocation17 + $0xcf0] sm:$0xff]
    %v1446 = vld [vmem:[#allocation17 + $0xcf8] sm:$0xff]
    %v1447 = vld [vmem:[#allocation17 + $0xd00] sm:$0xff]
    %v1448 = vld [vmem:[#allocation17 + $0xd08] sm:$0xff]
    %v1449 = vld [vmem:[#allocation17 + $0xd10] sm:$0xff]
    %v1450 = vld [vmem:[#allocation17 + $0xd18] sm:$0xff]
    %v1451 = vld [vmem:[#allocation17 + $0xd20] sm:$0xff]
    %v1452 = vld [vmem:[#allocation17 + $0xd28] sm:$0xff]
    %v1453 = vld [vmem:[#allocation17 + $0xd30] sm:$0xff]
    %v1454 = vld [vmem:[#allocation17 + $0xd38] sm:$0xff]
    %v1455 = vld [vmem:[#allocation17 + $0xd40] sm:$0xff]
    %v1456 = vld [vmem:[#allocation17 + $0xd48] sm:$0xff]
    %v1457 = vld [vmem:[#allocation17 + $0xd50] sm:$0xff]
    %v1458 = vld [vmem:[#allocation17 + $0xd58] sm:$0xff]
    %v1459 = vld [vmem:[#allocation17 + $0xd60] sm:$0xff]
    %v1460 = vld [vmem:[#allocation17 + $0xd68] sm:$0xff]
    %v1461 = vld [vmem:[#allocation17 + $0xd70] sm:$0xff]
    %v1462 = vld [vmem:[#allocation17 + $0xd78] sm:$0xff]
    %v1463 = vld [vmem:[#allocation17 + $0xd80] sm:$0xff]
    %v1464 = vld [vmem:[#allocation17 + $0xd88] sm:$0xff]
    %v1465 = vld [vmem:[#allocation17 + $0xd90] sm:$0xff]
    %v1466 = vld [vmem:[#allocation17 + $0xd98] sm:$0xff]
    %v1467 = vld [vmem:[#allocation17 + $0xda0] sm:$0xff]
    %v1468 = vld [vmem:[#allocation17 + $0xda8] sm:$0xff]
    %v1469 = vld [vmem:[#allocation17 + $0xdb0] sm:$0xff]
    %v1470 = vld [vmem:[#allocation17 + $0xdb8] sm:$0xff]
    %v1471 = vld [vmem:[#allocation17 + $0xdc0] sm:$0xff]
    %v1472 = vld [vmem:[#allocation17 + $0xdc8] sm:$0xff]
    %v1473 = vld [vmem:[#allocation17 + $0xdd0] sm:$0xff]
    %v1474 = vld [vmem:[#allocation17 + $0xdd8] sm:$0xff]
    %v1475 = vld [vmem:[#allocation17 + $0xde0] sm:$0xff]
    %v1476 = vld [vmem:[#allocation17 + $0xde8] sm:$0xff]
    %v1477 = vld [vmem:[#allocation17 + $0xdf0] sm:$0xff]
    %v1478 = vld [vmem:[#allocation17 + $0xdf8] sm:$0xff]
    %v1479 = vld [vmem:[#allocation17 + $0xe00] sm:$0xff]
    %v1480 = vld [vmem:[#allocation17 + $0xe08] sm:$0xff]
    %v1481 = vld [vmem:[#allocation17 + $0xe10] sm:$0xff]
    %v1482 = vld [vmem:[#allocation17 + $0xe18] sm:$0xff]
    %v1483 = vld [vmem:[#allocation17 + $0xe20] sm:$0xff]
    %v1484 = vld [vmem:[#allocation17 + $0xe28] sm:$0xff]
    %v1485 = vld [vmem:[#allocation17 + $0xe30] sm:$0xff]
    %v1486 = vld [vmem:[#allocation17 + $0xe38] sm:$0xff]
    %v1487 = vld [vmem:[#allocation17 + $0xe40] sm:$0xff]
    %v1488 = vld [vmem:[#allocation17 + $0xe48] sm:$0xff]
    %v1489 = vld [vmem:[#allocation17 + $0xe50] sm:$0xff]
    %v1490 = vld [vmem:[#allocation17 + $0xe58] sm:$0xff]
    %v1491 = vld [vmem:[#allocation17 + $0xe60] sm:$0xff]
    %v1492 = vld [vmem:[#allocation17 + $0xe68] sm:$0xff]
    %v1493 = vld [vmem:[#allocation17 + $0xe70] sm:$0xff]
    %v1494 = vld [vmem:[#allocation17 + $0xe78] sm:$0xff]
    %v1495 = vld [vmem:[#allocation17 + $0xe80] sm:$0xff]
    %v1496 = vld [vmem:[#allocation17 + $0xe88] sm:$0xff]
    %v1497 = vld [vmem:[#allocation17 + $0xe90] sm:$0xff]
    %v1498 = vld [vmem:[#allocation17 + $0xe98] sm:$0xff]
    %v1499 = vld [vmem:[#allocation17 + $0xea0] sm:$0xff]
    %v1500 = vld [vmem:[#allocation17 + $0xea8] sm:$0xff]
    %v1501 = vld [vmem:[#allocation17 + $0xeb0] sm:$0xff]
    %v1502 = vld [vmem:[#allocation17 + $0xeb8] sm:$0xff]
    %v1503 = vld [vmem:[#allocation17 + $0xec0] sm:$0xff]
    %v1504 = vld [vmem:[#allocation17 + $0xec8] sm:$0xff]
    %v1505 = vld [vmem:[#allocation17 + $0xed0] sm:$0xff]
    %v1506 = vld [vmem:[#allocation17 + $0xed8] sm:$0xff]
    %v1507 = vld [vmem:[#allocation17 + $0xee0] sm:$0xff]
    %v1508 = vld [vmem:[#allocation17 + $0xee8] sm:$0xff]
    %v1509 = vld [vmem:[#allocation17 + $0xef0] sm:$0xff]
    %v1510 = vld [vmem:[#allocation17 + $0xef8] sm:$0xff]
    %v1511 = vld [vmem:[#allocation17 + $0xf00] sm:$0xff]
    %v1512 = vld [vmem:[#allocation17 + $0xf08] sm:$0xff]
    %v1513 = vld [vmem:[#allocation17 + $0xf10] sm:$0xff]
    %v1514 = vld [vmem:[#allocation17 + $0xf18] sm:$0xff]
    %v1515 = vld [vmem:[#allocation17 + $0xf20] sm:$0xff]
    %v1516 = vld [vmem:[#allocation17 + $0xf28] sm:$0xff]
    %v1517 = vld [vmem:[#allocation17 + $0xf30] sm:$0xff]
    %v1518 = vld [vmem:[#allocation17 + $0xf38] sm:$0xff]
    %v1519 = vld [vmem:[#allocation17 + $0xf40] sm:$0xff]
    %v1520 = vld [vmem:[#allocation17 + $0xf48] sm:$0xff]
    %v1521 = vld [vmem:[#allocation17 + $0xf50] sm:$0xff]
    %v1522 = vld [vmem:[#allocation17 + $0xf58] sm:$0xff]
    %v1523 = vld [vmem:[#allocation17 + $0xf60] sm:$0xff]
    %v1524 = vld [vmem:[#allocation17 + $0xf68] sm:$0xff]
    %v1525 = vld [vmem:[#allocation17 + $0xf70] sm:$0xff]
    %v1526 = vld [vmem:[#allocation17 + $0xf78] sm:$0xff]
    %v1527 = vld [vmem:[#allocation17 + $0xf80] sm:$0xff]
    %v1528 = vld [vmem:[#allocation17 + $0xf88] sm:$0xff]
    %v1529 = vld [vmem:[#allocation17 + $0xf90] sm:$0xff]
    %v1530 = vld [vmem:[#allocation17 + $0xf98] sm:$0xff]
    %v1531 = vld [vmem:[#allocation17 + $0xfa0] sm:$0xff]
    %v1532 = vld [vmem:[#allocation17 + $0xfa8] sm:$0xff]
    %v1533 = vld [vmem:[#allocation17 + $0xfb0] sm:$0xff]
    %v1534 = vld [vmem:[#allocation17 + $0xfb8] sm:$0xff]
    %v1535 = vld [vmem:[#allocation17 + $0xfc0] sm:$0xff]
    %v1536 = vld [vmem:[#allocation17 + $0xfc8] sm:$0xff]
    %v1537 = vld [vmem:[#allocation17 + $0xfd0] sm:$0xff]
    %v1538 = vld [vmem:[#allocation17 + $0xfd8] sm:$0xff]
    %v1539 = vld [vmem:[#allocation17 + $0xfe0] sm:$0xff]
    %v1540 = vld [vmem:[#allocation17 + $0xfe8] sm:$0xff]
    %v1541 = vld [vmem:[#allocation17 + $0xff0] sm:$0xff]
    %v1542 = vld [vmem:[#allocation17 + $0xff8] sm:$0xff]
    %v1543 = vld [vmem:[#allocation19] sm:$0xff]
    %v1545 = vlaneseq
    %v1546 = vshrl.u32 %v1545, 7
    %v1547 = vsub.s32 0, %v1546
    %v1548 = vrot.slane %v1543, %v1547
    %v1549 = vlaneseq
    %v1550 = vshrl.u32 %v1549, 7
    %v1551 = vsub.s32 1, %v1550
    %v1552 = vrot.slane %v1543, %v1551
    %v1553 = vlaneseq
    %v1554 = vshrl.u32 %v1553, 7
    %v1555 = vsub.s32 2, %v1554
    %v1556 = vrot.slane %v1543, %v1555
    %v1557 = vlaneseq
    %v1558 = vshrl.u32 %v1557, 7
    %v1559 = vsub.s32 3, %v1558
    %v1560 = vrot.slane %v1543, %v1559
    %v1561 = vlaneseq
    %v1562 = vshrl.u32 %v1561, 7
    %v1563 = vsub.s32 4, %v1562
    %v1564 = vrot.slane %v1543, %v1563
    %v1565 = vlaneseq
    %v1566 = vshrl.u32 %v1565, 7
    %v1567 = vsub.s32 5, %v1566
    %v1568 = vrot.slane %v1543, %v1567
    %v1569 = vlaneseq
    %v1570 = vshrl.u32 %v1569, 7
    %v1571 = vsub.s32 6, %v1570
    %v1572 = vrot.slane %v1543, %v1571
    %v1573 = vlaneseq
    %v1574 = vshrl.u32 %v1573, 7
    %v1575 = vsub.s32 7, %v1574
    %v1576 = vrot.slane %v1543, %v1575
    %1585 = vmatprep.subr.mxu0 %v1032
    %1586 = vmatpush1.msra.mxu0 %v1031
    %1587 = vmatprep.subr.mxu0 %v1040
    %1588 = vmatpush1.msra.mxu0 %v1039
    %1589 = vmatprep.subr.mxu0 %v1048
    %1590 = vmatpush1.msra.mxu0 %v1047
    %1591 = vmatprep.subr.mxu0 %v1056
    %1592 = vmatpush1.msra.mxu0 %v1055
    %1593 = vmatprep.subr.mxu0 %v1064
    %1594 = vmatpush1.msra.mxu0 %v1063
    %1595 = vmatprep.subr.mxu0 %v1072
    %1596 = vmatpush1.msra.mxu0 %v1071
    %1597 = vmatprep.subr.mxu0 %v1080
    %1598 = vmatpush1.msra.mxu0 %v1079
    %1599 = vmatprep.subr.mxu0 %v1088
    %1600 = vmatpush1.msra.mxu0 %v1087
    %1601 = vmatprep.subr.mxu0 %v1096
    %1602 = vmatpush1.msra.mxu0 %v1095
    %1603 = vmatprep.subr.mxu0 %v1104
    %1604 = vmatpush1.msra.mxu0 %v1103
    %1605 = vmatprep.subr.mxu0 %v1112
    %1606 = vmatpush1.msra.mxu0 %v1111
    %1607 = vmatprep.subr.mxu0 %v1120
    %1608 = vmatpush1.msra.mxu0 %v1119
    %1609 = vmatprep.subr.mxu0 %v1128
    %1610 = vmatpush1.msra.mxu0 %v1127
    %1611 = vmatprep.subr.mxu0 %v1136
    %1612 = vmatpush1.msra.mxu0 %v1135
    %1613 = vmatprep.subr.mxu0 %v1144
    %1614 = vmatpush1.msra.mxu0 %v1143
    %1615 = vmatprep.subr.mxu0 %v1152
    %1616 = vmatpush1.msra.mxu0 %v1151
    %1617 = vmatprep.subr.mxu0 %v1160
    %1618 = vmatpush1.msra.mxu0 %v1159
    %1619 = vmatprep.subr.mxu0 %v1168
    %1620 = vmatpush1.msra.mxu0 %v1167
    %1621 = vmatprep.subr.mxu0 %v1176
    %1622 = vmatpush1.msra.mxu0 %v1175
    %1623 = vmatprep.subr.mxu0 %v1184
    %1624 = vmatpush1.msra.mxu0 %v1183
    %1625 = vmatprep.subr.mxu0 %v1192
    %1626 = vmatpush1.msra.mxu0 %v1191
    %1627 = vmatprep.subr.mxu0 %v1200
    %1628 = vmatpush1.msra.mxu0 %v1199
    %1629 = vmatprep.subr.mxu0 %v1208
    %1630 = vmatpush1.msra.mxu0 %v1207
    %1631 = vmatprep.subr.mxu0 %v1216
    %1632 = vmatpush1.msra.mxu0 %v1215
    %1633 = vmatprep.subr.mxu0 %v1224
    %1634 = vmatpush1.msra.mxu0 %v1223
    %1635 = vmatprep.subr.mxu0 %v1232
    %1636 = vmatpush1.msra.mxu0 %v1231
    %1637 = vmatprep.subr.mxu0 %v1240
    %1638 = vmatpush1.msra.mxu0 %v1239
    %1639 = vmatprep.subr.mxu0 %v1248
    %1640 = vmatpush1.msra.mxu0 %v1247
    %1641 = vmatprep.subr.mxu0 %v1256
    %1642 = vmatpush1.msra.mxu0 %v1255
    %1643 = vmatprep.subr.mxu0 %v1264
    %1644 = vmatpush1.msra.mxu0 %v1263
    %1645 = vmatprep.subr.mxu0 %v1272
    %1646 = vmatpush1.msra.mxu0 %v1271
    %1647 = vmatprep.subr.mxu0 %v1280
    %1648 = vmatpush1.msra.mxu0 %v1279
    %1649 = vmatprep.mubr.f32.mxu0 %v1028
    %1650 = vmatmul.mubr.f32.gmra.mrb[0].mxu0 %v1027
    %v1651 = vpop.f32.mrb[0].mxu0
    %v1652 = vadd.f32 %v1548, %v1651
    %v1653 = vpop.f32.mrb[0].mxu0
    %v1654 = vadd.f32 %v1552, %v1653
    %1655 = vdwg.mxu0
    %1656 = vmatprep.subr.mxu0 %v1288
    %1657 = vmatpush1.msra.mxu0 %v1287
    %1658 = vmatprep.subr.mxu0 %v1296
    %1659 = vmatpush1.msra.mxu0 %v1295
    %1660 = vmatprep.subr.mxu0 %v1304
    %1661 = vmatpush1.msra.mxu0 %v1303
    %1662 = vmatprep.subr.mxu0 %v1312
    %1663 = vmatpush1.msra.mxu0 %v1311
    %1664 = vmatprep.subr.mxu0 %v1320
    %1665 = vmatpush1.msra.mxu0 %v1319
    %1666 = vmatprep.subr.mxu0 %v1328
    %1667 = vmatpush1.msra.mxu0 %v1327
    %1668 = vmatprep.subr.mxu0 %v1336
    %1669 = vmatpush1.msra.mxu0 %v1335
    %1670 = vmatprep.subr.mxu0 %v1344
    %1671 = vmatpush1.msra.mxu0 %v1343
    %1672 = vmatprep.subr.mxu0 %v1352
    %1673 = vmatpush1.msra.mxu0 %v1351
    %1674 = vmatprep.subr.mxu0 %v1360
    %1675 = vmatpush1.msra.mxu0 %v1359
    %1676 = vmatprep.subr.mxu0 %v1368
    %1677 = vmatpush1.msra.mxu0 %v1367
    %1678 = vmatprep.subr.mxu0 %v1376
    %1679 = vmatpush1.msra.mxu0 %v1375
    %1680 = vmatprep.subr.mxu0 %v1384
    %1681 = vmatpush1.msra.mxu0 %v1383
    %1682 = vmatprep.subr.mxu0 %v1392
    %1683 = vmatpush1.msra.mxu0 %v1391
    %1684 = vmatprep.subr.mxu0 %v1400
    %1685 = vmatpush1.msra.mxu0 %v1399
    %1686 = vmatprep.subr.mxu0 %v1408
    %1687 = vmatpush1.msra.mxu0 %v1407
    %1688 = vmatprep.subr.mxu0 %v1416
    %1689 = vmatpush1.msra.mxu0 %v1415
    %1690 = vmatprep.subr.mxu0 %v1424
    %1691 = vmatpush1.msra.mxu0 %v1423
    %1692 = vmatprep.subr.mxu0 %v1432
    %1693 = vmatpush1.msra.mxu0 %v1431
    %1694 = vmatprep.subr.mxu0 %v1440
    %1695 = vmatpush1.msra.mxu0 %v1439
    %1696 = vmatprep.subr.mxu0 %v1448
    %1697 = vmatpush1.msra.mxu0 %v1447
    %1698 = vmatprep.subr.mxu0 %v1456
    %1699 = vmatpush1.msra.mxu0 %v1455
    %1700 = vmatprep.subr.mxu0 %v1464
    %1701 = vmatpush1.msra.mxu0 %v1463
    %1702 = vmatprep.subr.mxu0 %v1472
    %1703 = vmatpush1.msra.mxu0 %v1471
    %1704 = vmatprep.subr.mxu0 %v1480
    %1705 = vmatpush1.msra.mxu0 %v1479
    %1706 = vmatprep.subr.mxu0 %v1488
    %1707 = vmatpush1.msra.mxu0 %v1487
    %1708 = vmatprep.subr.mxu0 %v1496
    %1709 = vmatpush1.msra.mxu0 %v1495
    %1710 = vmatprep.subr.mxu0 %v1504
    %1711 = vmatpush1.msra.mxu0 %v1503
    %1712 = vmatprep.subr.mxu0 %v1512
    %1713 = vmatpush1.msra.mxu0 %v1511
    %1714 = vmatprep.subr.mxu0 %v1520
    %1715 = vmatpush1.msra.mxu0 %v1519
    %1716 = vmatprep.subr.mxu0 %v1528
    %1717 = vmatpush1.msra.mxu0 %v1527
    %1718 = vmatprep.subr.mxu0 %v1536
    %1719 = vmatpush1.msra.mxu0 %v1535
    %1720 = vmatprep.mubr.f32.mxu0 %v1030
    %1721 = vmatmul.mubr.f32.gmra.mrb[0].mxu0 %v1029
    %v1722 = vpop.f32.mrb[0].mxu0
    %v1723 = vadd.f32 %v1652, %v1722
    %v1724 = vpop.f32.mrb[0].mxu0
    %v1725 = vadd.f32 %v1654, %v1724
    %1726 = vdwg.mxu0
    %1727 = vmatprep.subr.mxu0 %v1034
    %1728 = vmatpush1.msra.mxu0 %v1033
    %1729 = vmatprep.subr.mxu0 %v1042
    %1730 = vmatpush1.msra.mxu0 %v1041
    %1731 = vmatprep.subr.mxu0 %v1050
    %1732 = vmatpush1.msra.mxu0 %v1049
    %1733 = vmatprep.subr.mxu0 %v1058
    %1734 = vmatpush1.msra.mxu0 %v1057
    %1735 = vmatprep.subr.mxu0 %v1066
    %1736 = vmatpush1.msra.mxu0 %v1065
    %1737 = vmatprep.subr.mxu0 %v1074
    %1738 = vmatpush1.msra.mxu0 %v1073
    %1739 = vmatprep.subr.mxu0 %v1082
    %1740 = vmatpush1.msra.mxu0 %v1081
    %1741 = vmatprep.subr.mxu0 %v1090
    %1742 = vmatpush1.msra.mxu0 %v1089
    %1743 = vmatprep.subr.mxu0 %v1098
    %1744 = vmatpush1.msra.mxu0 %v1097
    %1745 = vmatprep.subr.mxu0 %v1106
    %1746 = vmatpush1.msra.mxu0 %v1105
    %1747 = vmatprep.subr.mxu0 %v1114
    %1748 = vmatpush1.msra.mxu0 %v1113
    %1749 = vmatprep.subr.mxu0 %v1122
    %1750 = vmatpush1.msra.mxu0 %v1121
    %1751 = vmatprep.subr.mxu0 %v1130
    %1752 = vmatpush1.msra.mxu0 %v1129
    %1753 = vmatprep.subr.mxu0 %v1138
    %1754 = vmatpush1.msra.mxu0 %v1137
    %1755 = vmatprep.subr.mxu0 %v1146
    %1756 = vmatpush1.msra.mxu0 %v1145
    %1757 = vmatprep.subr.mxu0 %v1154
    %1758 = vmatpush1.msra.mxu0 %v1153
    %1759 = vmatprep.subr.mxu0 %v1162
    %1760 = vmatpush1.msra.mxu0 %v1161
    %1761 = vmatprep.subr.mxu0 %v1170
    %1762 = vmatpush1.msra.mxu0 %v1169
    %1763 = vmatprep.subr.mxu0 %v1178
    %1764 = vmatpush1.msra.mxu0 %v1177
    %1765 = vmatprep.subr.mxu0 %v1186
    %1766 = vmatpush1.msra.mxu0 %v1185
    %1767 = vmatprep.subr.mxu0 %v1194
    %1768 = vmatpush1.msra.mxu0 %v1193
    %1769 = vmatprep.subr.mxu0 %v1202
    %1770 = vmatpush1.msra.mxu0 %v1201
    %1771 = vmatprep.subr.mxu0 %v1210
    %1772 = vmatpush1.msra.mxu0 %v1209
    %1773 = vmatprep.subr.mxu0 %v1218
    %1774 = vmatpush1.msra.mxu0 %v1217
    %1775 = vmatprep.subr.mxu0 %v1226
    %1776 = vmatpush1.msra.mxu0 %v1225
    %1777 = vmatprep.subr.mxu0 %v1234
    %1778 = vmatpush1.msra.mxu0 %v1233
    %1779 = vmatprep.subr.mxu0 %v1242
    %1780 = vmatpush1.msra.mxu0 %v1241
    %1781 = vmatprep.subr.mxu0 %v1250
    %1782 = vmatpush1.msra.mxu0 %v1249
    %1783 = vmatprep.subr.mxu0 %v1258
    %1784 = vmatpush1.msra.mxu0 %v1257
    %1785 = vmatprep.subr.mxu0 %v1266
    %1786 = vmatpush1.msra.mxu0 %v1265
    %1787 = vmatprep.subr.mxu0 %v1274
    %1788 = vmatpush1.msra.mxu0 %v1273
    %1789 = vmatprep.subr.mxu0 %v1282
    %1790 = vmatpush1.msra.mxu0 %v1281
    %1791 = vmatprep.mubr.f32.mxu0 %v1028
    %1792 = vmatmul.mubr.f32.gmra.mrb[0].mxu0 %v1027
    %v1793 = vpop.f32.mrb[0].mxu0
    %v1794 = vadd.f32 %v1556, %v1793
    %v1795 = vpop.f32.mrb[0].mxu0
    %v1796 = vadd.f32 %v1560, %v1795
    %1797 = vdwg.mxu0
    %1798 = vmatprep.subr.mxu0 %v1290
    %1799 = vmatpush1.msra.mxu0 %v1289
    %1800 = vmatprep.subr.mxu0 %v1298
    %1801 = vmatpush1.msra.mxu0 %v1297
    %1802 = vmatprep.subr.mxu0 %v1306
    %1803 = vmatpush1.msra.mxu0 %v1305
    %1804 = vmatprep.subr.mxu0 %v1314
    %1805 = vmatpush1.msra.mxu0 %v1313
    %1806 = vmatprep.subr.mxu0 %v1322
    %1807 = vmatpush1.msra.mxu0 %v1321
    %1808 = vmatprep.subr.mxu0 %v1330
    %1809 = vmatpush1.msra.mxu0 %v1329
    %1810 = vmatprep.subr.mxu0 %v1338
    %1811 = vmatpush1.msra.mxu0 %v1337
    %1812 = vmatprep.subr.mxu0 %v1346
    %1813 = vmatpush1.msra.mxu0 %v1345
    %1814 = vmatprep.subr.mxu0 %v1354
    %1815 = vmatpush1.msra.mxu0 %v1353
    %1816 = vmatprep.subr.mxu0 %v1362
    %1817 = vmatpush1.msra.mxu0 %v1361
    %1818 = vmatprep.subr.mxu0 %v1370
    %1819 = vmatpush1.msra.mxu0 %v1369
    %1820 = vmatprep.subr.mxu0 %v1378
    %1821 = vmatpush1.msra.mxu0 %v1377
    %1822 = vmatprep.subr.mxu0 %v1386
    %1823 = vmatpush1.msra.mxu0 %v1385
    %1824 = vmatprep.subr.mxu0 %v1394
    %1825 = vmatpush1.msra.mxu0 %v1393
    %1826 = vmatprep.subr.mxu0 %v1402
    %1827 = vmatpush1.msra.mxu0 %v1401
    %1828 = vmatprep.subr.mxu0 %v1410
    %1829 = vmatpush1.msra.mxu0 %v1409
    %1830 = vmatprep.subr.mxu0 %v1418
    %1831 = vmatpush1.msra.mxu0 %v1417
    %1832 = vmatprep.subr.mxu0 %v1426
    %1833 = vmatpush1.msra.mxu0 %v1425
    %1834 = vmatprep.subr.mxu0 %v1434
    %1835 = vmatpush1.msra.mxu0 %v1433
    %1836 = vmatprep.subr.mxu0 %v1442
    %1837 = vmatpush1.msra.mxu0 %v1441
    %1838 = vmatprep.subr.mxu0 %v1450
    %1839 = vmatpush1.msra.mxu0 %v1449
    %1840 = vmatprep.subr.mxu0 %v1458
    %1841 = vmatpush1.msra.mxu0 %v1457
    %1842 = vmatprep.subr.mxu0 %v1466
    %1843 = vmatpush1.msra.mxu0 %v1465
    %1844 = vmatprep.subr.mxu0 %v1474
    %1845 = vmatpush1.msra.mxu0 %v1473
    %1846 = vmatprep.subr.mxu0 %v1482
    %1847 = vmatpush1.msra.mxu0 %v1481
    %1848 = vmatprep.subr.mxu0 %v1490
    %1849 = vmatpush1.msra.mxu0 %v1489
    %1850 = vmatprep.subr.mxu0 %v1498
    %1851 = vmatpush1.msra.mxu0 %v1497
    %1852 = vmatprep.subr.mxu0 %v1506
    %1853 = vmatpush1.msra.mxu0 %v1505
    %1854 = vmatprep.subr.mxu0 %v1514
    %1855 = vmatpush1.msra.mxu0 %v1513
    %1856 = vmatprep.subr.mxu0 %v1522
    %1857 = vmatpush1.msra.mxu0 %v1521
    %1858 = vmatprep.subr.mxu0 %v1530
    %1859 = vmatpush1.msra.mxu0 %v1529
    %1860 = vmatprep.subr.mxu0 %v1538
    %1861 = vmatpush1.msra.mxu0 %v1537
    %1862 = vmatprep.mubr.f32.mxu0 %v1030
    %1863 = vmatmul.mubr.f32.gmra.mrb[0].mxu0 %v1029
    %v1864 = vpop.f32.mrb[0].mxu0
    %v1865 = vadd.f32 %v1794, %v1864
    %v1866 = vpop.f32.mrb[0].mxu0
    %v1867 = vadd.f32 %v1796, %v1866
    %1868 = vdwg.mxu0
    %1869 = vmatprep.subr.mxu0 %v1036
    %1870 = vmatpush1.msra.mxu0 %v1035
    %1871 = vmatprep.subr.mxu0 %v1044
    %1872 = vmatpush1.msra.mxu0 %v1043
    %1873 = vmatprep.subr.mxu0 %v1052
    %1874 = vmatpush1.msra.mxu0 %v1051
    %1875 = vmatprep.subr.mxu0 %v1060
    %1876 = vmatpush1.msra.mxu0 %v1059
    %1877 = vmatprep.subr.mxu0 %v1068
    %1878 = vmatpush1.msra.mxu0 %v1067
    %1879 = vmatprep.subr.mxu0 %v1076
    %1880 = vmatpush1.msra.mxu0 %v1075
    %1881 = vmatprep.subr.mxu0 %v1084
    %1882 = vmatpush1.msra.mxu0 %v1083
    %1883 = vmatprep.subr.mxu0 %v1092
    %1884 = vmatpush1.msra.mxu0 %v1091
    %1885 = vmatprep.subr.mxu0 %v1100
    %1886 = vmatpush1.msra.mxu0 %v1099
    %1887 = vmatprep.subr.mxu0 %v1108
    %1888 = vmatpush1.msra.mxu0 %v1107
    %1889 = vmatprep.subr.mxu0 %v1116
    %1890 = vmatpush1.msra.mxu0 %v1115
    %1891 = vmatprep.subr.mxu0 %v1124
    %1892 = vmatpush1.msra.mxu0 %v1123
    %1893 = vmatprep.subr.mxu0 %v1132
    %1894 = vmatpush1.msra.mxu0 %v1131
    %1895 = vmatprep.subr.mxu0 %v1140
    %1896 = vmatpush1.msra.mxu0 %v1139
    %1897 = vmatprep.subr.mxu0 %v1148
    %1898 = vmatpush1.msra.mxu0 %v1147
    %1899 = vmatprep.subr.mxu0 %v1156
    %1900 = vmatpush1.msra.mxu0 %v1155
    %1901 = vmatprep.subr.mxu0 %v1164
    %1902 = vmatpush1.msra.mxu0 %v1163
    %1903 = vmatprep.subr.mxu0 %v1172
    %1904 = vmatpush1.msra.mxu0 %v1171
    %1905 = vmatprep.subr.mxu0 %v1180
    %1906 = vmatpush1.msra.mxu0 %v1179
    %1907 = vmatprep.subr.mxu0 %v1188
    %1908 = vmatpush1.msra.mxu0 %v1187
    %1909 = vmatprep.subr.mxu0 %v1196
    %1910 = vmatpush1.msra.mxu0 %v1195
    %1911 = vmatprep.subr.mxu0 %v1204
    %1912 = vmatpush1.msra.mxu0 %v1203
    %1913 = vmatprep.subr.mxu0 %v1212
    %1914 = vmatpush1.msra.mxu0 %v1211
    %1915 = vmatprep.subr.mxu0 %v1220
    %1916 = vmatpush1.msra.mxu0 %v1219
    %1917 = vmatprep.subr.mxu0 %v1228
    %1918 = vmatpush1.msra.mxu0 %v1227
    %1919 = vmatprep.subr.mxu0 %v1236
    %1920 = vmatpush1.msra.mxu0 %v1235
    %1921 = vmatprep.subr.mxu0 %v1244
    %1922 = vmatpush1.msra.mxu0 %v1243
    %1923 = vmatprep.subr.mxu0 %v1252
    %1924 = vmatpush1.msra.mxu0 %v1251
    %1925 = vmatprep.subr.mxu0 %v1260
    %1926 = vmatpush1.msra.mxu0 %v1259
    %1927 = vmatprep.subr.mxu0 %v1268
    %1928 = vmatpush1.msra.mxu0 %v1267
    %1929 = vmatprep.subr.mxu0 %v1276
    %1930 = vmatpush1.msra.mxu0 %v1275
    %1931 = vmatprep.subr.mxu0 %v1284
    %1932 = vmatpush1.msra.mxu0 %v1283
    %1933 = vmatprep.mubr.f32.mxu0 %v1028
    %1934 = vmatmul.mubr.f32.gmra.mrb[0].mxu0 %v1027
    %v1935 = vpop.f32.mrb[0].mxu0
    %v1936 = vadd.f32 %v1564, %v1935
    %v1937 = vpop.f32.mrb[0].mxu0
    %v1938 = vadd.f32 %v1568, %v1937
    %1939 = vdwg.mxu0
    %1940 = vmatprep.subr.mxu0 %v1292
    %1941 = vmatpush1.msra.mxu0 %v1291
    %1942 = vmatprep.subr.mxu0 %v1300
    %1943 = vmatpush1.msra.mxu0 %v1299
    %1944 = vmatprep.subr.mxu0 %v1308
    %1945 = vmatpush1.msra.mxu0 %v1307
    %1946 = vmatprep.subr.mxu0 %v1316
    %1947 = vmatpush1.msra.mxu0 %v1315
    %1948 = vmatprep.subr.mxu0 %v1324
    %1949 = vmatpush1.msra.mxu0 %v1323
    %1950 = vmatprep.subr.mxu0 %v1332
    %1951 = vmatpush1.msra.mxu0 %v1331
    %1952 = vmatprep.subr.mxu0 %v1340
    %1953 = vmatpush1.msra.mxu0 %v1339
    %1954 = vmatprep.subr.mxu0 %v1348
    %1955 = vmatpush1.msra.mxu0 %v1347
    %1956 = vmatprep.subr.mxu0 %v1356
    %1957 = vmatpush1.msra.mxu0 %v1355
    %1958 = vmatprep.subr.mxu0 %v1364
    %1959 = vmatpush1.msra.mxu0 %v1363
    %1960 = vmatprep.subr.mxu0 %v1372
    %1961 = vmatpush1.msra.mxu0 %v1371
    %1962 = vmatprep.subr.mxu0 %v1380
    %1963 = vmatpush1.msra.mxu0 %v1379
    %1964 = vmatprep.subr.mxu0 %v1388
    %1965 = vmatpush1.msra.mxu0 %v1387
    %1966 = vmatprep.subr.mxu0 %v1396
    %1967 = vmatpush1.msra.mxu0 %v1395
    %1968 = vmatprep.subr.mxu0 %v1404
    %1969 = vmatpush1.msra.mxu0 %v1403
    %1970 = vmatprep.subr.mxu0 %v1412
    %1971 = vmatpush1.msra.mxu0 %v1411
    %1972 = vmatprep.subr.mxu0 %v1420
    %1973 = vmatpush1.msra.mxu0 %v1419
    %1974 = vmatprep.subr.mxu0 %v1428
    %1975 = vmatpush1.msra.mxu0 %v1427
    %1976 = vmatprep.subr.mxu0 %v1436
    %1977 = vmatpush1.msra.mxu0 %v1435
    %1978 = vmatprep.subr.mxu0 %v1444
    %1979 = vmatpush1.msra.mxu0 %v1443
    %1980 = vmatprep.subr.mxu0 %v1452
    %1981 = vmatpush1.msra.mxu0 %v1451
    %1982 = vmatprep.subr.mxu0 %v1460
    %1983 = vmatpush1.msra.mxu0 %v1459
    %1984 = vmatprep.subr.mxu0 %v1468
    %1985 = vmatpush1.msra.mxu0 %v1467
    %1986 = vmatprep.subr.mxu0 %v1476
    %1987 = vmatpush1.msra.mxu0 %v1475
    %1988 = vmatprep.subr.mxu0 %v1484
    %1989 = vmatpush1.msra.mxu0 %v1483
    %1990 = vmatprep.subr.mxu0 %v1492
    %1991 = vmatpush1.msra.mxu0 %v1491
    %1992 = vmatprep.subr.mxu0 %v1500
    %1993 = vmatpush1.msra.mxu0 %v1499
    %1994 = vmatprep.subr.mxu0 %v1508
    %1995 = vmatpush1.msra.mxu0 %v1507
    %1996 = vmatprep.subr.mxu0 %v1516
    %1997 = vmatpush1.msra.mxu0 %v1515
    %1998 = vmatprep.subr.mxu0 %v1524
    %1999 = vmatpush1.msra.mxu0 %v1523
    %2000 = vmatprep.subr.mxu0 %v1532
    %2001 = vmatpush1.msra.mxu0 %v1531
    %2002 = vmatprep.subr.mxu0 %v1540
    %2003 = vmatpush1.msra.mxu0 %v1539
    %2004 = vmatprep.mubr.f32.mxu0 %v1030
    %2005 = vmatmul.mubr.f32.gmra.mrb[0].mxu0 %v1029
    %v2006 = vpop.f32.mrb[0].mxu0
    %v2007 = vadd.f32 %v1936, %v2006
    %v2008 = vpop.f32.mrb[0].mxu0
    %v2009 = vadd.f32 %v1938, %v2008
    %2010 = vdwg.mxu0
    %2011 = vmatprep.subr.mxu0 %v1038
    %2012 = vmatpush1.msra.mxu0 %v1037
    %2013 = vmatprep.subr.mxu0 %v1046
    %2014 = vmatpush1.msra.mxu0 %v1045
    %2015 = vmatprep.subr.mxu0 %v1054
    %2016 = vmatpush1.msra.mxu0 %v1053
    %2017 = vmatprep.subr.mxu0 %v1062
    %2018 = vmatpush1.msra.mxu0 %v1061
    %2019 = vmatprep.subr.mxu0 %v1070
    %2020 = vmatpush1.msra.mxu0 %v1069
    %2021 = vmatprep.subr.mxu0 %v1078
    %2022 = vmatpush1.msra.mxu0 %v1077
    %2023 = vmatprep.subr.mxu0 %v1086
    %2024 = vmatpush1.msra.mxu0 %v1085
    %2025 = vmatprep.subr.mxu0 %v1094
    %2026 = vmatpush1.msra.mxu0 %v1093
    %2027 = vmatprep.subr.mxu0 %v1102
    %2028 = vmatpush1.msra.mxu0 %v1101
    %2029 = vmatprep.subr.mxu0 %v1110
    %2030 = vmatpush1.msra.mxu0 %v1109
    %2031 = vmatprep.subr.mxu0 %v1118
    %2032 = vmatpush1.msra.mxu0 %v1117
    %2033 = vmatprep.subr.mxu0 %v1126
    %2034 = vmatpush1.msra.mxu0 %v1125
    %2035 = vmatprep.subr.mxu0 %v1134
    %2036 = vmatpush1.msra.mxu0 %v1133
    %2037 = vmatprep.subr.mxu0 %v1142
    %2038 = vmatpush1.msra.mxu0 %v1141
    %2039 = vmatprep.subr.mxu0 %v1150
    %2040 = vmatpush1.msra.mxu0 %v1149
    %2041 = vmatprep.subr.mxu0 %v1158
    %2042 = vmatpush1.msra.mxu0 %v1157
    %2043 = vmatprep.subr.mxu0 %v1166
    %2044 = vmatpush1.msra.mxu0 %v1165
    %2045 = vmatprep.subr.mxu0 %v1174
    %2046 = vmatpush1.msra.mxu0 %v1173
    %2047 = vmatprep.subr.mxu0 %v1182
    %2048 = vmatpush1.msra.mxu0 %v1181
    %2049 = vmatprep.subr.mxu0 %v1190
    %2050 = vmatpush1.msra.mxu0 %v1189
    %2051 = vmatprep.subr.mxu0 %v1198
    %2052 = vmatpush1.msra.mxu0 %v1197
    %2053 = vmatprep.subr.mxu0 %v1206
    %2054 = vmatpush1.msra.mxu0 %v1205
    %2055 = vmatprep.subr.mxu0 %v1214
    %2056 = vmatpush1.msra.mxu0 %v1213
    %2057 = vmatprep.subr.mxu0 %v1222
    %2058 = vmatpush1.msra.mxu0 %v1221
    %2059 = vmatprep.subr.mxu0 %v1230
    %2060 = vmatpush1.msra.mxu0 %v1229
    %2061 = vmatprep.subr.mxu0 %v1238
    %2062 = vmatpush1.msra.mxu0 %v1237
    %2063 = vmatprep.subr.mxu0 %v1246
    %2064 = vmatpush1.msra.mxu0 %v1245
    %2065 = vmatprep.subr.mxu0 %v1254
    %2066 = vmatpush1.msra.mxu0 %v1253
    %2067 = vmatprep.subr.mxu0 %v1262
    %2068 = vmatpush1.msra.mxu0 %v1261
    %2069 = vmatprep.subr.mxu0 %v1270
    %2070 = vmatpush1.msra.mxu0 %v1269
    %2071 = vmatprep.subr.mxu0 %v1278
    %2072 = vmatpush1.msra.mxu0 %v1277
    %2073 = vmatprep.subr.mxu0 %v1286
    %2074 = vmatpush1.msra.mxu0 %v1285
    %2075 = vmatprep.mubr.f32.mxu0 %v1028
    %2076 = vmatmul.mubr.f32.gmra.mrb[0].mxu0 %v1027
    %v2077 = vpop.f32.mrb[0].mxu0
    %v2078 = vadd.f32 %v1572, %v2077
    %v2079 = vpop.f32.mrb[0].mxu0
    %v2080 = vadd.f32 %v1576, %v2079
    %2081 = vdwg.mxu0
    %2082 = vmatprep.subr.mxu0 %v1294
    %2083 = vmatpush1.msra.mxu0 %v1293
    %2084 = vmatprep.subr.mxu0 %v1302
    %2085 = vmatpush1.msra.mxu0 %v1301
    %2086 = vmatprep.subr.mxu0 %v1310
    %2087 = vmatpush1.msra.mxu0 %v1309
    %2088 = vmatprep.subr.mxu0 %v1318
    %2089 = vmatpush1.msra.mxu0 %v1317
    %2090 = vmatprep.subr.mxu0 %v1326
    %2091 = vmatpush1.msra.mxu0 %v1325
    %2092 = vmatprep.subr.mxu0 %v1334
    %2093 = vmatpush1.msra.mxu0 %v1333
    %2094 = vmatprep.subr.mxu0 %v1342
    %2095 = vmatpush1.msra.mxu0 %v1341
    %2096 = vmatprep.subr.mxu0 %v1350
    %2097 = vmatpush1.msra.mxu0 %v1349
    %2098 = vmatprep.subr.mxu0 %v1358
    %2099 = vmatpush1.msra.mxu0 %v1357
    %2100 = vmatprep.subr.mxu0 %v1366
    %2101 = vmatpush1.msra.mxu0 %v1365
    %2102 = vmatprep.subr.mxu0 %v1374
    %2103 = vmatpush1.msra.mxu0 %v1373
    %2104 = vmatprep.subr.mxu0 %v1382
    %2105 = vmatpush1.msra.mxu0 %v1381
    %2106 = vmatprep.subr.mxu0 %v1390
    %2107 = vmatpush1.msra.mxu0 %v1389
    %2108 = vmatprep.subr.mxu0 %v1398
    %2109 = vmatpush1.msra.mxu0 %v1397
    %2110 = vmatprep.subr.mxu0 %v1406
    %2111 = vmatpush1.msra.mxu0 %v1405
    %2112 = vmatprep.subr.mxu0 %v1414
    %2113 = vmatpush1.msra.mxu0 %v1413
    %2114 = vmatprep.subr.mxu0 %v1422
    %2115 = vmatpush1.msra.mxu0 %v1421
    %2116 = vmatprep.subr.mxu0 %v1430
    %2117 = vmatpush1.msra.mxu0 %v1429
    %2118 = vmatprep.subr.mxu0 %v1438
    %2119 = vmatpush1.msra.mxu0 %v1437
    %2120 = vmatprep.subr.mxu0 %v1446
    %2121 = vmatpush1.msra.mxu0 %v1445
    %2122 = vmatprep.subr.mxu0 %v1454
    %2123 = vmatpush1.msra.mxu0 %v1453
    %2124 = vmatprep.subr.mxu0 %v1462
    %2125 = vmatpush1.msra.mxu0 %v1461
    %2126 = vmatprep.subr.mxu0 %v1470
    %2127 = vmatpush1.msra.mxu0 %v1469
    %2128 = vmatprep.subr.mxu0 %v1478
    %2129 = vmatpush1.msra.mxu0 %v1477
    %2130 = vmatprep.subr.mxu0 %v1486
    %2131 = vmatpush1.msra.mxu0 %v1485
    %2132 = vmatprep.subr.mxu0 %v1494
    %2133 = vmatpush1.msra.mxu0 %v1493
    %2134 = vmatprep.subr.mxu0 %v1502
    %2135 = vmatpush1.msra.mxu0 %v1501
    %2136 = vmatprep.subr.mxu0 %v1510
    %2137 = vmatpush1.msra.mxu0 %v1509
    %2138 = vmatprep.subr.mxu0 %v1518
    %2139 = vmatpush1.msra.mxu0 %v1517
    %2140 = vmatprep.subr.mxu0 %v1526
    %2141 = vmatpush1.msra.mxu0 %v1525
    %2142 = vmatprep.subr.mxu0 %v1534
    %2143 = vmatpush1.msra.mxu0 %v1533
    %2144 = vmatprep.subr.mxu0 %v1542
    %2145 = vmatpush1.msra.mxu0 %v1541
    %2146 = vmatprep.mubr.f32.mxu0 %v1030
    %2147 = vmatmul.mubr.f32.gmra.mrb[0].mxu0 %v1029
    %v2148 = vpop.f32.mrb[0].mxu0
    %v2149 = vadd.f32 %v2078, %v2148
    %v2150 = vpop.f32.mrb[0].mxu0
    %v2151 = vadd.f32 %v2080, %v2150
    %2152 = vdwg.mxu0
    %v2153 = vld [vmem:[#allocation23] sm:$0xff]
    %v2154 = vld [vmem:[#allocation23 + $0x8] sm:$0xff]
    %v2155 = vld [vmem:[#allocation23 + $0x10] sm:$0xff]
    %v2156 = vld [vmem:[#allocation23 + $0x18] sm:$0xff]
    %v2157 = vld [vmem:[#allocation23 + $0x20] sm:$0xff]
    %v2158 = vld [vmem:[#allocation23 + $0x28] sm:$0xff]
    %v2159 = vld [vmem:[#allocation23 + $0x30] sm:$0xff]
    %v2160 = vld [vmem:[#allocation23 + $0x38] sm:$0xff]
    %v2161 = vld [vmem:[#allocation23 + $0x40] sm:$0xff]
    %v2162 = vld [vmem:[#allocation23 + $0x48] sm:$0xff]
    %v2163 = vld [vmem:[#allocation23 + $0x50] sm:$0xff]
    %v2164 = vld [vmem:[#allocation23 + $0x58] sm:$0xff]
    %v2165 = vld [vmem:[#allocation23 + $0x60] sm:$0xff]
    %v2166 = vld [vmem:[#allocation23 + $0x68] sm:$0xff]
    %v2167 = vld [vmem:[#allocation23 + $0x70] sm:$0xff]
    %v2168 = vld [vmem:[#allocation23 + $0x78] sm:$0xff]
    %v2169 = vld [vmem:[#allocation23 + $0x80] sm:$0xff]
    %v2170 = vld [vmem:[#allocation23 + $0x88] sm:$0xff]
    %v2171 = vld [vmem:[#allocation23 + $0x90] sm:$0xff]
    %v2172 = vld [vmem:[#allocation23 + $0x98] sm:$0xff]
    %v2173 = vld [vmem:[#allocation23 + $0xa0] sm:$0xff]
    %v2174 = vld [vmem:[#allocation23 + $0xa8] sm:$0xff]
    %v2175 = vld [vmem:[#allocation23 + $0xb0] sm:$0xff]
    %v2176 = vld [vmem:[#allocation23 + $0xb8] sm:$0xff]
    %v2177 = vld [vmem:[#allocation23 + $0xc0] sm:$0xff]
    %v2178 = vld [vmem:[#allocation23 + $0xc8] sm:$0xff]
    %v2179 = vld [vmem:[#allocation23 + $0xd0] sm:$0xff]
    %v2180 = vld [vmem:[#allocation23 + $0xd8] sm:$0xff]
    %v2181 = vld [vmem:[#allocation23 + $0xe0] sm:$0xff]
    %v2182 = vld [vmem:[#allocation23 + $0xe8] sm:$0xff]
    %v2183 = vld [vmem:[#allocation23 + $0xf0] sm:$0xff]
    %v2184 = vld [vmem:[#allocation23 + $0xf8] sm:$0xff]
    %v2185 = vld [vmem:[#allocation23 + $0x100] sm:$0xff]
    %v2186 = vld [vmem:[#allocation23 + $0x108] sm:$0xff]
    %v2187 = vld [vmem:[#allocation23 + $0x110] sm:$0xff]
    %v2188 = vld [vmem:[#allocation23 + $0x118] sm:$0xff]
    %v2189 = vld [vmem:[#allocation23 + $0x120] sm:$0xff]
    %v2190 = vld [vmem:[#allocation23 + $0x128] sm:$0xff]
    %v2191 = vld [vmem:[#allocation23 + $0x130] sm:$0xff]
    %v2192 = vld [vmem:[#allocation23 + $0x138] sm:$0xff]
    %v2193 = vld [vmem:[#allocation23 + $0x140] sm:$0xff]
    %v2194 = vld [vmem:[#allocation23 + $0x148] sm:$0xff]
    %v2195 = vld [vmem:[#allocation23 + $0x150] sm:$0xff]
    %v2196 = vld [vmem:[#allocation23 + $0x158] sm:$0xff]
    %v2197 = vld [vmem:[#allocation23 + $0x160] sm:$0xff]
    %v2198 = vld [vmem:[#allocation23 + $0x168] sm:$0xff]
    %v2199 = vld [vmem:[#allocation23 + $0x170] sm:$0xff]
    %v2200 = vld [vmem:[#allocation23 + $0x178] sm:$0xff]
    %v2201 = vld [vmem:[#allocation23 + $0x180] sm:$0xff]
    %v2202 = vld [vmem:[#allocation23 + $0x188] sm:$0xff]
    %v2203 = vld [vmem:[#allocation23 + $0x190] sm:$0xff]
    %v2204 = vld [vmem:[#allocation23 + $0x198] sm:$0xff]
    %v2205 = vld [vmem:[#allocation23 + $0x1a0] sm:$0xff]
    %v2206 = vld [vmem:[#allocation23 + $0x1a8] sm:$0xff]
    %v2207 = vld [vmem:[#allocation23 + $0x1b0] sm:$0xff]
    %v2208 = vld [vmem:[#allocation23 + $0x1b8] sm:$0xff]
    %v2209 = vld [vmem:[#allocation23 + $0x1c0] sm:$0xff]
    %v2210 = vld [vmem:[#allocation23 + $0x1c8] sm:$0xff]
    %v2211 = vld [vmem:[#allocation23 + $0x1d0] sm:$0xff]
    %v2212 = vld [vmem:[#allocation23 + $0x1d8] sm:$0xff]
    %v2213 = vld [vmem:[#allocation23 + $0x1e0] sm:$0xff]
    %v2214 = vld [vmem:[#allocation23 + $0x1e8] sm:$0xff]
    %v2215 = vld [vmem:[#allocation23 + $0x1f0] sm:$0xff]
    %v2216 = vld [vmem:[#allocation23 + $0x1f8] sm:$0xff]
    %v2217 = vld [vmem:[#allocation23 + $0x200] sm:$0xff]
    %v2218 = vld [vmem:[#allocation23 + $0x208] sm:$0xff]
    %v2219 = vld [vmem:[#allocation23 + $0x210] sm:$0xff]
    %v2220 = vld [vmem:[#allocation23 + $0x218] sm:$0xff]
    %v2221 = vld [vmem:[#allocation23 + $0x220] sm:$0xff]
    %v2222 = vld [vmem:[#allocation23 + $0x228] sm:$0xff]
    %v2223 = vld [vmem:[#allocation23 + $0x230] sm:$0xff]
    %v2224 = vld [vmem:[#allocation23 + $0x238] sm:$0xff]
    %v2225 = vld [vmem:[#allocation23 + $0x240] sm:$0xff]
    %v2226 = vld [vmem:[#allocation23 + $0x248] sm:$0xff]
    %v2227 = vld [vmem:[#allocation23 + $0x250] sm:$0xff]
    %v2228 = vld [vmem:[#allocation23 + $0x258] sm:$0xff]
    %v2229 = vld [vmem:[#allocation23 + $0x260] sm:$0xff]
    %v2230 = vld [vmem:[#allocation23 + $0x268] sm:$0xff]
    %v2231 = vld [vmem:[#allocation23 + $0x270] sm:$0xff]
    %v2232 = vld [vmem:[#allocation23 + $0x278] sm:$0xff]
    %v2233 = vld [vmem:[#allocation23 + $0x280] sm:$0xff]
    %v2234 = vld [vmem:[#allocation23 + $0x288] sm:$0xff]
    %v2235 = vld [vmem:[#allocation23 + $0x290] sm:$0xff]
    %v2236 = vld [vmem:[#allocation23 + $0x298] sm:$0xff]
    %v2237 = vld [vmem:[#allocation23 + $0x2a0] sm:$0xff]
    %v2238 = vld [vmem:[#allocation23 + $0x2a8] sm:$0xff]
    %v2239 = vld [vmem:[#allocation23 + $0x2b0] sm:$0xff]
    %v2240 = vld [vmem:[#allocation23 + $0x2b8] sm:$0xff]
    %v2241 = vld [vmem:[#allocation23 + $0x2c0] sm:$0xff]
    %v2242 = vld [vmem:[#allocation23 + $0x2c8] sm:$0xff]
    %v2243 = vld [vmem:[#allocation23 + $0x2d0] sm:$0xff]
    %v2244 = vld [vmem:[#allocation23 + $0x2d8] sm:$0xff]
    %v2245 = vld [vmem:[#allocation23 + $0x2e0] sm:$0xff]
    %v2246 = vld [vmem:[#allocation23 + $0x2e8] sm:$0xff]
    %v2247 = vld [vmem:[#allocation23 + $0x2f0] sm:$0xff]
    %v2248 = vld [vmem:[#allocation23 + $0x2f8] sm:$0xff]
    %v2249 = vld [vmem:[#allocation23 + $0x300] sm:$0xff]
    %v2250 = vld [vmem:[#allocation23 + $0x308] sm:$0xff]
    %v2251 = vld [vmem:[#allocation23 + $0x310] sm:$0xff]
    %v2252 = vld [vmem:[#allocation23 + $0x318] sm:$0xff]
    %v2253 = vld [vmem:[#allocation23 + $0x320] sm:$0xff]
    %v2254 = vld [vmem:[#allocation23 + $0x328] sm:$0xff]
    %v2255 = vld [vmem:[#allocation23 + $0x330] sm:$0xff]
    %v2256 = vld [vmem:[#allocation23 + $0x338] sm:$0xff]
    %v2257 = vld [vmem:[#allocation23 + $0x340] sm:$0xff]
    %v2258 = vld [vmem:[#allocation23 + $0x348] sm:$0xff]
    %v2259 = vld [vmem:[#allocation23 + $0x350] sm:$0xff]
    %v2260 = vld [vmem:[#allocation23 + $0x358] sm:$0xff]
    %v2261 = vld [vmem:[#allocation23 + $0x360] sm:$0xff]
    %v2262 = vld [vmem:[#allocation23 + $0x368] sm:$0xff]
    %v2263 = vld [vmem:[#allocation23 + $0x370] sm:$0xff]
    %v2264 = vld [vmem:[#allocation23 + $0x378] sm:$0xff]
    %v2265 = vld [vmem:[#allocation23 + $0x380] sm:$0xff]
    %v2266 = vld [vmem:[#allocation23 + $0x388] sm:$0xff]
    %v2267 = vld [vmem:[#allocation23 + $0x390] sm:$0xff]
    %v2268 = vld [vmem:[#allocation23 + $0x398] sm:$0xff]
    %v2269 = vld [vmem:[#allocation23 + $0x3a0] sm:$0xff]
    %v2270 = vld [vmem:[#allocation23 + $0x3a8] sm:$0xff]
    %v2271 = vld [vmem:[#allocation23 + $0x3b0] sm:$0xff]
    %v2272 = vld [vmem:[#allocation23 + $0x3b8] sm:$0xff]
    %v2273 = vld [vmem:[#allocation23 + $0x3c0] sm:$0xff]
    %v2274 = vld [vmem:[#allocation23 + $0x3c8] sm:$0xff]
    %v2275 = vld [vmem:[#allocation23 + $0x3d0] sm:$0xff]
    %v2276 = vld [vmem:[#allocation23 + $0x3d8] sm:$0xff]
    %v2277 = vld [vmem:[#allocation23 + $0x3e0] sm:$0xff]
    %v2278 = vld [vmem:[#allocation23 + $0x3e8] sm:$0xff]
    %v2279 = vld [vmem:[#allocation23 + $0x3f0] sm:$0xff]
    %v2280 = vld [vmem:[#allocation23 + $0x3f8] sm:$0xff]
    %v2281 = vld [vmem:[#allocation25] sm:$0xff]
    %v2282 = vld [vmem:[#allocation25 + $0x8] sm:$0xff]
    %v2283 = vld [vmem:[#allocation25 + $0x10] sm:$0xff]
    %v2284 = vld [vmem:[#allocation25 + $0x18] sm:$0xff]
    %v2285 = vld [vmem:[#allocation20] sm:$0x1]
    %v2286 = vld [vmem:[#allocation22] sm:$0x1]
    %v2287 = vsel %vm600, %v1723, 0.0
    %v2288 = vrot.slane %v2287, 4
    %v2289 = vadd.f32 %v2287, %v2288
    %v2290 = vrot.slane %v2289, 2
    %v2291 = vadd.f32 %v2289, %v2290
    %v2292 = vrot.slane %v2291, 1
    %v2293 = vadd.f32 %v2291, %v2292
    %v2294 = vsel %vm600, %v1725, 0.0
    %v2295 = vrot.slane %v2294, 4
    %v2296 = vadd.f32 %v2294, %v2295
    %v2297 = vrot.slane %v2296, 2
    %v2298 = vadd.f32 %v2296, %v2297
    %v2299 = vrot.slane %v2298, 1
    %v2300 = vadd.f32 %v2298, %v2299
    %v2301 = vsel %vm600, %v1865, 0.0
    %v2302 = vrot.slane %v2301, 4
    %v2303 = vadd.f32 %v2301, %v2302
    %v2304 = vrot.slane %v2303, 2
    %v2305 = vadd.f32 %v2303, %v2304
    %v2306 = vrot.slane %v2305, 1
    %v2307 = vadd.f32 %v2305, %v2306
    %v2308 = vsel %vm600, %v1867, 0.0
    %v2309 = vrot.slane %v2308, 4
    %v2310 = vadd.f32 %v2308, %v2309
    %v2311 = vrot.slane %v2310, 2
    %v2312 = vadd.f32 %v2310, %v2311
    %v2313 = vrot.slane %v2312, 1
    %v2314 = vadd.f32 %v2312, %v2313
    %v2315 = vsel %vm600, %v2007, 0.0
    %v2316 = vrot.slane %v2315, 4
    %v2317 = vadd.f32 %v2315, %v2316
    %v2318 = vrot.slane %v2317, 2
    %v2319 = vadd.f32 %v2317, %v2318
    %v2320 = vrot.slane %v2319, 1
    %v2321 = vadd.f32 %v2319, %v2320
    %v2322 = vsel %vm600, %v2009, 0.0
    %v2323 = vrot.slane %v2322, 4
    %v2324 = vadd.f32 %v2322, %v2323
    %v2325 = vrot.slane %v2324, 2
    %v2326 = vadd.f32 %v2324, %v2325
    %v2327 = vrot.slane %v2326, 1
    %v2328 = vadd.f32 %v2326, %v2327
    %v2329 = vsel %vm600, %v2149, 0.0
    %v2330 = vrot.slane %v2329, 4
    %v2331 = vadd.f32 %v2329, %v2330
    %v2332 = vrot.slane %v2331, 2
    %v2333 = vadd.f32 %v2331, %v2332
    %v2334 = vrot.slane %v2333, 1
    %v2335 = vadd.f32 %v2333, %v2334
    %v2336 = vsel %vm600, %v2151, 0.0
    %v2337 = vrot.slane %v2336, 4
    %v2338 = vadd.f32 %v2336, %v2337
    %v2339 = vrot.slane %v2338, 2
    %v2340 = vadd.f32 %v2338, %v2339
    %v2341 = vrot.slane %v2340, 1
    %v2342 = vadd.f32 %v2340, %v2341
    %v2343 = vmul.f32 %v1723, %v1723
    %v2344 = vmul.f32 %v1725, %v1725
    %v2345 = vmul.f32 %v1865, %v1865
    %v2346 = vmul.f32 %v1867, %v1867
    %v2347 = vmul.f32 %v2007, %v2007
    %v2348 = vmul.f32 %v2009, %v2009
    %v2349 = vmul.f32 %v2149, %v2149
    %v2350 = vmul.f32 %v2151, %v2151
    %v2351 = vsel %vm600, %v2343, 0.0
    %v2352 = vrot.slane %v2351, 4
    %v2353 = vadd.f32 %v2351, %v2352
    %v2354 = vrot.slane %v2353, 2
    %v2355 = vadd.f32 %v2353, %v2354
    %v2356 = vrot.slane %v2355, 1
    %v2357 = vadd.f32 %v2355, %v2356
    %v2358 = vsel %vm600, %v2344, 0.0
    %v2359 = vrot.slane %v2358, 4
    %v2360 = vadd.f32 %v2358, %v2359
    %v2361 = vrot.slane %v2360, 2
    %v2362 = vadd.f32 %v2360, %v2361
    %v2363 = vrot.slane %v2362, 1
    %v2364 = vadd.f32 %v2362, %v2363
    %v2365 = vsel %vm600, %v2345, 0.0
    %v2366 = vrot.slane %v2365, 4
    %v2367 = vadd.f32 %v2365, %v2366
    %v2368 = vrot.slane %v2367, 2
    %v2369 = vadd.f32 %v2367, %v2368
    %v2370 = vrot.slane %v2369, 1
    %v2371 = vadd.f32 %v2369, %v2370
    %v2372 = vsel %vm600, %v2346, 0.0
    %v2373 = vrot.slane %v2372, 4
    %v2374 = vadd.f32 %v2372, %v2373
    %v2375 = vrot.slane %v2374, 2
    %v2376 = vadd.f32 %v2374, %v2375
    %v2377 = vrot.slane %v2376, 1
    %v2378 = vadd.f32 %v2376, %v2377
    %v2379 = vsel %vm600, %v2347, 0.0
    %v2380 = vrot.slane %v2379, 4
    %v2381 = vadd.f32 %v2379, %v2380
    %v2382 = vrot.slane %v2381, 2
    %v2383 = vadd.f32 %v2381, %v2382
    %v2384 = vrot.slane %v2383, 1
    %v2385 = vadd.f32 %v2383, %v2384
    %v2386 = vsel %vm600, %v2348, 0.0
    %v2387 = vrot.slane %v2386, 4
    %v2388 = vadd.f32 %v2386, %v2387
    %v2389 = vrot.slane %v2388, 2
    %v2390 = vadd.f32 %v2388, %v2389
    %v2391 = vrot.slane %v2390, 1
    %v2392 = vadd.f32 %v2390, %v2391
    %v2393 = vsel %vm600, %v2349, 0.0
    %v2394 = vrot.slane %v2393, 4
    %v2395 = vadd.f32 %v2393, %v2394
    %v2396 = vrot.slane %v2395, 2
    %v2397 = vadd.f32 %v2395, %v2396
    %v2398 = vrot.slane %v2397, 1
    %v2399 = vadd.f32 %v2397, %v2398
    %v2400 = vsel %vm600, %v2350, 0.0
    %v2401 = vrot.slane %v2400, 4
    %v2402 = vadd.f32 %v2400, %v2401
    %v2403 = vrot.slane %v2402, 2
    %v2404 = vadd.f32 %v2402, %v2403
    %v2405 = vrot.slane %v2404, 1
    %v2406 = vadd.f32 %v2404, %v2405
    %v2407 = vsel %vm661, %v2293, %v2357
    %v2408 = vsel %vm661, %v2300, %v2364
    %v2409 = vsel %vm661, %v2307, %v2371
    %v2410 = vsel %vm661, %v2314, %v2378
    %v2411 = vsel %vm661, %v2321, %v2385
    %v2412 = vsel %vm661, %v2328, %v2392
    %v2413 = vsel %vm661, %v2335, %v2399
    %v2414 = vsel %vm661, %v2342, %v2406
    %2415 = vmatprep.subr.mxu0 0.0
    %2416 = vmatpush1.msra.mxu0 %v2153
    %2417 = vmatprep.subr.mxu0 0.0
    %2418 = vmatpush1.msra.mxu0 %v2154
    %2419 = vmatprep.subr.mxu0 0.0
    %2420 = vmatpush1.msra.mxu0 %v2155
    %2421 = vmatprep.subr.mxu0 0.0
    %2422 = vmatpush1.msra.mxu0 %v2156
    %2423 = vmatprep.subr.mxu0 0.0
    %2424 = vmatpush1.msra.mxu0 %v2157
    %2425 = vmatprep.subr.mxu0 0.0
    %2426 = vmatpush1.msra.mxu0 %v2158
    %2427 = vmatprep.subr.mxu0 0.0
    %2428 = vmatpush1.msra.mxu0 %v2159
    %2429 = vmatprep.subr.mxu0 0.0
    %2430 = vmatpush1.msra.mxu0 %v2160
    %2431 = vmatprep.subr.mxu0 0.0
    %2432 = vmatpush1.msra.mxu0 %v2161
    %2433 = vmatprep.subr.mxu0 0.0
    %2434 = vmatpush1.msra.mxu0 %v2162
    %2435 = vmatprep.subr.mxu0 0.0
    %2436 = vmatpush1.msra.mxu0 %v2163
    %2437 = vmatprep.subr.mxu0 0.0
    %2438 = vmatpush1.msra.mxu0 %v2164
    %2439 = vmatprep.subr.mxu0 0.0
    %2440 = vmatpush1.msra.mxu0 %v2165
    %2441 = vmatprep.subr.mxu0 0.0
    %2442 = vmatpush1.msra.mxu0 %v2166
    %2443 = vmatprep.subr.mxu0 0.0
    %2444 = vmatpush1.msra.mxu0 %v2167
    %2445 = vmatprep.subr.mxu0 0.0
    %2446 = vmatpush1.msra.mxu0 %v2168
    %2447 = vmatprep.subr.mxu0 0.0
    %2448 = vmatpush1.msra.mxu0 %v2169
    %2449 = vmatprep.subr.mxu0 0.0
    %2450 = vmatpush1.msra.mxu0 %v2170
    %2451 = vmatprep.subr.mxu0 0.0
    %2452 = vmatpush1.msra.mxu0 %v2171
    %2453 = vmatprep.subr.mxu0 0.0
    %2454 = vmatpush1.msra.mxu0 %v2172
    %2455 = vmatprep.subr.mxu0 0.0
    %2456 = vmatpush1.msra.mxu0 %v2173
    %2457 = vmatprep.subr.mxu0 0.0
    %2458 = vmatpush1.msra.mxu0 %v2174
    %2459 = vmatprep.subr.mxu0 0.0
    %2460 = vmatpush1.msra.mxu0 %v2175
    %2461 = vmatprep.subr.mxu0 0.0
    %2462 = vmatpush1.msra.mxu0 %v2176
    %2463 = vmatprep.subr.mxu0 0.0
    %2464 = vmatpush1.msra.mxu0 %v2177
    %2465 = vmatprep.subr.mxu0 0.0
    %2466 = vmatpush1.msra.mxu0 %v2178
    %2467 = vmatprep.subr.mxu0 0.0
    %2468 = vmatpush1.msra.mxu0 %v2179
    %2469 = vmatprep.subr.mxu0 0.0
    %2470 = vmatpush1.msra.mxu0 %v2180
    %2471 = vmatprep.subr.mxu0 0.0
    %2472 = vmatpush1.msra.mxu0 %v2181
    %2473 = vmatprep.subr.mxu0 0.0
    %2474 = vmatpush1.msra.mxu0 %v2182
    %2475 = vmatprep.subr.mxu0 0.0
    %2476 = vmatpush1.msra.mxu0 %v2183
    %2477 = vmatprep.subr.mxu0 0.0
    %2478 = vmatpush1.msra.mxu0 %v2184
    %2479 = vmatprep.mubr.f32.mxu0 %v2408
    %2480 = vmatmul.mubr.f32.gmra.mrb[0].mxu0 %v2407
    %v2481 = vpop.f32.mrb[0].mxu0
    %v2482 = vadd.f32 0.0, %v2481
    %v2483 = vpop.f32.mrb[0].mxu0
    %2484 = vdwg.mxu0
    %2485 = vmatprep.subr.mxu0 0.0
    %2486 = vmatpush1.msra.mxu0 %v2185
    %2487 = vmatprep.subr.mxu0 0.0
    %2488 = vmatpush1.msra.mxu0 %v2186
    %2489 = vmatprep.subr.mxu0 0.0
    %2490 = vmatpush1.msra.mxu0 %v2187
    %2491 = vmatprep.subr.mxu0 0.0
    %2492 = vmatpush1.msra.mxu0 %v2188
    %2493 = vmatprep.subr.mxu0 0.0
    %2494 = vmatpush1.msra.mxu0 %v2189
    %2495 = vmatprep.subr.mxu0 0.0
    %2496 = vmatpush1.msra.mxu0 %v2190
    %2497 = vmatprep.subr.mxu0 0.0
    %2498 = vmatpush1.msra.mxu0 %v2191
    %2499 = vmatprep.subr.mxu0 0.0
    %2500 = vmatpush1.msra.mxu0 %v2192
    %2501 = vmatprep.subr.mxu0 0.0
    %2502 = vmatpush1.msra.mxu0 %v2193
    %2503 = vmatprep.subr.mxu0 0.0
    %2504 = vmatpush1.msra.mxu0 %v2194
    %2505 = vmatprep.subr.mxu0 0.0
    %2506 = vmatpush1.msra.mxu0 %v2195
    %2507 = vmatprep.subr.mxu0 0.0
    %2508 = vmatpush1.msra.mxu0 %v2196
    %2509 = vmatprep.subr.mxu0 0.0
    %2510 = vmatpush1.msra.mxu0 %v2197
    %2511 = vmatprep.subr.mxu0 0.0
    %2512 = vmatpush1.msra.mxu0 %v2198
    %2513 = vmatprep.subr.mxu0 0.0
    %2514 = vmatpush1.msra.mxu0 %v2199
    %2515 = vmatprep.subr.mxu0 0.0
    %2516 = vmatpush1.msra.mxu0 %v2200
    %2517 = vmatprep.subr.mxu0 0.0
    %2518 = vmatpush1.msra.mxu0 %v2201
    %2519 = vmatprep.subr.mxu0 0.0
    %2520 = vmatpush1.msra.mxu0 %v2202
    %2521 = vmatprep.subr.mxu0 0.0
    %2522 = vmatpush1.msra.mxu0 %v2203
    %2523 = vmatprep.subr.mxu0 0.0
    %2524 = vmatpush1.msra.mxu0 %v2204
    %2525 = vmatprep.subr.mxu0 0.0
    %2526 = vmatpush1.msra.mxu0 %v2205
    %2527 = vmatprep.subr.mxu0 0.0
    %2528 = vmatpush1.msra.mxu0 %v2206
    %2529 = vmatprep.subr.mxu0 0.0
    %2530 = vmatpush1.msra.mxu0 %v2207
    %2531 = vmatprep.subr.mxu0 0.0
    %2532 = vmatpush1.msra.mxu0 %v2208
    %2533 = vmatprep.subr.mxu0 0.0
    %2534 = vmatpush1.msra.mxu0 %v2209
    %2535 = vmatprep.subr.mxu0 0.0
    %2536 = vmatpush1.msra.mxu0 %v2210
    %2537 = vmatprep.subr.mxu0 0.0
    %2538 = vmatpush1.msra.mxu0 %v2211
    %2539 = vmatprep.subr.mxu0 0.0
    %2540 = vmatpush1.msra.mxu0 %v2212
    %2541 = vmatprep.subr.mxu0 0.0
    %2542 = vmatpush1.msra.mxu0 %v2213
    %2543 = vmatprep.subr.mxu0 0.0
    %2544 = vmatpush1.msra.mxu0 %v2214
    %2545 = vmatprep.subr.mxu0 0.0
    %2546 = vmatpush1.msra.mxu0 %v2215
    %2547 = vmatprep.subr.mxu0 0.0
    %2548 = vmatpush1.msra.mxu0 %v2216
    %2549 = vmatprep.mubr.f32.mxu0 %v2410
    %2550 = vmatmul.mubr.f32.gmra.mrb[0].mxu0 %v2409
    %v2551 = vpop.f32.mrb[0].mxu0
    %v2552 = vadd.f32 %v2482, %v2551
    %v2553 = vpop.f32.mrb[0].mxu0
    %2554 = vdwg.mxu0
    %2555 = vmatprep.subr.mxu0 0.0
    %2556 = vmatpush1.msra.mxu0 %v2217
    %2557 = vmatprep.subr.mxu0 0.0
    %2558 = vmatpush1.msra.mxu0 %v2218
    %2559 = vmatprep.subr.mxu0 0.0
    %2560 = vmatpush1.msra.mxu0 %v2219
    %2561 = vmatprep.subr.mxu0 0.0
    %2562 = vmatpush1.msra.mxu0 %v2220
    %2563 = vmatprep.subr.mxu0 0.0
    %2564 = vmatpush1.msra.mxu0 %v2221
    %2565 = vmatprep.subr.mxu0 0.0
    %2566 = vmatpush1.msra.mxu0 %v2222
    %2567 = vmatprep.subr.mxu0 0.0
    %2568 = vmatpush1.msra.mxu0 %v2223
    %2569 = vmatprep.subr.mxu0 0.0
    %2570 = vmatpush1.msra.mxu0 %v2224
    %2571 = vmatprep.subr.mxu0 0.0
    %2572 = vmatpush1.msra.mxu0 %v2225
    %2573 = vmatprep.subr.mxu0 0.0
    %2574 = vmatpush1.msra.mxu0 %v2226
    %2575 = vmatprep.subr.mxu0 0.0
    %2576 = vmatpush1.msra.mxu0 %v2227
    %2577 = vmatprep.subr.mxu0 0.0
    %2578 = vmatpush1.msra.mxu0 %v2228
    %2579 = vmatprep.subr.mxu0 0.0
    %2580 = vmatpush1.msra.mxu0 %v2229
    %2581 = vmatprep.subr.mxu0 0.0
    %2582 = vmatpush1.msra.mxu0 %v2230
    %2583 = vmatprep.subr.mxu0 0.0
    %2584 = vmatpush1.msra.mxu0 %v2231
    %2585 = vmatprep.subr.mxu0 0.0
    %2586 = vmatpush1.msra.mxu0 %v2232
    %2587 = vmatprep.subr.mxu0 0.0
    %2588 = vmatpush1.msra.mxu0 %v2233
    %2589 = vmatprep.subr.mxu0 0.0
    %2590 = vmatpush1.msra.mxu0 %v2234
    %2591 = vmatprep.subr.mxu0 0.0
    %2592 = vmatpush1.msra.mxu0 %v2235
    %2593 = vmatprep.subr.mxu0 0.0
    %2594 = vmatpush1.msra.mxu0 %v2236
    %2595 = vmatprep.subr.mxu0 0.0
    %2596 = vmatpush1.msra.mxu0 %v2237
    %2597 = vmatprep.subr.mxu0 0.0
    %2598 = vmatpush1.msra.mxu0 %v2238
    %2599 = vmatprep.subr.mxu0 0.0
    %2600 = vmatpush1.msra.mxu0 %v2239
    %2601 = vmatprep.subr.mxu0 0.0
    %2602 = vmatpush1.msra.mxu0 %v2240
    %2603 = vmatprep.subr.mxu0 0.0
    %2604 = vmatpush1.msra.mxu0 %v2241
    %2605 = vmatprep.subr.mxu0 0.0
    %2606 = vmatpush1.msra.mxu0 %v2242
    %2607 = vmatprep.subr.mxu0 0.0
    %2608 = vmatpush1.msra.mxu0 %v2243
    %2609 = vmatprep.subr.mxu0 0.0
    %2610 = vmatpush1.msra.mxu0 %v2244
    %2611 = vmatprep.subr.mxu0 0.0
    %2612 = vmatpush1.msra.mxu0 %v2245
    %2613 = vmatprep.subr.mxu0 0.0
    %2614 = vmatpush1.msra.mxu0 %v2246
    %2615 = vmatprep.subr.mxu0 0.0
    %2616 = vmatpush1.msra.mxu0 %v2247
    %2617 = vmatprep.subr.mxu0 0.0
    %2618 = vmatpush1.msra.mxu0 %v2248
    %2619 = vmatprep.mubr.f32.mxu0 %v2412
    %2620 = vmatmul.mubr.f32.gmra.mrb[0].mxu0 %v2411
    %v2621 = vpop.f32.mrb[0].mxu0
    %v2622 = vadd.f32 %v2552, %v2621
    %v2623 = vpop.f32.mrb[0].mxu0
    %2624 = vdwg.mxu0
    %2625 = vmatprep.subr.mxu0 0.0
    %2626 = vmatpush1.msra.mxu0 %v2249
    %2627 = vmatprep.subr.mxu0 0.0
    %2628 = vmatpush1.msra.mxu0 %v2250
    %2629 = vmatprep.subr.mxu0 0.0
    %2630 = vmatpush1.msra.mxu0 %v2251
    %2631 = vmatprep.subr.mxu0 0.0
    %2632 = vmatpush1.msra.mxu0 %v2252
    %2633 = vmatprep.subr.mxu0 0.0
    %2634 = vmatpush1.msra.mxu0 %v2253
    %2635 = vmatprep.subr.mxu0 0.0
    %2636 = vmatpush1.msra.mxu0 %v2254
    %2637 = vmatprep.subr.mxu0 0.0
    %2638 = vmatpush1.msra.mxu0 %v2255
    %2639 = vmatprep.subr.mxu0 0.0
    %2640 = vmatpush1.msra.mxu0 %v2256
    %2641 = vmatprep.subr.mxu0 0.0
    %2642 = vmatpush1.msra.mxu0 %v2257
    %2643 = vmatprep.subr.mxu0 0.0
    %2644 = vmatpush1.msra.mxu0 %v2258
    %2645 = vmatprep.subr.mxu0 0.0
    %2646 = vmatpush1.msra.mxu0 %v2259
    %2647 = vmatprep.subr.mxu0 0.0
    %2648 = vmatpush1.msra.mxu0 %v2260
    %2649 = vmatprep.subr.mxu0 0.0
    %2650 = vmatpush1.msra.mxu0 %v2261
    %2651 = vmatprep.subr.mxu0 0.0
    %2652 = vmatpush1.msra.mxu0 %v2262
    %2653 = vmatprep.subr.mxu0 0.0
    %2654 = vmatpush1.msra.mxu0 %v2263
    %2655 = vmatprep.subr.mxu0 0.0
    %2656 = vmatpush1.msra.mxu0 %v2264
    %2657 = vmatprep.subr.mxu0 0.0
    %2658 = vmatpush1.msra.mxu0 %v2265
    %2659 = vmatprep.subr.mxu0 0.0
    %2660 = vmatpush1.msra.mxu0 %v2266
    %2661 = vmatprep.subr.mxu0 0.0
    %2662 = vmatpush1.msra.mxu0 %v2267
    %2663 = vmatprep.subr.mxu0 0.0
    %2664 = vmatpush1.msra.mxu0 %v2268
    %2665 = vmatprep.subr.mxu0 0.0
    %2666 = vmatpush1.msra.mxu0 %v2269
    %2667 = vmatprep.subr.mxu0 0.0
    %2668 = vmatpush1.msra.mxu0 %v2270
    %2669 = vmatprep.subr.mxu0 0.0
    %2670 = vmatpush1.msra.mxu0 %v2271
    %2671 = vmatprep.subr.mxu0 0.0
    %2672 = vmatpush1.msra.mxu0 %v2272
    %2673 = vmatprep.subr.mxu0 0.0
    %2674 = vmatpush1.msra.mxu0 %v2273
    %2675 = vmatprep.subr.mxu0 0.0
    %2676 = vmatpush1.msra.mxu0 %v2274
    %2677 = vmatprep.subr.mxu0 0.0
    %2678 = vmatpush1.msra.mxu0 %v2275
    %2679 = vmatprep.subr.mxu0 0.0
    %2680 = vmatpush1.msra.mxu0 %v2276
    %2681 = vmatprep.subr.mxu0 0.0
    %2682 = vmatpush1.msra.mxu0 %v2277
    %2683 = vmatprep.subr.mxu0 0.0
    %2684 = vmatpush1.msra.mxu0 %v2278
    %2685 = vmatprep.subr.mxu0 0.0
    %2686 = vmatpush1.msra.mxu0 %v2279
    %2687 = vmatprep.subr.mxu0 0.0
    %2688 = vmatpush1.msra.mxu0 %v2280
    %2689 = vmatprep.mubr.f32.mxu0 %v2414
    %2690 = vmatmul.mubr.f32.gmra.mrb[0].mxu0 %v2413
    %v2691 = vpop.f32.mrb[0].mxu0
    %v2692 = vadd.f32 %v2622, %v2691
    %v2693 = vpop.f32.mrb[0].mxu0
    %2694 = vdwg.mxu0
    %v2695 = vmul.f32 %v2692, 0.001953125
    %v2696 = vmul.f32 %v2695, %v2695
    %v2698 = vrot.slane %v2696, 7
    %v2700 = vsub.f32 %v2695, %v2698
    %v2701 = vadd.f32 %v2700, 1e-05
    %v2702 = vrsqrt.pop %v2701
    %v2705 = vunpack.c.l.s4 1966171168
    %v2706 = vunpack.c.0.s8 %v2705
    %v2707 = vlaneseq
    %v2708 = vshrl.u32 %v2707, 7
    %v2709 = vsub.s32 %v2706, %v2708
    %v2710 = vrot.slane %v2702, %v2709
    %v2711 = vcombine.high %v2710, %v2710
    %v2713 = vunpack.c.l.s4 1966171168
    %v2714 = vunpack.c.0.s8 %v2713
    %v2715 = vlaneseq
    %v2716 = vshrl.u32 %v2715, 7
    %v2717 = vsub.s32 %v2714, %v2716
    %v2718 = vrot.slane %v2711, %v2717
    %v2720 = vmul.f32 %v2285, %v2718
    %v2721 = vmul.f32 %v2695, %v2720
    %v2722 = vsub.f32 %v2286, %v2721
    %v2724 = vlaneseq
    %v2725 = vshrl.u32 %v2724, 7
    %v2726 = vsub.s32 0, %v2725
    %v2727 = vrot.slane %v2722, %v2726
    %v2729 = vsel %vm661, %v2720, %v2727
    %v2734 = vcombine.high %v2281, %v2281
    %v2735 = vcombine.high %v2282, %v2282
    %v2736 = vcombine.high %v2283, %v2283
    %v2737 = vcombine.high %v2284, %v2284
    %vm2738 = vcmask 31744
    %v2740 = vsel %vm2738, %v2729, 0
    %vm2742 = vcmask 1043456
    %v2743 = vsel %vm2742, %v2281, 0
    %v2745 = vsel %vm2742, %v2734, 0
    %v2747 = vsel %vm2742, %v2282, 0
    %v2749 = vsel %vm2742, %v2735, 0
    %v2751 = vsel %vm2742, %v2283, 0
    %v2753 = vsel %vm2742, %v2736, 0
    %v2755 = vsel %vm2742, %v2284, 0
    %v2757 = vsel %vm2742, %v2737, 0
    %2759 = vmatprep.subr.mxu0 %v2745
    %2760 = vmatpush1.msra.mxu0 %v2743
    %2761 = vmatprep.subr.mxu0 0.0
    %2762 = vmatpush1.msra.mxu0 0.0
    %2763 = vmatprep.subr.mxu0 0.0
    %2764 = vmatpush1.msra.mxu0 0.0
    %2765 = vmatprep.subr.mxu0 0.0
    %2766 = vmatpush1.msra.mxu0 0.0
    %2767 = vmatprep.subr.mxu0 0.0
    %2768 = vmatpush1.msra.mxu0 0.0
    %2769 = vmatprep.subr.mxu0 0.0
    %2770 = vmatpush1.msra.mxu0 0.0
    %2771 = vmatprep.subr.mxu0 0.0
    %2772 = vmatpush1.msra.mxu0 0.0
    %2773 = vmatprep.subr.mxu0 0.0
    %2774 = vmatpush1.msra.mxu0 0.0
    %2775 = vmatprep.subr.mxu0 0.0
    %2776 = vmatpush1.msra.mxu0 0.0
    %2777 = vmatprep.subr.mxu0 0.0
    %2778 = vmatpush1.msra.mxu0 0.0
    %2779 = vmatprep.subr.mxu0 0.0
    %2780 = vmatpush1.msra.mxu0 0.0
    %2781 = vmatprep.subr.mxu0 0.0
    %2782 = vmatpush1.msra.mxu0 0.0
    %2783 = vmatprep.subr.mxu0 0.0
    %2784 = vmatpush1.msra.mxu0 0.0
    %2785 = vmatprep.subr.mxu0 0.0
    %2786 = vmatpush1.msra.mxu0 0.0
    %2787 = vmatprep.subr.mxu0 0.0
    %2788 = vmatpush1.msra.mxu0 0.0
    %2789 = vmatprep.subr.mxu0 0.0
    %2790 = vmatpush1.msra.mxu0 0.0
    %2791 = vmatprep.subr.mxu0 0.0
    %2792 = vmatpush1.msra.mxu0 0.0
    %2793 = vmatprep.subr.mxu0 0.0
    %2794 = vmatpush1.msra.mxu0 0.0
    %2795 = vmatprep.subr.mxu0 0.0
    %2796 = vmatpush1.msra.mxu0 0.0
    %2797 = vmatprep.subr.mxu0 0.0
    %2798 = vmatpush1.msra.mxu0 0.0
    %2799 = vmatprep.subr.mxu0 0.0
    %2800 = vmatpush1.msra.mxu0 0.0
    %2801 = vmatprep.subr.mxu0 0.0
    %2802 = vmatpush1.msra.mxu0 0.0
    %2803 = vmatprep.subr.mxu0 0.0
    %2804 = vmatpush1.msra.mxu0 0.0
    %2805 = vmatprep.subr.mxu0 0.0
    %2806 = vmatpush1.msra.mxu0 0.0
    %2807 = vmatprep.subr.mxu0 0.0
    %2808 = vmatpush1.msra.mxu0 0.0
    %2809 = vmatprep.subr.mxu0 0.0
    %2810 = vmatpush1.msra.mxu0 0.0
    %2811 = vmatprep.subr.mxu0 0.0
    %2812 = vmatpush1.msra.mxu0 0.0
    %2813 = vmatprep.subr.mxu0 0.0
    %2814 = vmatpush1.msra.mxu0 0.0
    %2815 = vmatprep.subr.mxu0 0.0
    %2816 = vmatpush1.msra.mxu0 0.0
    %2817 = vmatprep.subr.mxu0 0.0
    %2818 = vmatpush1.msra.mxu0 0.0
    %2819 = vmatprep.subr.mxu0 0.0
    %2820 = vmatpush1.msra.mxu0 0.0
    %2821 = vmatprep.subr.mxu0 0.0
    %2822 = vmatpush1.msra.mxu0 0.0
    %2823 = vmatprep.mubr.f32.mxu0 0.0
    %2824 = vmatmul.mubr.f32.gmra.mrb[0].mxu0 %v2740
    %v2825 = vpop.f32.mrb[0].mxu0
    %v2826 = vadd.f32 0.0, %v2825
    %v2827 = vpop.f32.mrb[0].mxu0
    %v2828 = vadd.f32 0.0, %v2827
    %2829 = vdwg.mxu0
    %2830 = vmatprep.subr.mxu0 %v2749
    %2831 = vmatpush1.msra.mxu0 %v2747
    %2832 = vmatprep.subr.mxu0 0.0
    %2833 = vmatpush1.msra.mxu0 0.0
    %2834 = vmatprep.subr.mxu0 0.0
    %2835 = vmatpush1.msra.mxu0 0.0
    %2836 = vmatprep.subr.mxu0 0.0
    %2837 = vmatpush1.msra.mxu0 0.0
    %2838 = vmatprep.subr.mxu0 0.0
    %2839 = vmatpush1.msra.mxu0 0.0
    %2840 = vmatprep.subr.mxu0 0.0
    %2841 = vmatpush1.msra.mxu0 0.0
    %2842 = vmatprep.subr.mxu0 0.0
    %2843 = vmatpush1.msra.mxu0 0.0
    %2844 = vmatprep.subr.mxu0 0.0
    %2845 = vmatpush1.msra.mxu0 0.0
    %2846 = vmatprep.subr.mxu0 0.0
    %2847 = vmatpush1.msra.mxu0 0.0
    %2848 = vmatprep.subr.mxu0 0.0
    %2849 = vmatpush1.msra.mxu0 0.0
    %2850 = vmatprep.subr.mxu0 0.0
    %2851 = vmatpush1.msra.mxu0 0.0
    %2852 = vmatprep.subr.mxu0 0.0
    %2853 = vmatpush1.msra.mxu0 0.0
    %2854 = vmatprep.subr.mxu0 0.0
    %2855 = vmatpush1.msra.mxu0 0.0
    %2856 = vmatprep.subr.mxu0 0.0
    %2857 = vmatpush1.msra.mxu0 0.0
    %2858 = vmatprep.subr.mxu0 0.0
    %2859 = vmatpush1.msra.mxu0 0.0
    %2860 = vmatprep.subr.mxu0 0.0
    %2861 = vmatpush1.msra.mxu0 0.0
    %2862 = vmatprep.subr.mxu0 0.0
    %2863 = vmatpush1.msra.mxu0 0.0
    %2864 = vmatprep.subr.mxu0 0.0
    %2865 = vmatpush1.msra.mxu0 0.0
    %2866 = vmatprep.subr.mxu0 0.0
    %2867 = vmatpush1.msra.mxu0 0.0
    %2868 = vmatprep.subr.mxu0 0.0
    %2869 = vmatpush1.msra.mxu0 0.0
    %2870 = vmatprep.subr.mxu0 0.0
    %2871 = vmatpush1.msra.mxu0 0.0
    %2872 = vmatprep.subr.mxu0 0.0
    %2873 = vmatpush1.msra.mxu0 0.0
    %2874 = vmatprep.subr.mxu0 0.0
    %2875 = vmatpush1.msra.mxu0 0.0
    %2876 = vmatprep.subr.mxu0 0.0
    %2877 = vmatpush1.msra.mxu0 0.0
    %2878 = vmatprep.subr.mxu0 0.0
    %2879 = vmatpush1.msra.mxu0 0.0
    %2880 = vmatprep.subr.mxu0 0.0
    %2881 = vmatpush1.msra.mxu0 0.0
    %2882 = vmatprep.subr.mxu0 0.0
    %2883 = vmatpush1.msra.mxu0 0.0
    %2884 = vmatprep.subr.mxu0 0.0
    %2885 = vmatpush1.msra.mxu0 0.0
    %2886 = vmatprep.subr.mxu0 0.0
    %2887 = vmatpush1.msra.mxu0 0.0
    %2888 = vmatprep.subr.mxu0 0.0
    %2889 = vmatpush1.msra.mxu0 0.0
    %2890 = vmatprep.subr.mxu0 0.0
    %2891 = vmatpush1.msra.mxu0 0.0
    %2892 = vmatprep.subr.mxu0 0.0
    %2893 = vmatpush1.msra.mxu0 0.0
    %2894 = vmatprep.mubr.f32.mxu0 0.0
    %2895 = vmatmul.mubr.f32.gmra.mrb[0].mxu0 %v2740
    %v2896 = vpop.f32.mrb[0].mxu0
    %v2897 = vadd.f32 0.0, %v2896
    %v2898 = vpop.f32.mrb[0].mxu0
    %v2899 = vadd.f32 0.0, %v2898
    %2900 = vdwg.mxu0
    %2901 = vmatprep.subr.mxu0 %v2753
    %2902 = vmatpush1.msra.mxu0 %v2751
    %2903 = vmatprep.subr.mxu0 0.0
    %2904 = vmatpush1.msra.mxu0 0.0
    %2905 = vmatprep.subr.mxu0 0.0
    %2906 = vmatpush1.msra.mxu0 0.0
    %2907 = vmatprep.subr.mxu0 0.0
    %2908 = vmatpush1.msra.mxu0 0.0
    %2909 = vmatprep.subr.mxu0 0.0
    %2910 = vmatpush1.msra.mxu0 0.0
    %2911 = vmatprep.subr.mxu0 0.0
    %2912 = vmatpush1.msra.mxu0 0.0
    %2913 = vmatprep.subr.mxu0 0.0
    %2914 = vmatpush1.msra.mxu0 0.0
    %2915 = vmatprep.subr.mxu0 0.0
    %2916 = vmatpush1.msra.mxu0 0.0
    %2917 = vmatprep.subr.mxu0 0.0
    %2918 = vmatpush1.msra.mxu0 0.0
    %2919 = vmatprep.subr.mxu0 0.0
    %2920 = vmatpush1.msra.mxu0 0.0
    %2921 = vmatprep.subr.mxu0 0.0
    %2922 = vmatpush1.msra.mxu0 0.0
    %2923 = vmatprep.subr.mxu0 0.0
    %2924 = vmatpush1.msra.mxu0 0.0
    %2925 = vmatprep.subr.mxu0 0.0
    %2926 = vmatpush1.msra.mxu0 0.0
    %2927 = vmatprep.subr.mxu0 0.0
    %2928 = vmatpush1.msra.mxu0 0.0
    %2929 = vmatprep.subr.mxu0 0.0
    %2930 = vmatpush1.msra.mxu0 0.0
    %2931 = vmatprep.subr.mxu0 0.0
    %2932 = vmatpush1.msra.mxu0 0.0
    %2933 = vmatprep.subr.mxu0 0.0
    %2934 = vmatpush1.msra.mxu0 0.0
    %2935 = vmatprep.subr.mxu0 0.0
    %2936 = vmatpush1.msra.mxu0 0.0
    %2937 = vmatprep.subr.mxu0 0.0
    %2938 = vmatpush1.msra.mxu0 0.0
    %2939 = vmatprep.subr.mxu0 0.0
    %2940 = vmatpush1.msra.mxu0 0.0
    %2941 = vmatprep.subr.mxu0 0.0
    %2942 = vmatpush1.msra.mxu0 0.0
    %2943 = vmatprep.subr.mxu0 0.0
    %2944 = vmatpush1.msra.mxu0 0.0
    %2945 = vmatprep.subr.mxu0 0.0
    %2946 = vmatpush1.msra.mxu0 0.0
    %2947 = vmatprep.subr.mxu0 0.0
    %2948 = vmatpush1.msra.mxu0 0.0
    %2949 = vmatprep.subr.mxu0 0.0
    %2950 = vmatpush1.msra.mxu0 0.0
    %2951 = vmatprep.subr.mxu0 0.0
    %2952 = vmatpush1.msra.mxu0 0.0
    %2953 = vmatprep.subr.mxu0 0.0
    %2954 = vmatpush1.msra.mxu0 0.0
    %2955 = vmatprep.subr.mxu0 0.0
    %2956 = vmatpush1.msra.mxu0 0.0
    %2957 = vmatprep.subr.mxu0 0.0
    %2958 = vmatpush1.msra.mxu0 0.0
    %2959 = vmatprep.subr.mxu0 0.0
    %2960 = vmatpush1.msra.mxu0 0.0
    %2961 = vmatprep.subr.mxu0 0.0
    %2962 = vmatpush1.msra.mxu0 0.0
    %2963 = vmatprep.subr.mxu0 0.0
    %2964 = vmatpush1.msra.mxu0 0.0
    %2965 = vmatprep.mubr.f32.mxu0 0.0
    %2966 = vmatmul.mubr.f32.gmra.mrb[0].mxu0 %v2740
    %v2967 = vpop.f32.mrb[0].mxu0
    %v2968 = vadd.f32 0.0, %v2967
    %v2969 = vpop.f32.mrb[0].mxu0
    %v2970 = vadd.f32 0.0, %v2969
    %2971 = vdwg.mxu0
    %2972 = vmatprep.subr.mxu0 %v2757
    %2973 = vmatpush1.msra.mxu0 %v2755
    %2974 = vmatprep.subr.mxu0 0.0
    %2975 = vmatpush1.msra.mxu0 0.0
    %2976 = vmatprep.subr.mxu0 0.0
    %2977 = vmatpush1.msra.mxu0 0.0
    %2978 = vmatprep.subr.mxu0 0.0
    %2979 = vmatpush1.msra.mxu0 0.0
    %2980 = vmatprep.subr.mxu0 0.0
    %2981 = vmatpush1.msra.mxu0 0.0
    %2982 = vmatprep.subr.mxu0 0.0
    %2983 = vmatpush1.msra.mxu0 0.0
    %2984 = vmatprep.subr.mxu0 0.0
    %2985 = vmatpush1.msra.mxu0 0.0
    %2986 = vmatprep.subr.mxu0 0.0
    %2987 = vmatpush1.msra.mxu0 0.0
    %2988 = vmatprep.subr.mxu0 0.0
    %2989 = vmatpush1.msra.mxu0 0.0
    %2990 = vmatprep.subr.mxu0 0.0
    %2991 = vmatpush1.msra.mxu0 0.0
    %2992 = vmatprep.subr.mxu0 0.0
    %2993 = vmatpush1.msra.mxu0 0.0
    %2994 = vmatprep.subr.mxu0 0.0
    %2995 = vmatpush1.msra.mxu0 0.0
    %2996 = vmatprep.subr.mxu0 0.0
    %2997 = vmatpush1.msra.mxu0 0.0
    %2998 = vmatprep.subr.mxu0 0.0
    %2999 = vmatpush1.msra.mxu0 0.0
    %3000 = vmatprep.subr.mxu0 0.0
    %3001 = vmatpush1.msra.mxu0 0.0
    %3002 = vmatprep.subr.mxu0 0.0
    %3003 = vmatpush1.msra.mxu0 0.0
    %3004 = vmatprep.subr.mxu0 0.0
    %3005 = vmatpush1.msra.mxu0 0.0
    %3006 = vmatprep.subr.mxu0 0.0
    %3007 = vmatpush1.msra.mxu0 0.0
    %3008 = vmatprep.subr.mxu0 0.0
    %3009 = vmatpush1.msra.mxu0 0.0
    %3010 = vmatprep.subr.mxu0 0.0
    %3011 = vmatpush1.msra.mxu0 0.0
    %3012 = vmatprep.subr.mxu0 0.0
    %3013 = vmatpush1.msra.mxu0 0.0
    %3014 = vmatprep.subr.mxu0 0.0
    %3015 = vmatpush1.msra.mxu0 0.0
    %3016 = vmatprep.subr.mxu0 0.0
    %3017 = vmatpush1.msra.mxu0 0.0
    %3018 = vmatprep.subr.mxu0 0.0
    %3019 = vmatpush1.msra.mxu0 0.0
    %3020 = vmatprep.subr.mxu0 0.0
    %3021 = vmatpush1.msra.mxu0 0.0
    %3022 = vmatprep.subr.mxu0 0.0
    %3023 = vmatpush1.msra.mxu0 0.0
    %3024 = vmatprep.subr.mxu0 0.0
    %3025 = vmatpush1.msra.mxu0 0.0
    %3026 = vmatprep.subr.mxu0 0.0
    %3027 = vmatpush1.msra.mxu0 0.0
    %3028 = vmatprep.subr.mxu0 0.0
    %3029 = vmatpush1.msra.mxu0 0.0
    %3030 = vmatprep.subr.mxu0 0.0
    %3031 = vmatpush1.msra.mxu0 0.0
    %3032 = vmatprep.subr.mxu0 0.0
    %3033 = vmatpush1.msra.mxu0 0.0
    %3034 = vmatprep.subr.mxu0 0.0
    %3035 = vmatpush1.msra.mxu0 0.0
    %3036 = vmatprep.mubr.f32.mxu0 0.0
    %3037 = vmatmul.mubr.f32.gmra.mrb[0].mxu0 %v2740
    %v3038 = vpop.f32.mrb[0].mxu0
    %v3039 = vadd.f32 0.0, %v3038
    %v3040 = vpop.f32.mrb[0].mxu0
    %v3041 = vadd.f32 0.0, %v3040
    %3042 = vdwg.mxu0
    %v3043 = vlaneseq
    %v3044 = vshrl.u32 %v3043, 7
    %v3045 = vsub.s32 0, %v3044
    %v3046 = vrot.slane %v2826, %v3045
    %v3047 = vlaneseq
    %v3048 = vshrl.u32 %v3047, 7
    %v3049 = vsub.s32 0, %v3048
    %v3050 = vrot.slane %v2828, %v3049
    %v3051 = vlaneseq
    %v3052 = vshrl.u32 %v3051, 7
    %v3053 = vsub.s32 0, %v3052
    %v3054 = vrot.slane %v2897, %v3053
    %v3055 = vlaneseq
    %v3056 = vshrl.u32 %v3055, 7
    %v3057 = vsub.s32 0, %v3056
    %v3058 = vrot.slane %v2899, %v3057
    %v3059 = vlaneseq
    %v3060 = vshrl.u32 %v3059, 7
    %v3061 = vsub.s32 0, %v3060
    %v3062 = vrot.slane %v2968, %v3061
    %v3063 = vlaneseq
    %v3064 = vshrl.u32 %v3063, 7
    %v3065 = vsub.s32 0, %v3064
    %v3066 = vrot.slane %v2970, %v3065
    %v3067 = vlaneseq
    %v3068 = vshrl.u32 %v3067, 7
    %v3069 = vsub.s32 0, %v3068
    %v3070 = vrot.slane %v3039, %v3069
    %v3071 = vlaneseq
    %v3072 = vshrl.u32 %v3071, 7
    %v3073 = vsub.s32 0, %v3072
    %v3074 = vrot.slane %v3041, %v3073
    %v3075 = vmul.f32 %v1723, %v3046
    %v3076 = vmul.f32 %v1725, %v3050
    %v3077 = vmul.f32 %v1865, %v3054
    %v3078 = vmul.f32 %v1867, %v3058
    %v3079 = vmul.f32 %v2007, %v3062
    %v3080 = vmul.f32 %v2009, %v3066
    %v3081 = vmul.f32 %v2149, %v3070
    %v3082 = vmul.f32 %v2151, %v3074
    %v3083 = vlaneseq
    %v3084 = vshrl.u32 %v3083, 7
    %v3085 = vsub.s32 1, %v3084
    %v3086 = vrot.slane %v2826, %v3085
    %v3087 = vlaneseq
    %v3088 = vshrl.u32 %v3087, 7
    %v3089 = vsub.s32 1, %v3088
    %v3090 = vrot.slane %v2828, %v3089
    %v3091 = vlaneseq
    %v3092 = vshrl.u32 %v3091, 7
    %v3093 = vsub.s32 1, %v3092
    %v3094 = vrot.slane %v2897, %v3093
    %v3095 = vlaneseq
    %v3096 = vshrl.u32 %v3095, 7
    %v3097 = vsub.s32 1, %v3096
    %v3098 = vrot.slane %v2899, %v3097
    %v3099 = vlaneseq
    %v3100 = vshrl.u32 %v3099, 7
    %v3101 = vsub.s32 1, %v3100
    %v3102 = vrot.slane %v2968, %v3101
    %v3103 = vlaneseq
    %v3104 = vshrl.u32 %v3103, 7
    %v3105 = vsub.s32 1, %v3104
    %v3106 = vrot.slane %v2970, %v3105
    %v3107 = vlaneseq
    %v3108 = vshrl.u32 %v3107, 7
    %v3109 = vsub.s32 1, %v3108
    %v3110 = vrot.slane %v3039, %v3109
    %v3111 = vlaneseq
    %v3112 = vshrl.u32 %v3111, 7
    %v3113 = vsub.s32 1, %v3112
    %v3114 = vrot.slane %v3041, %v3113
    %v3115 = vadd.f32 %v3075, %v3086
    %v3116 = vadd.f32 %v3076, %v3090
    %v3117 = vadd.f32 %v3077, %v3094
    %v3118 = vadd.f32 %v3078, %v3098
    %v3119 = vadd.f32 %v3079, %v3102
    %v3120 = vadd.f32 %v3080, %v3106
    %v3121 = vadd.f32 %v3081, %v3110
    %v3122 = vadd.f32 %v3082, %v3114
    %v3123 = vmax.f32 %v3115, 0.0
    %v3124 = vmax.f32 %v3116, 0.0
    %v3125 = vmax.f32 %v3117, 0.0
    %v3126 = vmax.f32 %v3118, 0.0
    %v3127 = vmax.f32 %v3119, 0.0
    %v3128 = vmax.f32 %v3120, 0.0
    %v3129 = vmax.f32 %v3121, 0.0
    %v3130 = vmax.f32 %v3122, 0.0
    %s3131 = sld [smem:[#allocation26]]
    %v3132 = vstv %s3131
    %v3133 = vmul.f32 %v3132, %v3123
    %v3134 = vmul.f32 %v3132, %v3124
    %s3135 = sld [smem:[#allocation26 + $0x1]]
    %v3136 = vstv %s3135
    %v3137 = vmul.f32 %v3136, %v3125
    %v3138 = vmul.f32 %v3136, %v3126
    %v3139 = vadd.f32 %v3133, %v3137
    %v3140 = vadd.f32 %v3134, %v3138
    %s3141 = sld [smem:[#allocation26 + $0x2]]
    %v3142 = vstv %s3141
    %v3143 = vmul.f32 %v3142, %v3127
    %v3144 = vmul.f32 %v3142, %v3128
    %v3145 = vadd.f32 %v3139, %v3143
    %v3146 = vadd.f32 %v3140, %v3144
    %s3147 = sld [smem:[#allocation26 + $0x3]]
    %v3148 = vstv %s3147
    %v3149 = vmul.f32 %v3148, %v3129
    %v3150 = vmul.f32 %v3148, %v3130
    %v3151 = vadd.f32 %v3145, %v3149
    %v3152 = vadd.f32 %v3146, %v3150
    %s3153 = sld [smem:[#allocation27]]
    %v3154 = vstv %s3153
    %v3155 = vadd.f32 %v3151, %v3154
    %v3156 = vadd.f32 %v3152, %v3154
    %v3157 = vtanh.pop %v3155
    %v3158 = vtanh.pop %v3156
    %v3161 = vcombine.low %v3157, %v3158
    %v3163 = vunpack.c.l.s4 1983009808
    %v3164 = vunpack.c.0.s8 %v3163
    %v3165 = vlaneseq
    %v3166 = vshrl.u32 %v3165, 7
    %v3167 = vsub.s32 %v3164, %v3166
    %v3168 = vrot.slane %v3161, %v3167
    %3170 = vst [vmem:[%s17] sm:$0xf] %v3168
    %s3171 = sld [smem:[#allocation26 + $0x80]]
    %v3172 = vstv %s3171
    %v3173 = vmul.f32 %v3172, %v3123
    %v3174 = vmul.f32 %v3172, %v3124
    %s3175 = sld [smem:[#allocation26 + $0x81]]
    %v3176 = vstv %s3175
    %v3177 = vmul.f32 %v3176, %v3125
    %v3178 = vmul.f32 %v3176, %v3126
    %v3179 = vadd.f32 %v3173, %v3177
    %v3180 = vadd.f32 %v3174, %v3178
    %s3181 = sld [smem:[#allocation26 + $0x82]]
    %v3182 = vstv %s3181
    %v3183 = vmul.f32 %v3182, %v3127
    %v3184 = vmul.f32 %v3182, %v3128
    %v3185 = vadd.f32 %v3179, %v3183
    %v3186 = vadd.f32 %v3180, %v3184
    %s3187 = sld [smem:[#allocation26 + $0x83]]
    %v3188 = vstv %s3187
    %v3189 = vmul.f32 %v3188, %v3129
    %v3190 = vmul.f32 %v3188, %v3130
    %v3191 = vadd.f32 %v3185, %v3189
    %v3192 = vadd.f32 %v3186, %v3190
    %s3193 = sld [smem:[#allocation27 + $0x1]]
    %v3194 = vstv %s3193
    %v3195 = vadd.f32 %v3191, %v3194
    %v3196 = vadd.f32 %v3192, %v3194
    %v3197 = vtanh.pop %v3195
    %v3198 = vtanh.pop %v3196
    %v3201 = vcombine.low %v3197, %v3198
    %v3203 = vunpack.c.l.s4 1983009808
    %v3204 = vunpack.c.0.s8 %v3203
    %v3205 = vlaneseq
    %v3206 = vshrl.u32 %v3205, 7
    %v3207 = vsub.s32 %v3204, %v3206
    %v3208 = vrot.slane %v3201, %v3207
    %3210 = vst [vmem:[%s17 + $0x4] sm:$0xf] %v3208
    %s3211 = sld [smem:[#allocation26 + $0x100]]
    %v3212 = vstv %s3211
    %v3213 = vmul.f32 %v3212, %v3123
    %v3214 = vmul.f32 %v3212, %v3124
    %s3215 = sld [smem:[#allocation26 + $0x101]]
    %v3216 = vstv %s3215
    %v3217 = vmul.f32 %v3216, %v3125
    %v3218 = vmul.f32 %v3216, %v3126
    %v3219 = vadd.f32 %v3213, %v3217
    %v3220 = vadd.f32 %v3214, %v3218
    %s3221 = sld [smem:[#allocation26 + $0x102]]
    %v3222 = vstv %s3221
    %v3223 = vmul.f32 %v3222, %v3127
    %v3224 = vmul.f32 %v3222, %v3128
    %v3225 = vadd.f32 %v3219, %v3223
    %v3226 = vadd.f32 %v3220, %v3224
    %s3227 = sld [smem:[#allocation26 + $0x103]]
    %v3228 = vstv %s3227
    %v3229 = vmul.f32 %v3228, %v3129
    %v3230 = vmul.f32 %v3228, %v3130
    %v3231 = vadd.f32 %v3225, %v3229
    %v3232 = vadd.f32 %v3226, %v3230
    %s3233 = sld [smem:[#allocation27 + $0x2]]
    %v3234 = vstv %s3233
    %v3235 = vadd.f32 %v3231, %v3234
    %v3236 = vadd.f32 %v3232, %v3234
    %v3237 = vtanh.pop %v3235
    %v3238 = vtanh.pop %v3236
    %v3241 = vcombine.low %v3237, %v3238
    %v3243 = vunpack.c.l.s4 1983009808
    %v3244 = vunpack.c.0.s8 %v3243
    %v3245 = vlaneseq
    %v3246 = vshrl.u32 %v3245, 7
    %v3247 = vsub.s32 %v3244, %v3246
    %v3248 = vrot.slane %v3241, %v3247
    %3250 = vst [vmem:[%s17 + $0x8] sm:$0xf] %v3248
    // Predicated region
    $region138: #{forward.1} parent=1 // pred_check
      _
    $region139: #{forward.1} parent=1 // pred_check_branch
      %3252 = sbr.rel (0) target = $region141
    $region140: #{forward.1} parent=1 // pred_region
      _
    $region141: #{forward.1} parent=1 // pred_fallthru
      _
    // Predicated region
    $region142: #{forward.1} parent=1 // pred_check
      _
    $region143: #{forward.1} parent=1 // pred_check_branch
      %3254 = sbr.rel (0) target = $region145
    $region144: #{forward.1} parent=1 // pred_region
      _
    $region145: #{forward.1} parent=1 // pred_fallthru
      _
    %3255 = vsyncpa [#allocation3], 1
    %3256 = vsyncpa [#allocation6], 1
    %3257 = vsyncpa [#allocation9], 1
    %3258 = vsyncpa [#allocation12], 1
    %3259 = vsyncpa [#allocation15], 1
    %3260 = vsyncpa [#allocation18], 1
    %3261 = vsyncpa [#allocation21], 1
    %3262 = vsyncpa [#allocation24], 1
    %3263 = vsyncpa [#allocation4], 1
    %3264 = vsyncpa [#allocation28], 1

</llo_original>
